<compile_context>
chip_gen: v6e
topology: v6e:2x2x1
jax: 0.10.0
libtpu: 0.0.40
codegen_flags: <defaults>
</compile_context>

<pallas_src>
import jax
import jax.numpy as jnp
import numpy as np
from jax.experimental import pallas as pl
from jax.experimental.pallas import tpu as pltpu


def _round_up(x, m):
    return ((x + m - 1) // m) * m


def _vmem_capacity_bytes():
    # Capability probe only (never masks kernel errors).
    try:
        info = pltpu.get_tpu_info()
        cap = getattr(info, "vmem_capacity_bytes", None)
        if cap:
            return int(cap)
    except Exception:
        pass
    return 128 * 1024 * 1024


# ----------------------------------------------------------------------------
# Kernel factory: LSTM recurrence only (embedding + fc stay in XLA)
# ----------------------------------------------------------------------------
def _make_lstm_kernel(num_layers, T, BB, E_pad, H_pad, seq_len, mask_tail, unroll):
    """grid = (batch_blocks, time_blocks); layer-major over a block of T steps."""

    def kernel(*refs):
        emb_ref = refs[0]                           # (T, BB, E_pad) bf16
        w_ih, w_hh, bias = [], [], []
        idx = 1
        for _ in range(num_layers):
            w_ih.append(refs[idx]); w_hh.append(refs[idx + 1]); bias.append(refs[idx + 2])
            idx += 3                                # (W_ih^T bf16, W_hh^T bf16, bias f32)
        hid_ref = refs[idx]                         # (T, BB, H_pad) bf16 (top-layer h)
        hn_ref = refs[idx + 1]                      # (L, BB, H_pad) f32 — resident state carry
        cn_ref = refs[idx + 2]                      # (L, BB, H_pad) f32
        pre_sc = refs[idx + 3]                      # VMEM (T, BB, 4*H_pad) f32
        hbuf_sc = refs[idx + 4] if num_layers > 1 else None   # VMEM (T, BB, H_pad) bf16

        t_blk = pl.program_id(1)

        # hidden=None in the PyTorch module -> zero initial state per batch block
        @pl.when(t_blk == 0)
        def _():
            hn_ref[...] = jnp.zeros_like(hn_ref)
            cn_ref[...] = jnp.zeros_like(cn_ref)

        t_base = t_blk * T

        for l in range(num_layers):
            # ---- batched input-to-hidden projection (+bias) for all T steps ----
            if l == 0:
                x_blk = emb_ref[...]                # (T, BB, E_pad) bf16
                in_pad = E_pad
            else:
                x_blk = hbuf_sc[...]                # previous layer's h, (T, BB, H_pad) bf16
                in_pad = H_pad
            pre_sc[...] = (
                jnp.dot(x_blk.reshape(T * BB, in_pad), w_ih[l][...],
                        preferred_element_type=jnp.float32)
                + bias[l][...]
            ).reshape(T, BB, 4 * H_pad)

            whh = w_hh[l][...]                      # (H_pad, 4*H_pad) bf16
            out_ref = hid_ref if l == num_layers - 1 else hbuf_sc

            def step(t, carry, _whh=whh, _out=out_ref):
                h_prev, c_prev = carry              # (BB, H_pad) f32
                pre = pre_sc[t] + jnp.dot(h_prev.astype(jnp.bfloat16), _whh,
                                          preferred_element_type=jnp.float32)
                # lane-aligned gate slices, torch.nn.LSTM order [i, f, g, o]
                i_g = jax.nn.sigmoid(pre[:, 0 * H_pad:1 * H_pad])
                f_g = jax.nn.sigmoid(pre[:, 1 * H_pad:2 * H_pad])
                g_g = jnp.tanh(pre[:, 2 * H_pad:3 * H_pad])
                o_g = jax.nn.sigmoid(pre[:, 3 * H_pad:4 * H_pad])
                c_new = f_g * c_prev + i_g * g_g
                h_new = o_g * jnp.tanh(c_new)
                if mask_tail:
                    # freeze state on padded time steps (keeps h_n/c_n exact)
                    keep = ((t_base + t) < seq_len).astype(jnp.float32)
                    c_new = keep * c_new + (1.0 - keep) * c_prev
                    h_new = keep * h_new + (1.0 - keep) * h_prev
                _out[t] = h_new.astype(jnp.bfloat16)
                return h_new, c_new

            h_fin, c_fin = jax.lax.fori_loop(
                0, T, step, (hn_ref[l], cn_ref[l]), unroll=unroll)
            # Running state lives in the resident output block.
            hn_ref[l] = h_fin
            cn_ref[l] = c_fin

    return kernel


# ----------------------------------------------------------------------------
# Padding helpers (gate-blocked so [i|f|g|o] each gets H_pad lanes)
# ----------------------------------------------------------------------------
def _pad_gate_weight(w, in_dim, in_pad, H, H_pad):
    w4 = w.reshape(in_dim, 4, H)
    w4 = jnp.pad(w4, ((0, in_pad - in_dim), (0, 0), (0, H_pad - H)))
    return w4.reshape(in_pad, 4 * H_pad).astype(jnp.bfloat16)


def _pad_gate_bias(b, H, H_pad):
    b4 = b.reshape(1, 4, H)
    b4 = jnp.pad(b4, ((0, 0), (0, 0), (0, H_pad - H)))
    return b4.reshape(1, 4 * H_pad)                 # stays f32


# ----------------------------------------------------------------------------
# Wrapper: parameter plumbing + pallas_call + out-of-kernel fc
# ----------------------------------------------------------------------------
def language_model_forward(params, input_ids, *, time_block=32, batch_block=None,
                           single_buffer_weights=True):
    """params: dict from init_params; input_ids: int32 (B, S)."""
    num_layers = params["num_layers"]
    H = params["hidden_dim"]
    emb_table = params["embedding"]                 # (V, E) f32
    V, E = emb_table.shape
    B, S = input_ids.shape

    # ---- padded / aligned shapes --------------------------------------------
    E_pad = _round_up(E, 128)
    H_pad = _round_up(H, 128)
    B_pad = _round_up(B, 8)

    if batch_block is None:
        BB = B_pad
        # v7x: two TensorCores per chip — give the "parallel" batch axis >=2 blocks
        if getattr(jax.devices()[0], "num_cores", 1) >= 2 and B_pad >= 16:
            BB = _round_up(B_pad // 2, 8)
    else:
        BB = _round_up(min(int(batch_block), B_pad), 8)
    B_pad = _round_up(B_pad, BB)

    # ---- padded bf16 LSTM weights --------------------------------------------
    w_ih_list, w_hh_list, b_list = [], [], []
    for l in range(num_layers):
        in_dim = E if l == 0 else H
        in_pad = E_pad if l == 0 else H_pad
        w_ih_list.append(_pad_gate_weight(params[f"w_ih_{l}"], in_dim, in_pad, H, H_pad))
        w_hh_list.append(_pad_gate_weight(params[f"w_hh_{l}"], H, H_pad, H, H_pad))
        b_list.append(_pad_gate_bias(params[f"b_{l}"], H, H_pad))
    weight_bytes = sum(int(w.size) * w.dtype.itemsize
                       for w in (w_ih_list + w_hh_list + b_list))

    # ---- time block: prefer a divisor of S (no tail masking), bound by VMEM ---
    T = max(1, min(int(time_block), S))
    if S % T != 0:
        best = max(d for d in range(1, T + 1) if S % d == 0)
        if best >= max(8, T // 2):
            T = best

    cap = _vmem_capacity_bytes()

    def _vmem_needed(T_):
        w = weight_bytes * (1 if single_buffer_weights else 2)
        io = 2 * (T_ * BB * E_pad * 2) + 2 * (T_ * BB * H_pad * 2)      # dbl-buf bf16 blocks
        st = 2 * 2 * (num_layers * BB * H_pad * 4)                      # hn/cn blocks
        sc = T_ * BB * 4 * H_pad * 4 + (T_ * BB * H_pad * 2 if num_layers > 1 else 0)
        return w + io + st + sc

    while _vmem_needed(T) > int(0.80 * cap) and T > 8:
        T = max(8, T // 2)

    S_pad = _round_up(S, T)
    mask_tail = (S_pad != S)
    vmem_limit = int(min(int(0.90 * cap),
                         max(32 * 1024 * 1024,
                             int(1.25 * _vmem_needed(T)) + (2 << 20))))

    # ---- embedding gather (XLA glue), bf16, time-major, padded ----------------
    emb = jnp.take(emb_table, input_ids, axis=0).astype(jnp.bfloat16)   # (B, S, E)
    emb_tm = jnp.transpose(emb, (1, 0, 2))                              # (S, B, E)
    emb_tm = jnp.pad(emb_tm, ((0, S_pad - S), (0, B_pad - B), (0, E_pad - E)))

    operands = [emb_tm]
    for l in range(num_layers):
        operands += [w_ih_list[l], w_hh_list[l], b_list[l]]

    # Bound live ranges for large H (vreg pressure): partial unroll.
    unroll = True if H_pad <= 256 else 4
    kernel = _make_lstm_kernel(num_layers, T, BB, E_pad, H_pad, S, mask_tail, unroll)

    def _weight_spec(shape):
        if single_buffer_weights:
            # constant index_map -> never changes across the grid;
            # single-buffering halves resident weight VMEM.
            return pl.BlockSpec(shape, lambda b, t: (0, 0),
                                pipeline_mode=pl.Buffered(1))
        return pl.BlockSpec(shape, lambda b, t: (0, 0))

    in_specs = [pl.BlockSpec((T, BB, E_pad), lambda b, t: (t, b, 0))]
    for l in range(num_layers):
        for w in (w_ih_list[l], w_hh_list[l], b_list[l]):
            in_specs.append(_weight_spec(w.shape))

    out_shape = (
        jax.ShapeDtypeStruct((S_pad, B_pad, H_pad), jnp.bfloat16),       # top-layer h
        jax.ShapeDtypeStruct((num_layers, B_pad, H_pad), jnp.float32),   # h_n
        jax.ShapeDtypeStruct((num_layers, B_pad, H_pad), jnp.float32),   # c_n
    )
    out_specs = (
        pl.BlockSpec((T, BB, H_pad), lambda b, t: (t, b, 0)),
        pl.BlockSpec((num_layers, BB, H_pad), lambda b, t: (0, b, 0)),   # resident over t
        pl.BlockSpec((num_layers, BB, H_pad), lambda b, t: (0, b, 0)),   # resident over t
    )
    scratch_shapes = [pltpu.VMEM((T, BB, 4 * H_pad), jnp.float32)]       # batched pre-acts
    if num_layers > 1:
        scratch_shapes.append(pltpu.VMEM((T, BB, H_pad), jnp.bfloat16))  # inter-layer h

    grid_spec = pltpu.PrefetchScalarGridSpec(
        num_scalar_prefetch=0,
        grid=(B_pad // BB, S_pad // T),
        in_specs=in_specs,
        out_specs=out_specs,
        scratch_shapes=scratch_shapes,
    )
    hid_tm, h_n, c_n = pl.pallas_call(
        kernel,
        out_shape=out_shape,
        grid_spec=grid_spec,
        compiler_params=pltpu.CompilerParams(
            # batch blocks independent (megacore); time is sequential
            dimension_semantics=("parallel", "arbitrary"),
            vmem_limit_bytes=vmem_limit,
        ),
    )(*operands)

    # ---- fc as one big MXU-shaped matmul outside the recurrence (no host sync)
    hid = jnp.transpose(hid_tm[:S, :B, :H], (1, 0, 2))          # (B, S, H) bf16
    w_fc = params["w_fc"].astype(jnp.bfloat16)                  # (H, V)
    logits = (jnp.dot(hid.reshape(B * S, H), w_fc,
                      preferred_element_type=jnp.float32)
              + params["b_fc"]).reshape(B, S, V)

    return {"logits": logits, "hidden": (h_n[:, :B, :H], c_n[:, :B, :H])}


# ----------------------------------------------------------------------------
# Deterministic parameter init (shapes follow torch.nn.Embedding/LSTM/Linear)
# ----------------------------------------------------------------------------
def init_params(key, vocab_size, embedding_dim, hidden_dim, num_layers):
    params = {"num_layers": num_layers, "hidden_dim": hidden_dim}
    k = jax.random.split(key, 3 + 4 * num_layers)
    ki = iter(k)
    params["embedding"] = 0.1 * jax.random.normal(
        next(ki), (vocab_size, embedding_dim), jnp.float32)
    for l in range(num_layers):
        in_dim = embedding_dim if l == 0 else hidden_dim
        # stored pre-transposed as (in_dim, 4H) so the kernel does x @ W directly
        params[f"w_ih_{l}"] = 0.1 * jax.random.normal(
            next(ki), (in_dim, 4 * hidden_dim), jnp.float32)
        params[f"w_hh_{l}"] = 0.1 * jax.random.normal(
            next(ki), (hidden_dim, 4 * hidden_dim), jnp.float32)
        b_ih = 0.1 * jax.random.normal(next(ki), (4 * hidden_dim,), jnp.float32)
        b_hh = 0.1 * jax.random.normal(next(ki), (4 * hidden_dim,), jnp.float32)
        params[f"b_{l}"] = (b_ih + b_hh).reshape(1, 4 * hidden_dim)
    # fc: stored as (H, V) so the forward does h @ W_fc
    params["w_fc"] = 0.1 * jax.random.normal(
        next(ki), (hidden_dim, vocab_size), jnp.float32)
    params["b_fc"] = 0.1 * jax.random.normal(
        next(ki), (vocab_size,), jnp.float32).reshape(1, vocab_size)
    return params


# ----------------------------------------------------------------------------
# Pure-JAX reference (same math / same bf16 casts, no Pallas)
# ----------------------------------------------------------------------------
def reference_forward(params, input_ids):
    num_layers = params["num_layers"]
    H = params["hidden_dim"]
    emb = jnp.take(params["embedding"], input_ids, axis=0).astype(jnp.bfloat16)
    B, S, _ = emb.shape
    h = [jnp.zeros((B, H), jnp.float32) for _ in range(num_layers)]
    c = [jnp.zeros((B, H), jnp.float32) for _ in range(num_layers)]
    outs = []
    for t in range(S):
        x = emb[:, t, :]
        for l in range(num_layers):
            w_ih = params[f"w_ih_{l}"].astype(jnp.bfloat16)
            w_hh = params[f"w_hh_{l}"].astype(jnp.bfloat16)
            pre = (jnp.dot(x, w_ih, preferred_element_type=jnp.float32)
                   + jnp.dot(h[l].astype(jnp.bfloat16), w_hh,
                             preferred_element_type=jnp.float32)
                   + params[f"b_{l}"])
            i_g = jax.nn.sigmoid(pre[:, 0 * H:1 * H])
            f_g = jax.nn.sigmoid(pre[:, 1 * H:2 * H])
            g_g = jnp.tanh(pre[:, 2 * H:3 * H])
            o_g = jax.nn.sigmoid(pre[:, 3 * H:4 * H])
            c[l] = f_g * c[l] + i_g * g_g
            h[l] = o_g * jnp.tanh(c[l])
            x = h[l].astype(jnp.bfloat16)
        outs.append(x)
    hid = jnp.stack(outs, axis=1)                                  # (B, S, H) bf16
    w_fc = params["w_fc"].astype(jnp.bfloat16)
    logits = (jnp.dot(hid.reshape(B * S, H), w_fc,
                      preferred_element_type=jnp.float32)
              + params["b_fc"]).reshape(B, S, -1)
    return {"logits": logits, "hidden": (jnp.stack(h), jnp.stack(c))}


# ----------------------------------------------------------------------------
if __name__ == "__main__":
    vocab_size, embedding_dim, hidden_dim, num_layers = 32, 16, 32, 2
    batch, seq = 2, 8

    key = jax.random.PRNGKey(0)
    pkey, ikey = jax.random.split(key)
    params = init_params(pkey, vocab_size, embedding_dim, hidden_dim, num_layers)
    input_ids = jax.random.randint(ikey, (batch, seq), 0, vocab_size, jnp.int32)

    out = language_model_forward(params, input_ids, time_block=32)
    jax.block_until_ready(out)

    ref = reference_forward(params, input_ids)
    np.testing.assert_allclose(np.asarray(out["logits"]),
                               np.asarray(ref["logits"]), rtol=1e-3, atol=1e-3)
    np.testing.assert_allclose(np.asarray(out["hidden"][0]),
                               np.asarray(ref["hidden"][0]), rtol=1e-3, atol=1e-3)
    np.testing.assert_allclose(np.asarray(out["hidden"][1]),
                               np.asarray(ref["hidden"][1]), rtol=1e-3, atol=1e-3)

    print("KERNEL_OK")
</pallas_src>

<mosaic_0001>
module attributes {stable_mosaic.version = 11 : i64} {
  func.func @kernel(%arg0: i32, %arg1: i32, %arg2: memref<8x8x128xbf16, #tpu.memory_space<vmem>>, %arg3: memref<128x512xbf16, #tpu.memory_space<vmem>>, %arg4: memref<128x512xbf16, #tpu.memory_space<vmem>>, %arg5: memref<1x512xf32, #tpu.memory_space<vmem>>, %arg6: memref<128x512xbf16, #tpu.memory_space<vmem>>, %arg7: memref<128x512xbf16, #tpu.memory_space<vmem>>, %arg8: memref<1x512xf32, #tpu.memory_space<vmem>>, %arg9: memref<8x8x128xbf16, #tpu.memory_space<vmem>>, %arg10: memref<2x8x128xf32, #tpu.memory_space<vmem>>, %arg11: memref<2x8x128xf32, #tpu.memory_space<vmem>>, %arg12: memref<8x8x512xf32, #tpu.memory_space<vmem>>, %arg13: memref<8x8x128xbf16, #tpu.memory_space<vmem>>) attributes {dimension_semantics = [#tpu.dimension_semantics<parallel>, #tpu.dimension_semantics<arbitrary>], iteration_bounds = array<i64: 1, 1>, scalar_prefetch = 0 : i64, scratch_operands = 2 : i64, tpu.core_type = #tpu.core_type<tc>, window_params = [{transform_indices = @transform_0, window_bounds = array<i64: 8, 8, 128>}, {pipeline_mode = #tpu.pipeline_mode<synchronous>, transform_indices = @transform_1, window_bounds = array<i64: 128, 512>}, {pipeline_mode = #tpu.pipeline_mode<synchronous>, transform_indices = @transform_2, window_bounds = array<i64: 128, 512>}, {pipeline_mode = #tpu.pipeline_mode<synchronous>, transform_indices = @transform_3, window_bounds = array<i64: 1, 512>}, {pipeline_mode = #tpu.pipeline_mode<synchronous>, transform_indices = @transform_4, window_bounds = array<i64: 128, 512>}, {pipeline_mode = #tpu.pipeline_mode<synchronous>, transform_indices = @transform_5, window_bounds = array<i64: 128, 512>}, {pipeline_mode = #tpu.pipeline_mode<synchronous>, transform_indices = @transform_6, window_bounds = array<i64: 1, 512>}, {transform_indices = @transform_7, window_bounds = array<i64: 8, 8, 128>}, {transform_indices = @transform_8, window_bounds = array<i64: 2, 8, 128>}, {transform_indices = @transform_9, window_bounds = array<i64: 2, 8, 128>}]} {
    %c0_i32 = arith.constant 0 : i32
    %0 = arith.cmpi eq, %arg1, %c0_i32 : i32
    %1 = arith.extui %0 : i1 to i32
    %c0_i32_0 = arith.constant 0 : i32
    %2 = arith.cmpi ne, %1, %c0_i32_0 : i32
    scf.if %2 {
      %cst_186 = arith.constant 0.000000e+00 : f32
      %619 = vector.broadcast %cst_186 : f32 to vector<2x8x128xf32>
      %c0_187 = arith.constant 0 : index
      %c0_188 = arith.constant 0 : index
      %c0_189 = arith.constant 0 : index
      %620 = vector.load %arg10[%c0_187, %c0_188, %c0_189] : memref<2x8x128xf32, #tpu.memory_space<vmem>>, vector<2x8x128xf32>
      tpu.vector_store %arg10[%c0_187, %c0_188, %c0_189], %619 {strides = array<i32>} : memref<2x8x128xf32, #tpu.memory_space<vmem>>, vector<2x8x128xf32>,
      %cst_190 = arith.constant 0.000000e+00 : f32
      %621 = vector.broadcast %cst_190 : f32 to vector<2x8x128xf32>
      %c0_191 = arith.constant 0 : index
      %c0_192 = arith.constant 0 : index
      %c0_193 = arith.constant 0 : index
      %622 = vector.load %arg11[%c0_191, %c0_192, %c0_193] : memref<2x8x128xf32, #tpu.memory_space<vmem>>, vector<2x8x128xf32>
      tpu.vector_store %arg11[%c0_191, %c0_192, %c0_193], %621 {strides = array<i32>} : memref<2x8x128xf32, #tpu.memory_space<vmem>>, vector<2x8x128xf32>,
    } else {
    }
    %c0 = arith.constant 0 : index
    %c0_1 = arith.constant 0 : index
    %c0_2 = arith.constant 0 : index
    %3 = vector.load %arg2[%c0, %c0_1, %c0_2] : memref<8x8x128xbf16, #tpu.memory_space<vmem>>, vector<8x8x128xbf16>
    %4 = vector.shape_cast %3 : vector<8x8x128xbf16> to vector<64x128xbf16>
    %c0_3 = arith.constant 0 : index
    %c0_4 = arith.constant 0 : index
    %5 = vector.load %arg3[%c0_3, %c0_4] : memref<128x512xbf16, #tpu.memory_space<vmem>>, vector<128x512xbf16>
    %cst = arith.constant dense<0.000000e+00> : vector<64x512xf32>
    %6 = tpu.matmul %4, %5, %cst {dimension_numbers = #tpu.dot_dimension_numbers<[1], [0], [0], [1], [0, 0, 1, 1], [], []>} : vector<64x128xbf16>, vector<128x512xbf16>, vector<64x512xf32> -> vector<64x512xf32>
    %c0_5 = arith.constant 0 : index
    %c0_6 = arith.constant 0 : index
    %7 = vector.load %arg5[%c0_5, %c0_6] : memref<1x512xf32, #tpu.memory_space<vmem>>, vector<1x512xf32>
    %8 = vector.broadcast %7 : vector<1x512xf32> to vector<64x512xf32>
    %9 = arith.addf %6, %8 : vector<64x512xf32>
    %10 = vector.shape_cast %9 : vector<64x512xf32> to vector<8x8x512xf32>
    %c0_7 = arith.constant 0 : index
    %c0_8 = arith.constant 0 : index
    %c0_9 = arith.constant 0 : index
    %11 = vector.load %arg12[%c0_7, %c0_8, %c0_9] : memref<8x8x512xf32, #tpu.memory_space<vmem>>, vector<8x8x512xf32>
    tpu.vector_store %arg12[%c0_7, %c0_8, %c0_9], %10 {strides = array<i32>} : memref<8x8x512xf32, #tpu.memory_space<vmem>>, vector<8x8x512xf32>,
    %c0_10 = arith.constant 0 : index
    %c0_11 = arith.constant 0 : index
    %12 = vector.load %arg4[%c0_10, %c0_11] : memref<128x512xbf16, #tpu.memory_space<vmem>>, vector<128x512xbf16>
    %c0_12 = arith.constant 0 : index
    %c0_13 = arith.constant 0 : index
    %c0_14 = arith.constant 0 : index
    %13 = vector.load %arg10[%c0_12, %c0_13, %c0_14] : memref<2x8x128xf32, #tpu.memory_space<vmem>>, vector<1x8x128xf32>
    %14 = vector.shape_cast %13 : vector<1x8x128xf32> to vector<8x128xf32>
    %c0_15 = arith.constant 0 : index
    %c0_16 = arith.constant 0 : index
    %c0_17 = arith.constant 0 : index
    %15 = vector.load %arg11[%c0_15, %c0_16, %c0_17] : memref<2x8x128xf32, #tpu.memory_space<vmem>>, vector<1x8x128xf32>
    %16 = vector.shape_cast %15 : vector<1x8x128xf32> to vector<8x128xf32>
    %c0_i32_18 = arith.constant 0 : i32
    %17 = arith.index_cast %c0_i32_18 : i32 to index
    %c0_19 = arith.constant 0 : index
    %c0_20 = arith.constant 0 : index
    %18 = vector.load %arg12[%17, %c0_19, %c0_20] : memref<8x8x512xf32, #tpu.memory_space<vmem>>, vector<1x8x512xf32>
    %19 = vector.shape_cast %18 : vector<1x8x512xf32> to vector<8x512xf32>
    %20 = arith.truncf %14 : vector<8x128xf32> to vector<8x128xbf16>
    %cst_21 = arith.constant dense<0.000000e+00> : vector<8x512xf32>
    %21 = tpu.matmul %20, %12, %cst_21 {dimension_numbers = #tpu.dot_dimension_numbers<[1], [0], [0], [1], [0, 0, 1, 1], [], []>} : vector<8x128xbf16>, vector<128x512xbf16>, vector<8x512xf32> -> vector<8x512xf32>
    %22 = arith.addf %19, %21 : vector<8x512xf32>
    %23 = vector.extract_strided_slice %22 {offsets = [0, 0], sizes = [8, 128], strides = [1, 1]} : vector<8x512xf32> to vector<8x128xf32>
    %24 = arith.negf %23 : vector<8x128xf32>
    %25 = math.exp %24 : vector<8x128xf32>
    %cst_22 = arith.constant 1.000000e+00 : f32
    %26 = vector.broadcast %cst_22 : f32 to vector<8x128xf32>
    %27 = arith.addf %26, %25 : vector<8x128xf32>
    %28 = arith.divf %26, %27 : vector<8x128xf32>
    %29 = vector.extract_strided_slice %22 {offsets = [0, 128], sizes = [8, 128], strides = [1, 1]} : vector<8x512xf32> to vector<8x128xf32>
    %30 = arith.negf %29 : vector<8x128xf32>
    %31 = math.exp %30 : vector<8x128xf32>
    %cst_23 = arith.constant 1.000000e+00 : f32
    %32 = vector.broadcast %cst_23 : f32 to vector<8x128xf32>
    %33 = arith.addf %32, %31 : vector<8x128xf32>
    %34 = arith.divf %32, %33 : vector<8x128xf32>
    %35 = vector.extract_strided_slice %22 {offsets = [0, 256], sizes = [8, 128], strides = [1, 1]} : vector<8x512xf32> to vector<8x128xf32>
    %36 = math.tanh %35 : vector<8x128xf32>
    %37 = vector.extract_strided_slice %22 {offsets = [0, 384], sizes = [8, 128], strides = [1, 1]} : vector<8x512xf32> to vector<8x128xf32>
    %38 = arith.negf %37 : vector<8x128xf32>
    %39 = math.exp %38 : vector<8x128xf32>
    %cst_24 = arith.constant 1.000000e+00 : f32
    %40 = vector.broadcast %cst_24 : f32 to vector<8x128xf32>
    %41 = arith.addf %40, %39 : vector<8x128xf32>
    %42 = arith.divf %40, %41 : vector<8x128xf32>
    %43 = arith.mulf %34, %16 : vector<8x128xf32>
    %44 = arith.mulf %28, %36 : vector<8x128xf32>
    %45 = arith.addf %43, %44 : vector<8x128xf32>
    %46 = math.tanh %45 : vector<8x128xf32>
    %47 = arith.mulf %42, %46 : vector<8x128xf32>
    %48 = arith.truncf %47 : vector<8x128xf32> to vector<8x128xbf16>
    %49 = arith.index_cast %c0_i32_18 : i32 to index
    %c0_25 = arith.constant 0 : index
    %c0_26 = arith.constant 0 : index
    %50 = vector.load %arg13[%49, %c0_25, %c0_26] : memref<8x8x128xbf16, #tpu.memory_space<vmem>>, vector<1x8x128xbf16>
    %51 = vector.shape_cast %50 : vector<1x8x128xbf16> to vector<8x128xbf16>
    %52 = vector.shape_cast %48 : vector<8x128xbf16> to vector<1x8x128xbf16>
    tpu.vector_store %arg13[%49, %c0_25, %c0_26], %52 {strides = array<i32>} : memref<8x8x128xbf16, #tpu.memory_space<vmem>>, vector<1x8x128xbf16>,
    %c1_i32 = arith.constant 1 : i32
    %53 = arith.index_cast %c1_i32 : i32 to index
    %c0_27 = arith.constant 0 : index
    %c0_28 = arith.constant 0 : index
    %54 = vector.load %arg12[%53, %c0_27, %c0_28] : memref<8x8x512xf32, #tpu.memory_space<vmem>>, vector<1x8x512xf32>
    %55 = vector.shape_cast %54 : vector<1x8x512xf32> to vector<8x512xf32>
    %56 = arith.truncf %47 : vector<8x128xf32> to vector<8x128xbf16>
    %cst_29 = arith.constant dense<0.000000e+00> : vector<8x512xf32>
    %57 = tpu.matmul %56, %12, %cst_29 {dimension_numbers = #tpu.dot_dimension_numbers<[1], [0], [0], [1], [0, 0, 1, 1], [], []>} : vector<8x128xbf16>, vector<128x512xbf16>, vector<8x512xf32> -> vector<8x512xf32>
    %58 = arith.addf %55, %57 : vector<8x512xf32>
    %59 = vector.extract_strided_slice %58 {offsets = [0, 0], sizes = [8, 128], strides = [1, 1]} : vector<8x512xf32> to vector<8x128xf32>
    %60 = arith.negf %59 : vector<8x128xf32>
    %61 = math.exp %60 : vector<8x128xf32>
    %cst_30 = arith.constant 1.000000e+00 : f32
    %62 = vector.broadcast %cst_30 : f32 to vector<8x128xf32>
    %63 = arith.addf %62, %61 : vector<8x128xf32>
    %64 = arith.divf %62, %63 : vector<8x128xf32>
    %65 = vector.extract_strided_slice %58 {offsets = [0, 128], sizes = [8, 128], strides = [1, 1]} : vector<8x512xf32> to vector<8x128xf32>
    %66 = arith.negf %65 : vector<8x128xf32>
    %67 = math.exp %66 : vector<8x128xf32>
    %cst_31 = arith.constant 1.000000e+00 : f32
    %68 = vector.broadcast %cst_31 : f32 to vector<8x128xf32>
    %69 = arith.addf %68, %67 : vector<8x128xf32>
    %70 = arith.divf %68, %69 : vector<8x128xf32>
    %71 = vector.extract_strided_slice %58 {offsets = [0, 256], sizes = [8, 128], strides = [1, 1]} : vector<8x512xf32> to vector<8x128xf32>
    %72 = math.tanh %71 : vector<8x128xf32>
    %73 = vector.extract_strided_slice %58 {offsets = [0, 384], sizes = [8, 128], strides = [1, 1]} : vector<8x512xf32> to vector<8x128xf32>
    %74 = arith.negf %73 : vector<8x128xf32>
    %75 = math.exp %74 : vector<8x128xf32>
    %cst_32 = arith.constant 1.000000e+00 : f32
    %76 = vector.broadcast %cst_32 : f32 to vector<8x128xf32>
    %77 = arith.addf %76, %75 : vector<8x128xf32>
    %78 = arith.divf %76, %77 : vector<8x128xf32>
    %79 = arith.mulf %70, %45 : vector<8x128xf32>
    %80 = arith.mulf %64, %72 : vector<8x128xf32>
    %81 = arith.addf %79, %80 : vector<8x128xf32>
    %82 = math.tanh %81 : vector<8x128xf32>
    %83 = arith.mulf %78, %82 : vector<8x128xf32>
    %84 = arith.truncf %83 : vector<8x128xf32> to vector<8x128xbf16>
    %85 = arith.index_cast %c1_i32 : i32 to index
    %c0_33 = arith.constant 0 : index
    %c0_34 = arith.constant 0 : index
    %86 = vector.load %arg13[%85, %c0_33, %c0_34] : memref<8x8x128xbf16, #tpu.memory_space<vmem>>, vector<1x8x128xbf16>
    %87 = vector.shape_cast %86 : vector<1x8x128xbf16> to vector<8x128xbf16>
    %88 = vector.shape_cast %84 : vector<8x128xbf16> to vector<1x8x128xbf16>
    tpu.vector_store %arg13[%85, %c0_33, %c0_34], %88 {strides = array<i32>} : memref<8x8x128xbf16, #tpu.memory_space<vmem>>, vector<1x8x128xbf16>,
    %c2_i32 = arith.constant 2 : i32
    %89 = arith.index_cast %c2_i32 : i32 to index
    %c0_35 = arith.constant 0 : index
    %c0_36 = arith.constant 0 : index
    %90 = vector.load %arg12[%89, %c0_35, %c0_36] : memref<8x8x512xf32, #tpu.memory_space<vmem>>, vector<1x8x512xf32>
    %91 = vector.shape_cast %90 : vector<1x8x512xf32> to vector<8x512xf32>
    %92 = arith.truncf %83 : vector<8x128xf32> to vector<8x128xbf16>
    %cst_37 = arith.constant dense<0.000000e+00> : vector<8x512xf32>
    %93 = tpu.matmul %92, %12, %cst_37 {dimension_numbers = #tpu.dot_dimension_numbers<[1], [0], [0], [1], [0, 0, 1, 1], [], []>} : vector<8x128xbf16>, vector<128x512xbf16>, vector<8x512xf32> -> vector<8x512xf32>
    %94 = arith.addf %91, %93 : vector<8x512xf32>
    %95 = vector.extract_strided_slice %94 {offsets = [0, 0], sizes = [8, 128], strides = [1, 1]} : vector<8x512xf32> to vector<8x128xf32>
    %96 = arith.negf %95 : vector<8x128xf32>
    %97 = math.exp %96 : vector<8x128xf32>
    %cst_38 = arith.constant 1.000000e+00 : f32
    %98 = vector.broadcast %cst_38 : f32 to vector<8x128xf32>
    %99 = arith.addf %98, %97 : vector<8x128xf32>
    %100 = arith.divf %98, %99 : vector<8x128xf32>
    %101 = vector.extract_strided_slice %94 {offsets = [0, 128], sizes = [8, 128], strides = [1, 1]} : vector<8x512xf32> to vector<8x128xf32>
    %102 = arith.negf %101 : vector<8x128xf32>
    %103 = math.exp %102 : vector<8x128xf32>
    %cst_39 = arith.constant 1.000000e+00 : f32
    %104 = vector.broadcast %cst_39 : f32 to vector<8x128xf32>
    %105 = arith.addf %104, %103 : vector<8x128xf32>
    %106 = arith.divf %104, %105 : vector<8x128xf32>
    %107 = vector.extract_strided_slice %94 {offsets = [0, 256], sizes = [8, 128], strides = [1, 1]} : vector<8x512xf32> to vector<8x128xf32>
    %108 = math.tanh %107 : vector<8x128xf32>
    %109 = vector.extract_strided_slice %94 {offsets = [0, 384], sizes = [8, 128], strides = [1, 1]} : vector<8x512xf32> to vector<8x128xf32>
    %110 = arith.negf %109 : vector<8x128xf32>
    %111 = math.exp %110 : vector<8x128xf32>
    %cst_40 = arith.constant 1.000000e+00 : f32
    %112 = vector.broadcast %cst_40 : f32 to vector<8x128xf32>
    %113 = arith.addf %112, %111 : vector<8x128xf32>
    %114 = arith.divf %112, %113 : vector<8x128xf32>
    %115 = arith.mulf %106, %81 : vector<8x128xf32>
    %116 = arith.mulf %100, %108 : vector<8x128xf32>
    %117 = arith.addf %115, %116 : vector<8x128xf32>
    %118 = math.tanh %117 : vector<8x128xf32>
    %119 = arith.mulf %114, %118 : vector<8x128xf32>
    %120 = arith.truncf %119 : vector<8x128xf32> to vector<8x128xbf16>
    %121 = arith.index_cast %c2_i32 : i32 to index
    %c0_41 = arith.constant 0 : index
    %c0_42 = arith.constant 0 : index
    %122 = vector.load %arg13[%121, %c0_41, %c0_42] : memref<8x8x128xbf16, #tpu.memory_space<vmem>>, vector<1x8x128xbf16>
    %123 = vector.shape_cast %122 : vector<1x8x128xbf16> to vector<8x128xbf16>
    %124 = vector.shape_cast %120 : vector<8x128xbf16> to vector<1x8x128xbf16>
    tpu.vector_store %arg13[%121, %c0_41, %c0_42], %124 {strides = array<i32>} : memref<8x8x128xbf16, #tpu.memory_space<vmem>>, vector<1x8x128xbf16>,
    %c3_i32 = arith.constant 3 : i32
    %125 = arith.index_cast %c3_i32 : i32 to index
    %c0_43 = arith.constant 0 : index
    %c0_44 = arith.constant 0 : index
    %126 = vector.load %arg12[%125, %c0_43, %c0_44] : memref<8x8x512xf32, #tpu.memory_space<vmem>>, vector<1x8x512xf32>
    %127 = vector.shape_cast %126 : vector<1x8x512xf32> to vector<8x512xf32>
    %128 = arith.truncf %119 : vector<8x128xf32> to vector<8x128xbf16>
    %cst_45 = arith.constant dense<0.000000e+00> : vector<8x512xf32>
    %129 = tpu.matmul %128, %12, %cst_45 {dimension_numbers = #tpu.dot_dimension_numbers<[1], [0], [0], [1], [0, 0, 1, 1], [], []>} : vector<8x128xbf16>, vector<128x512xbf16>, vector<8x512xf32> -> vector<8x512xf32>
    %130 = arith.addf %127, %129 : vector<8x512xf32>
    %131 = vector.extract_strided_slice %130 {offsets = [0, 0], sizes = [8, 128], strides = [1, 1]} : vector<8x512xf32> to vector<8x128xf32>
    %132 = arith.negf %131 : vector<8x128xf32>
    %133 = math.exp %132 : vector<8x128xf32>
    %cst_46 = arith.constant 1.000000e+00 : f32
    %134 = vector.broadcast %cst_46 : f32 to vector<8x128xf32>
    %135 = arith.addf %134, %133 : vector<8x128xf32>
    %136 = arith.divf %134, %135 : vector<8x128xf32>
    %137 = vector.extract_strided_slice %130 {offsets = [0, 128], sizes = [8, 128], strides = [1, 1]} : vector<8x512xf32> to vector<8x128xf32>
    %138 = arith.negf %137 : vector<8x128xf32>
    %139 = math.exp %138 : vector<8x128xf32>
    %cst_47 = arith.constant 1.000000e+00 : f32
    %140 = vector.broadcast %cst_47 : f32 to vector<8x128xf32>
    %141 = arith.addf %140, %139 : vector<8x128xf32>
    %142 = arith.divf %140, %141 : vector<8x128xf32>
    %143 = vector.extract_strided_slice %130 {offsets = [0, 256], sizes = [8, 128], strides = [1, 1]} : vector<8x512xf32> to vector<8x128xf32>
    %144 = math.tanh %143 : vector<8x128xf32>
    %145 = vector.extract_strided_slice %130 {offsets = [0, 384], sizes = [8, 128], strides = [1, 1]} : vector<8x512xf32> to vector<8x128xf32>
    %146 = arith.negf %145 : vector<8x128xf32>
    %147 = math.exp %146 : vector<8x128xf32>
    %cst_48 = arith.constant 1.000000e+00 : f32
    %148 = vector.broadcast %cst_48 : f32 to vector<8x128xf32>
    %149 = arith.addf %148, %147 : vector<8x128xf32>
    %150 = arith.divf %148, %149 : vector<8x128xf32>
    %151 = arith.mulf %142, %117 : vector<8x128xf32>
    %152 = arith.mulf %136, %144 : vector<8x128xf32>
    %153 = arith.addf %151, %152 : vector<8x128xf32>
    %154 = math.tanh %153 : vector<8x128xf32>
    %155 = arith.mulf %150, %154 : vector<8x128xf32>
    %156 = arith.truncf %155 : vector<8x128xf32> to vector<8x128xbf16>
    %157 = arith.index_cast %c3_i32 : i32 to index
    %c0_49 = arith.constant 0 : index
    %c0_50 = arith.constant 0 : index
    %158 = vector.load %arg13[%157, %c0_49, %c0_50] : memref<8x8x128xbf16, #tpu.memory_space<vmem>>, vector<1x8x128xbf16>
    %159 = vector.shape_cast %158 : vector<1x8x128xbf16> to vector<8x128xbf16>
    %160 = vector.shape_cast %156 : vector<8x128xbf16> to vector<1x8x128xbf16>
    tpu.vector_store %arg13[%157, %c0_49, %c0_50], %160 {strides = array<i32>} : memref<8x8x128xbf16, #tpu.memory_space<vmem>>, vector<1x8x128xbf16>,
    %c4_i32 = arith.constant 4 : i32
    %161 = arith.index_cast %c4_i32 : i32 to index
    %c0_51 = arith.constant 0 : index
    %c0_52 = arith.constant 0 : index
    %162 = vector.load %arg12[%161, %c0_51, %c0_52] : memref<8x8x512xf32, #tpu.memory_space<vmem>>, vector<1x8x512xf32>
    %163 = vector.shape_cast %162 : vector<1x8x512xf32> to vector<8x512xf32>
    %164 = arith.truncf %155 : vector<8x128xf32> to vector<8x128xbf16>
    %cst_53 = arith.constant dense<0.000000e+00> : vector<8x512xf32>
    %165 = tpu.matmul %164, %12, %cst_53 {dimension_numbers = #tpu.dot_dimension_numbers<[1], [0], [0], [1], [0, 0, 1, 1], [], []>} : vector<8x128xbf16>, vector<128x512xbf16>, vector<8x512xf32> -> vector<8x512xf32>
    %166 = arith.addf %163, %165 : vector<8x512xf32>
    %167 = vector.extract_strided_slice %166 {offsets = [0, 0], sizes = [8, 128], strides = [1, 1]} : vector<8x512xf32> to vector<8x128xf32>
    %168 = arith.negf %167 : vector<8x128xf32>
    %169 = math.exp %168 : vector<8x128xf32>
    %cst_54 = arith.constant 1.000000e+00 : f32
    %170 = vector.broadcast %cst_54 : f32 to vector<8x128xf32>
    %171 = arith.addf %170, %169 : vector<8x128xf32>
    %172 = arith.divf %170, %171 : vector<8x128xf32>
    %173 = vector.extract_strided_slice %166 {offsets = [0, 128], sizes = [8, 128], strides = [1, 1]} : vector<8x512xf32> to vector<8x128xf32>
    %174 = arith.negf %173 : vector<8x128xf32>
    %175 = math.exp %174 : vector<8x128xf32>
    %cst_55 = arith.constant 1.000000e+00 : f32
    %176 = vector.broadcast %cst_55 : f32 to vector<8x128xf32>
    %177 = arith.addf %176, %175 : vector<8x128xf32>
    %178 = arith.divf %176, %177 : vector<8x128xf32>
    %179 = vector.extract_strided_slice %166 {offsets = [0, 256], sizes = [8, 128], strides = [1, 1]} : vector<8x512xf32> to vector<8x128xf32>
    %180 = math.tanh %179 : vector<8x128xf32>
    %181 = vector.extract_strided_slice %166 {offsets = [0, 384], sizes = [8, 128], strides = [1, 1]} : vector<8x512xf32> to vector<8x128xf32>
    %182 = arith.negf %181 : vector<8x128xf32>
    %183 = math.exp %182 : vector<8x128xf32>
    %cst_56 = arith.constant 1.000000e+00 : f32
    %184 = vector.broadcast %cst_56 : f32 to vector<8x128xf32>
    %185 = arith.addf %184, %183 : vector<8x128xf32>
    %186 = arith.divf %184, %185 : vector<8x128xf32>
    %187 = arith.mulf %178, %153 : vector<8x128xf32>
    %188 = arith.mulf %172, %180 : vector<8x128xf32>
    %189 = arith.addf %187, %188 : vector<8x128xf32>
    %190 = math.tanh %189 : vector<8x128xf32>
    %191 = arith.mulf %186, %190 : vector<8x128xf32>
    %192 = arith.truncf %191 : vector<8x128xf32> to vector<8x128xbf16>
    %193 = arith.index_cast %c4_i32 : i32 to index
    %c0_57 = arith.constant 0 : index
    %c0_58 = arith.constant 0 : index
    %194 = vector.load %arg13[%193, %c0_57, %c0_58] : memref<8x8x128xbf16, #tpu.memory_space<vmem>>, vector<1x8x128xbf16>
    %195 = vector.shape_cast %194 : vector<1x8x128xbf16> to vector<8x128xbf16>
    %196 = vector.shape_cast %192 : vector<8x128xbf16> to vector<1x8x128xbf16>
    tpu.vector_store %arg13[%193, %c0_57, %c0_58], %196 {strides = array<i32>} : memref<8x8x128xbf16, #tpu.memory_space<vmem>>, vector<1x8x128xbf16>,
    %c5_i32 = arith.constant 5 : i32
    %197 = arith.index_cast %c5_i32 : i32 to index
    %c0_59 = arith.constant 0 : index
    %c0_60 = arith.constant 0 : index
    %198 = vector.load %arg12[%197, %c0_59, %c0_60] : memref<8x8x512xf32, #tpu.memory_space<vmem>>, vector<1x8x512xf32>
    %199 = vector.shape_cast %198 : vector<1x8x512xf32> to vector<8x512xf32>
    %200 = arith.truncf %191 : vector<8x128xf32> to vector<8x128xbf16>
    %cst_61 = arith.constant dense<0.000000e+00> : vector<8x512xf32>
    %201 = tpu.matmul %200, %12, %cst_61 {dimension_numbers = #tpu.dot_dimension_numbers<[1], [0], [0], [1], [0, 0, 1, 1], [], []>} : vector<8x128xbf16>, vector<128x512xbf16>, vector<8x512xf32> -> vector<8x512xf32>
    %202 = arith.addf %199, %201 : vector<8x512xf32>
    %203 = vector.extract_strided_slice %202 {offsets = [0, 0], sizes = [8, 128], strides = [1, 1]} : vector<8x512xf32> to vector<8x128xf32>
    %204 = arith.negf %203 : vector<8x128xf32>
    %205 = math.exp %204 : vector<8x128xf32>
    %cst_62 = arith.constant 1.000000e+00 : f32
    %206 = vector.broadcast %cst_62 : f32 to vector<8x128xf32>
    %207 = arith.addf %206, %205 : vector<8x128xf32>
    %208 = arith.divf %206, %207 : vector<8x128xf32>
    %209 = vector.extract_strided_slice %202 {offsets = [0, 128], sizes = [8, 128], strides = [1, 1]} : vector<8x512xf32> to vector<8x128xf32>
    %210 = arith.negf %209 : vector<8x128xf32>
    %211 = math.exp %210 : vector<8x128xf32>
    %cst_63 = arith.constant 1.000000e+00 : f32
    %212 = vector.broadcast %cst_63 : f32 to vector<8x128xf32>
    %213 = arith.addf %212, %211 : vector<8x128xf32>
    %214 = arith.divf %212, %213 : vector<8x128xf32>
    %215 = vector.extract_strided_slice %202 {offsets = [0, 256], sizes = [8, 128], strides = [1, 1]} : vector<8x512xf32> to vector<8x128xf32>
    %216 = math.tanh %215 : vector<8x128xf32>
    %217 = vector.extract_strided_slice %202 {offsets = [0, 384], sizes = [8, 128], strides = [1, 1]} : vector<8x512xf32> to vector<8x128xf32>
    %218 = arith.negf %217 : vector<8x128xf32>
    %219 = math.exp %218 : vector<8x128xf32>
    %cst_64 = arith.constant 1.000000e+00 : f32
    %220 = vector.broadcast %cst_64 : f32 to vector<8x128xf32>
    %221 = arith.addf %220, %219 : vector<8x128xf32>
    %222 = arith.divf %220, %221 : vector<8x128xf32>
    %223 = arith.mulf %214, %189 : vector<8x128xf32>
    %224 = arith.mulf %208, %216 : vector<8x128xf32>
    %225 = arith.addf %223, %224 : vector<8x128xf32>
    %226 = math.tanh %225 : vector<8x128xf32>
    %227 = arith.mulf %222, %226 : vector<8x128xf32>
    %228 = arith.truncf %227 : vector<8x128xf32> to vector<8x128xbf16>
    %229 = arith.index_cast %c5_i32 : i32 to index
    %c0_65 = arith.constant 0 : index
    %c0_66 = arith.constant 0 : index
    %230 = vector.load %arg13[%229, %c0_65, %c0_66] : memref<8x8x128xbf16, #tpu.memory_space<vmem>>, vector<1x8x128xbf16>
    %231 = vector.shape_cast %230 : vector<1x8x128xbf16> to vector<8x128xbf16>
    %232 = vector.shape_cast %228 : vector<8x128xbf16> to vector<1x8x128xbf16>
    tpu.vector_store %arg13[%229, %c0_65, %c0_66], %232 {strides = array<i32>} : memref<8x8x128xbf16, #tpu.memory_space<vmem>>, vector<1x8x128xbf16>,
    %c6_i32 = arith.constant 6 : i32
    %233 = arith.index_cast %c6_i32 : i32 to index
    %c0_67 = arith.constant 0 : index
    %c0_68 = arith.constant 0 : index
    %234 = vector.load %arg12[%233, %c0_67, %c0_68] : memref<8x8x512xf32, #tpu.memory_space<vmem>>, vector<1x8x512xf32>
    %235 = vector.shape_cast %234 : vector<1x8x512xf32> to vector<8x512xf32>
    %236 = arith.truncf %227 : vector<8x128xf32> to vector<8x128xbf16>
    %cst_69 = arith.constant dense<0.000000e+00> : vector<8x512xf32>
    %237 = tpu.matmul %236, %12, %cst_69 {dimension_numbers = #tpu.dot_dimension_numbers<[1], [0], [0], [1], [0, 0, 1, 1], [], []>} : vector<8x128xbf16>, vector<128x512xbf16>, vector<8x512xf32> -> vector<8x512xf32>
    %238 = arith.addf %235, %237 : vector<8x512xf32>
    %239 = vector.extract_strided_slice %238 {offsets = [0, 0], sizes = [8, 128], strides = [1, 1]} : vector<8x512xf32> to vector<8x128xf32>
    %240 = arith.negf %239 : vector<8x128xf32>
    %241 = math.exp %240 : vector<8x128xf32>
    %cst_70 = arith.constant 1.000000e+00 : f32
    %242 = vector.broadcast %cst_70 : f32 to vector<8x128xf32>
    %243 = arith.addf %242, %241 : vector<8x128xf32>
    %244 = arith.divf %242, %243 : vector<8x128xf32>
    %245 = vector.extract_strided_slice %238 {offsets = [0, 128], sizes = [8, 128], strides = [1, 1]} : vector<8x512xf32> to vector<8x128xf32>
    %246 = arith.negf %245 : vector<8x128xf32>
    %247 = math.exp %246 : vector<8x128xf32>
    %cst_71 = arith.constant 1.000000e+00 : f32
    %248 = vector.broadcast %cst_71 : f32 to vector<8x128xf32>
    %249 = arith.addf %248, %247 : vector<8x128xf32>
    %250 = arith.divf %248, %249 : vector<8x128xf32>
    %251 = vector.extract_strided_slice %238 {offsets = [0, 256], sizes = [8, 128], strides = [1, 1]} : vector<8x512xf32> to vector<8x128xf32>
    %252 = math.tanh %251 : vector<8x128xf32>
    %253 = vector.extract_strided_slice %238 {offsets = [0, 384], sizes = [8, 128], strides = [1, 1]} : vector<8x512xf32> to vector<8x128xf32>
    %254 = arith.negf %253 : vector<8x128xf32>
    %255 = math.exp %254 : vector<8x128xf32>
    %cst_72 = arith.constant 1.000000e+00 : f32
    %256 = vector.broadcast %cst_72 : f32 to vector<8x128xf32>
    %257 = arith.addf %256, %255 : vector<8x128xf32>
    %258 = arith.divf %256, %257 : vector<8x128xf32>
    %259 = arith.mulf %250, %225 : vector<8x128xf32>
    %260 = arith.mulf %244, %252 : vector<8x128xf32>
    %261 = arith.addf %259, %260 : vector<8x128xf32>
    %262 = math.tanh %261 : vector<8x128xf32>
    %263 = arith.mulf %258, %262 : vector<8x128xf32>
    %264 = arith.truncf %263 : vector<8x128xf32> to vector<8x128xbf16>
    %265 = arith.index_cast %c6_i32 : i32 to index
    %c0_73 = arith.constant 0 : index
    %c0_74 = arith.constant 0 : index
    %266 = vector.load %arg13[%265, %c0_73, %c0_74] : memref<8x8x128xbf16, #tpu.memory_space<vmem>>, vector<1x8x128xbf16>
    %267 = vector.shape_cast %266 : vector<1x8x128xbf16> to vector<8x128xbf16>
    %268 = vector.shape_cast %264 : vector<8x128xbf16> to vector<1x8x128xbf16>
    tpu.vector_store %arg13[%265, %c0_73, %c0_74], %268 {strides = array<i32>} : memref<8x8x128xbf16, #tpu.memory_space<vmem>>, vector<1x8x128xbf16>,
    %c7_i32 = arith.constant 7 : i32
    %269 = arith.index_cast %c7_i32 : i32 to index
    %c0_75 = arith.constant 0 : index
    %c0_76 = arith.constant 0 : index
    %270 = vector.load %arg12[%269, %c0_75, %c0_76] : memref<8x8x512xf32, #tpu.memory_space<vmem>>, vector<1x8x512xf32>
    %271 = vector.shape_cast %270 : vector<1x8x512xf32> to vector<8x512xf32>
    %272 = arith.truncf %263 : vector<8x128xf32> to vector<8x128xbf16>
    %cst_77 = arith.constant dense<0.000000e+00> : vector<8x512xf32>
    %273 = tpu.matmul %272, %12, %cst_77 {dimension_numbers = #tpu.dot_dimension_numbers<[1], [0], [0], [1], [0, 0, 1, 1], [], []>} : vector<8x128xbf16>, vector<128x512xbf16>, vector<8x512xf32> -> vector<8x512xf32>
    %274 = arith.addf %271, %273 : vector<8x512xf32>
    %275 = vector.extract_strided_slice %274 {offsets = [0, 0], sizes = [8, 128], strides = [1, 1]} : vector<8x512xf32> to vector<8x128xf32>
    %276 = arith.negf %275 : vector<8x128xf32>
    %277 = math.exp %276 : vector<8x128xf32>
    %cst_78 = arith.constant 1.000000e+00 : f32
    %278 = vector.broadcast %cst_78 : f32 to vector<8x128xf32>
    %279 = arith.addf %278, %277 : vector<8x128xf32>
    %280 = arith.divf %278, %279 : vector<8x128xf32>
    %281 = vector.extract_strided_slice %274 {offsets = [0, 128], sizes = [8, 128], strides = [1, 1]} : vector<8x512xf32> to vector<8x128xf32>
    %282 = arith.negf %281 : vector<8x128xf32>
    %283 = math.exp %282 : vector<8x128xf32>
    %cst_79 = arith.constant 1.000000e+00 : f32
    %284 = vector.broadcast %cst_79 : f32 to vector<8x128xf32>
    %285 = arith.addf %284, %283 : vector<8x128xf32>
    %286 = arith.divf %284, %285 : vector<8x128xf32>
    %287 = vector.extract_strided_slice %274 {offsets = [0, 256], sizes = [8, 128], strides = [1, 1]} : vector<8x512xf32> to vector<8x128xf32>
    %288 = math.tanh %287 : vector<8x128xf32>
    %289 = vector.extract_strided_slice %274 {offsets = [0, 384], sizes = [8, 128], strides = [1, 1]} : vector<8x512xf32> to vector<8x128xf32>
    %290 = arith.negf %289 : vector<8x128xf32>
    %291 = math.exp %290 : vector<8x128xf32>
    %cst_80 = arith.constant 1.000000e+00 : f32
    %292 = vector.broadcast %cst_80 : f32 to vector<8x128xf32>
    %293 = arith.addf %292, %291 : vector<8x128xf32>
    %294 = arith.divf %292, %293 : vector<8x128xf32>
    %295 = arith.mulf %286, %261 : vector<8x128xf32>
    %296 = arith.mulf %280, %288 : vector<8x128xf32>
    %297 = arith.addf %295, %296 : vector<8x128xf32>
    %298 = math.tanh %297 : vector<8x128xf32>
    %299 = arith.mulf %294, %298 : vector<8x128xf32>
    %300 = arith.truncf %299 : vector<8x128xf32> to vector<8x128xbf16>
    %301 = arith.index_cast %c7_i32 : i32 to index
    %c0_81 = arith.constant 0 : index
    %c0_82 = arith.constant 0 : index
    %302 = vector.load %arg13[%301, %c0_81, %c0_82] : memref<8x8x128xbf16, #tpu.memory_space<vmem>>, vector<1x8x128xbf16>
    %303 = vector.shape_cast %302 : vector<1x8x128xbf16> to vector<8x128xbf16>
    %304 = vector.shape_cast %300 : vector<8x128xbf16> to vector<1x8x128xbf16>
    tpu.vector_store %arg13[%301, %c0_81, %c0_82], %304 {strides = array<i32>} : memref<8x8x128xbf16, #tpu.memory_space<vmem>>, vector<1x8x128xbf16>,
    %c8_i32 = arith.constant 8 : i32
    %c0_83 = arith.constant 0 : index
    %c0_84 = arith.constant 0 : index
    %c0_85 = arith.constant 0 : index
    %305 = vector.load %arg10[%c0_83, %c0_84, %c0_85] : memref<2x8x128xf32, #tpu.memory_space<vmem>>, vector<1x8x128xf32>
    %306 = vector.shape_cast %305 : vector<1x8x128xf32> to vector<8x128xf32>
    %307 = vector.shape_cast %299 : vector<8x128xf32> to vector<1x8x128xf32>
    tpu.vector_store %arg10[%c0_83, %c0_84, %c0_85], %307 {strides = array<i32>} : memref<2x8x128xf32, #tpu.memory_space<vmem>>, vector<1x8x128xf32>,
    %c0_86 = arith.constant 0 : index
    %c0_87 = arith.constant 0 : index
    %c0_88 = arith.constant 0 : index
    %308 = vector.load %arg11[%c0_86, %c0_87, %c0_88] : memref<2x8x128xf32, #tpu.memory_space<vmem>>, vector<1x8x128xf32>
    %309 = vector.shape_cast %308 : vector<1x8x128xf32> to vector<8x128xf32>
    %310 = vector.shape_cast %297 : vector<8x128xf32> to vector<1x8x128xf32>
    tpu.vector_store %arg11[%c0_86, %c0_87, %c0_88], %310 {strides = array<i32>} : memref<2x8x128xf32, #tpu.memory_space<vmem>>, vector<1x8x128xf32>,
    %c0_89 = arith.constant 0 : index
    %c0_90 = arith.constant 0 : index
    %c0_91 = arith.constant 0 : index
    %311 = vector.load %arg13[%c0_89, %c0_90, %c0_91] : memref<8x8x128xbf16, #tpu.memory_space<vmem>>, vector<8x8x128xbf16>
    %312 = vector.shape_cast %311 : vector<8x8x128xbf16> to vector<64x128xbf16>
    %c0_92 = arith.constant 0 : index
    %c0_93 = arith.constant 0 : index
    %313 = vector.load %arg6[%c0_92, %c0_93] : memref<128x512xbf16, #tpu.memory_space<vmem>>, vector<128x512xbf16>
    %cst_94 = arith.constant dense<0.000000e+00> : vector<64x512xf32>
    %314 = tpu.matmul %312, %313, %cst_94 {dimension_numbers = #tpu.dot_dimension_numbers<[1], [0], [0], [1], [0, 0, 1, 1], [], []>} : vector<64x128xbf16>, vector<128x512xbf16>, vector<64x512xf32> -> vector<64x512xf32>
    %c0_95 = arith.constant 0 : index
    %c0_96 = arith.constant 0 : index
    %315 = vector.load %arg8[%c0_95, %c0_96] : memref<1x512xf32, #tpu.memory_space<vmem>>, vector<1x512xf32>
    %316 = vector.broadcast %315 : vector<1x512xf32> to vector<64x512xf32>
    %317 = arith.addf %314, %316 : vector<64x512xf32>
    %318 = vector.shape_cast %317 : vector<64x512xf32> to vector<8x8x512xf32>
    %c0_97 = arith.constant 0 : index
    %c0_98 = arith.constant 0 : index
    %c0_99 = arith.constant 0 : index
    %319 = vector.load %arg12[%c0_97, %c0_98, %c0_99] : memref<8x8x512xf32, #tpu.memory_space<vmem>>, vector<8x8x512xf32>
    tpu.vector_store %arg12[%c0_97, %c0_98, %c0_99], %318 {strides = array<i32>} : memref<8x8x512xf32, #tpu.memory_space<vmem>>, vector<8x8x512xf32>,
    %c0_100 = arith.constant 0 : index
    %c0_101 = arith.constant 0 : index
    %320 = vector.load %arg7[%c0_100, %c0_101] : memref<128x512xbf16, #tpu.memory_space<vmem>>, vector<128x512xbf16>
    %c1 = arith.constant 1 : index
    %c0_102 = arith.constant 0 : index
    %c0_103 = arith.constant 0 : index
    %321 = vector.load %arg10[%c1, %c0_102, %c0_103] : memref<2x8x128xf32, #tpu.memory_space<vmem>>, vector<1x8x128xf32>
    %322 = vector.shape_cast %321 : vector<1x8x128xf32> to vector<8x128xf32>
    %c1_104 = arith.constant 1 : index
    %c0_105 = arith.constant 0 : index
    %c0_106 = arith.constant 0 : index
    %323 = vector.load %arg11[%c1_104, %c0_105, %c0_106] : memref<2x8x128xf32, #tpu.memory_space<vmem>>, vector<1x8x128xf32>
    %324 = vector.shape_cast %323 : vector<1x8x128xf32> to vector<8x128xf32>
    %c0_i32_107 = arith.constant 0 : i32
    %325 = arith.index_cast %c0_i32_107 : i32 to index
    %c0_108 = arith.constant 0 : index
    %c0_109 = arith.constant 0 : index
    %326 = vector.load %arg12[%325, %c0_108, %c0_109] : memref<8x8x512xf32, #tpu.memory_space<vmem>>, vector<1x8x512xf32>
    %327 = vector.shape_cast %326 : vector<1x8x512xf32> to vector<8x512xf32>
    %328 = arith.truncf %322 : vector<8x128xf32> to vector<8x128xbf16>
    %cst_110 = arith.constant dense<0.000000e+00> : vector<8x512xf32>
    %329 = tpu.matmul %328, %320, %cst_110 {dimension_numbers = #tpu.dot_dimension_numbers<[1], [0], [0], [1], [0, 0, 1, 1], [], []>} : vector<8x128xbf16>, vector<128x512xbf16>, vector<8x512xf32> -> vector<8x512xf32>
    %330 = arith.addf %327, %329 : vector<8x512xf32>
    %331 = vector.extract_strided_slice %330 {offsets = [0, 0], sizes = [8, 128], strides = [1, 1]} : vector<8x512xf32> to vector<8x128xf32>
    %332 = arith.negf %331 : vector<8x128xf32>
    %333 = math.exp %332 : vector<8x128xf32>
    %cst_111 = arith.constant 1.000000e+00 : f32
    %334 = vector.broadcast %cst_111 : f32 to vector<8x128xf32>
    %335 = arith.addf %334, %333 : vector<8x128xf32>
    %336 = arith.divf %334, %335 : vector<8x128xf32>
    %337 = vector.extract_strided_slice %330 {offsets = [0, 128], sizes = [8, 128], strides = [1, 1]} : vector<8x512xf32> to vector<8x128xf32>
    %338 = arith.negf %337 : vector<8x128xf32>
    %339 = math.exp %338 : vector<8x128xf32>
    %cst_112 = arith.constant 1.000000e+00 : f32
    %340 = vector.broadcast %cst_112 : f32 to vector<8x128xf32>
    %341 = arith.addf %340, %339 : vector<8x128xf32>
    %342 = arith.divf %340, %341 : vector<8x128xf32>
    %343 = vector.extract_strided_slice %330 {offsets = [0, 256], sizes = [8, 128], strides = [1, 1]} : vector<8x512xf32> to vector<8x128xf32>
    %344 = math.tanh %343 : vector<8x128xf32>
    %345 = vector.extract_strided_slice %330 {offsets = [0, 384], sizes = [8, 128], strides = [1, 1]} : vector<8x512xf32> to vector<8x128xf32>
    %346 = arith.negf %345 : vector<8x128xf32>
    %347 = math.exp %346 : vector<8x128xf32>
    %cst_113 = arith.constant 1.000000e+00 : f32
    %348 = vector.broadcast %cst_113 : f32 to vector<8x128xf32>
    %349 = arith.addf %348, %347 : vector<8x128xf32>
    %350 = arith.divf %348, %349 : vector<8x128xf32>
    %351 = arith.mulf %342, %324 : vector<8x128xf32>
    %352 = arith.mulf %336, %344 : vector<8x128xf32>
    %353 = arith.addf %351, %352 : vector<8x128xf32>
    %354 = math.tanh %353 : vector<8x128xf32>
    %355 = arith.mulf %350, %354 : vector<8x128xf32>
    %356 = arith.truncf %355 : vector<8x128xf32> to vector<8x128xbf16>
    %357 = arith.index_cast %c0_i32_107 : i32 to index
    %c0_114 = arith.constant 0 : index
    %c0_115 = arith.constant 0 : index
    %358 = vector.load %arg9[%357, %c0_114, %c0_115] : memref<8x8x128xbf16, #tpu.memory_space<vmem>>, vector<1x8x128xbf16>
    %359 = vector.shape_cast %358 : vector<1x8x128xbf16> to vector<8x128xbf16>
    %360 = vector.shape_cast %356 : vector<8x128xbf16> to vector<1x8x128xbf16>
    tpu.vector_store %arg9[%357, %c0_114, %c0_115], %360 {strides = array<i32>} : memref<8x8x128xbf16, #tpu.memory_space<vmem>>, vector<1x8x128xbf16>,
    %c1_i32_116 = arith.constant 1 : i32
    %361 = arith.index_cast %c1_i32_116 : i32 to index
    %c0_117 = arith.constant 0 : index
    %c0_118 = arith.constant 0 : index
    %362 = vector.load %arg12[%361, %c0_117, %c0_118] : memref<8x8x512xf32, #tpu.memory_space<vmem>>, vector<1x8x512xf32>
    %363 = vector.shape_cast %362 : vector<1x8x512xf32> to vector<8x512xf32>
    %364 = arith.truncf %355 : vector<8x128xf32> to vector<8x128xbf16>
    %cst_119 = arith.constant dense<0.000000e+00> : vector<8x512xf32>
    %365 = tpu.matmul %364, %320, %cst_119 {dimension_numbers = #tpu.dot_dimension_numbers<[1], [0], [0], [1], [0, 0, 1, 1], [], []>} : vector<8x128xbf16>, vector<128x512xbf16>, vector<8x512xf32> -> vector<8x512xf32>
    %366 = arith.addf %363, %365 : vector<8x512xf32>
    %367 = vector.extract_strided_slice %366 {offsets = [0, 0], sizes = [8, 128], strides = [1, 1]} : vector<8x512xf32> to vector<8x128xf32>
    %368 = arith.negf %367 : vector<8x128xf32>
    %369 = math.exp %368 : vector<8x128xf32>
    %cst_120 = arith.constant 1.000000e+00 : f32
    %370 = vector.broadcast %cst_120 : f32 to vector<8x128xf32>
    %371 = arith.addf %370, %369 : vector<8x128xf32>
    %372 = arith.divf %370, %371 : vector<8x128xf32>
    %373 = vector.extract_strided_slice %366 {offsets = [0, 128], sizes = [8, 128], strides = [1, 1]} : vector<8x512xf32> to vector<8x128xf32>
    %374 = arith.negf %373 : vector<8x128xf32>
    %375 = math.exp %374 : vector<8x128xf32>
    %cst_121 = arith.constant 1.000000e+00 : f32
    %376 = vector.broadcast %cst_121 : f32 to vector<8x128xf32>
    %377 = arith.addf %376, %375 : vector<8x128xf32>
    %378 = arith.divf %376, %377 : vector<8x128xf32>
    %379 = vector.extract_strided_slice %366 {offsets = [0, 256], sizes = [8, 128], strides = [1, 1]} : vector<8x512xf32> to vector<8x128xf32>
    %380 = math.tanh %379 : vector<8x128xf32>
    %381 = vector.extract_strided_slice %366 {offsets = [0, 384], sizes = [8, 128], strides = [1, 1]} : vector<8x512xf32> to vector<8x128xf32>
    %382 = arith.negf %381 : vector<8x128xf32>
    %383 = math.exp %382 : vector<8x128xf32>
    %cst_122 = arith.constant 1.000000e+00 : f32
    %384 = vector.broadcast %cst_122 : f32 to vector<8x128xf32>
    %385 = arith.addf %384, %383 : vector<8x128xf32>
    %386 = arith.divf %384, %385 : vector<8x128xf32>
    %387 = arith.mulf %378, %353 : vector<8x128xf32>
    %388 = arith.mulf %372, %380 : vector<8x128xf32>
    %389 = arith.addf %387, %388 : vector<8x128xf32>
    %390 = math.tanh %389 : vector<8x128xf32>
    %391 = arith.mulf %386, %390 : vector<8x128xf32>
    %392 = arith.truncf %391 : vector<8x128xf32> to vector<8x128xbf16>
    %393 = arith.index_cast %c1_i32_116 : i32 to index
    %c0_123 = arith.constant 0 : index
    %c0_124 = arith.constant 0 : index
    %394 = vector.load %arg9[%393, %c0_123, %c0_124] : memref<8x8x128xbf16, #tpu.memory_space<vmem>>, vector<1x8x128xbf16>
    %395 = vector.shape_cast %394 : vector<1x8x128xbf16> to vector<8x128xbf16>
    %396 = vector.shape_cast %392 : vector<8x128xbf16> to vector<1x8x128xbf16>
    tpu.vector_store %arg9[%393, %c0_123, %c0_124], %396 {strides = array<i32>} : memref<8x8x128xbf16, #tpu.memory_space<vmem>>, vector<1x8x128xbf16>,
    %c2_i32_125 = arith.constant 2 : i32
    %397 = arith.index_cast %c2_i32_125 : i32 to index
    %c0_126 = arith.constant 0 : index
    %c0_127 = arith.constant 0 : index
    %398 = vector.load %arg12[%397, %c0_126, %c0_127] : memref<8x8x512xf32, #tpu.memory_space<vmem>>, vector<1x8x512xf32>
    %399 = vector.shape_cast %398 : vector<1x8x512xf32> to vector<8x512xf32>
    %400 = arith.truncf %391 : vector<8x128xf32> to vector<8x128xbf16>
    %cst_128 = arith.constant dense<0.000000e+00> : vector<8x512xf32>
    %401 = tpu.matmul %400, %320, %cst_128 {dimension_numbers = #tpu.dot_dimension_numbers<[1], [0], [0], [1], [0, 0, 1, 1], [], []>} : vector<8x128xbf16>, vector<128x512xbf16>, vector<8x512xf32> -> vector<8x512xf32>
    %402 = arith.addf %399, %401 : vector<8x512xf32>
    %403 = vector.extract_strided_slice %402 {offsets = [0, 0], sizes = [8, 128], strides = [1, 1]} : vector<8x512xf32> to vector<8x128xf32>
    %404 = arith.negf %403 : vector<8x128xf32>
    %405 = math.exp %404 : vector<8x128xf32>
    %cst_129 = arith.constant 1.000000e+00 : f32
    %406 = vector.broadcast %cst_129 : f32 to vector<8x128xf32>
    %407 = arith.addf %406, %405 : vector<8x128xf32>
    %408 = arith.divf %406, %407 : vector<8x128xf32>
    %409 = vector.extract_strided_slice %402 {offsets = [0, 128], sizes = [8, 128], strides = [1, 1]} : vector<8x512xf32> to vector<8x128xf32>
    %410 = arith.negf %409 : vector<8x128xf32>
    %411 = math.exp %410 : vector<8x128xf32>
    %cst_130 = arith.constant 1.000000e+00 : f32
    %412 = vector.broadcast %cst_130 : f32 to vector<8x128xf32>
    %413 = arith.addf %412, %411 : vector<8x128xf32>
    %414 = arith.divf %412, %413 : vector<8x128xf32>
    %415 = vector.extract_strided_slice %402 {offsets = [0, 256], sizes = [8, 128], strides = [1, 1]} : vector<8x512xf32> to vector<8x128xf32>
    %416 = math.tanh %415 : vector<8x128xf32>
    %417 = vector.extract_strided_slice %402 {offsets = [0, 384], sizes = [8, 128], strides = [1, 1]} : vector<8x512xf32> to vector<8x128xf32>
    %418 = arith.negf %417 : vector<8x128xf32>
    %419 = math.exp %418 : vector<8x128xf32>
    %cst_131 = arith.constant 1.000000e+00 : f32
    %420 = vector.broadcast %cst_131 : f32 to vector<8x128xf32>
    %421 = arith.addf %420, %419 : vector<8x128xf32>
    %422 = arith.divf %420, %421 : vector<8x128xf32>
    %423 = arith.mulf %414, %389 : vector<8x128xf32>
    %424 = arith.mulf %408, %416 : vector<8x128xf32>
    %425 = arith.addf %423, %424 : vector<8x128xf32>
    %426 = math.tanh %425 : vector<8x128xf32>
    %427 = arith.mulf %422, %426 : vector<8x128xf32>
    %428 = arith.truncf %427 : vector<8x128xf32> to vector<8x128xbf16>
    %429 = arith.index_cast %c2_i32_125 : i32 to index
    %c0_132 = arith.constant 0 : index
    %c0_133 = arith.constant 0 : index
    %430 = vector.load %arg9[%429, %c0_132, %c0_133] : memref<8x8x128xbf16, #tpu.memory_space<vmem>>, vector<1x8x128xbf16>
    %431 = vector.shape_cast %430 : vector<1x8x128xbf16> to vector<8x128xbf16>
    %432 = vector.shape_cast %428 : vector<8x128xbf16> to vector<1x8x128xbf16>
    tpu.vector_store %arg9[%429, %c0_132, %c0_133], %432 {strides = array<i32>} : memref<8x8x128xbf16, #tpu.memory_space<vmem>>, vector<1x8x128xbf16>,
    %c3_i32_134 = arith.constant 3 : i32
    %433 = arith.index_cast %c3_i32_134 : i32 to index
    %c0_135 = arith.constant 0 : index
    %c0_136 = arith.constant 0 : index
    %434 = vector.load %arg12[%433, %c0_135, %c0_136] : memref<8x8x512xf32, #tpu.memory_space<vmem>>, vector<1x8x512xf32>
    %435 = vector.shape_cast %434 : vector<1x8x512xf32> to vector<8x512xf32>
    %436 = arith.truncf %427 : vector<8x128xf32> to vector<8x128xbf16>
    %cst_137 = arith.constant dense<0.000000e+00> : vector<8x512xf32>
    %437 = tpu.matmul %436, %320, %cst_137 {dimension_numbers = #tpu.dot_dimension_numbers<[1], [0], [0], [1], [0, 0, 1, 1], [], []>} : vector<8x128xbf16>, vector<128x512xbf16>, vector<8x512xf32> -> vector<8x512xf32>
    %438 = arith.addf %435, %437 : vector<8x512xf32>
    %439 = vector.extract_strided_slice %438 {offsets = [0, 0], sizes = [8, 128], strides = [1, 1]} : vector<8x512xf32> to vector<8x128xf32>
    %440 = arith.negf %439 : vector<8x128xf32>
    %441 = math.exp %440 : vector<8x128xf32>
    %cst_138 = arith.constant 1.000000e+00 : f32
    %442 = vector.broadcast %cst_138 : f32 to vector<8x128xf32>
    %443 = arith.addf %442, %441 : vector<8x128xf32>
    %444 = arith.divf %442, %443 : vector<8x128xf32>
    %445 = vector.extract_strided_slice %438 {offsets = [0, 128], sizes = [8, 128], strides = [1, 1]} : vector<8x512xf32> to vector<8x128xf32>
    %446 = arith.negf %445 : vector<8x128xf32>
    %447 = math.exp %446 : vector<8x128xf32>
    %cst_139 = arith.constant 1.000000e+00 : f32
    %448 = vector.broadcast %cst_139 : f32 to vector<8x128xf32>
    %449 = arith.addf %448, %447 : vector<8x128xf32>
    %450 = arith.divf %448, %449 : vector<8x128xf32>
    %451 = vector.extract_strided_slice %438 {offsets = [0, 256], sizes = [8, 128], strides = [1, 1]} : vector<8x512xf32> to vector<8x128xf32>
    %452 = math.tanh %451 : vector<8x128xf32>
    %453 = vector.extract_strided_slice %438 {offsets = [0, 384], sizes = [8, 128], strides = [1, 1]} : vector<8x512xf32> to vector<8x128xf32>
    %454 = arith.negf %453 : vector<8x128xf32>
    %455 = math.exp %454 : vector<8x128xf32>
    %cst_140 = arith.constant 1.000000e+00 : f32
    %456 = vector.broadcast %cst_140 : f32 to vector<8x128xf32>
    %457 = arith.addf %456, %455 : vector<8x128xf32>
    %458 = arith.divf %456, %457 : vector<8x128xf32>
    %459 = arith.mulf %450, %425 : vector<8x128xf32>
    %460 = arith.mulf %444, %452 : vector<8x128xf32>
    %461 = arith.addf %459, %460 : vector<8x128xf32>
    %462 = math.tanh %461 : vector<8x128xf32>
    %463 = arith.mulf %458, %462 : vector<8x128xf32>
    %464 = arith.truncf %463 : vector<8x128xf32> to vector<8x128xbf16>
    %465 = arith.index_cast %c3_i32_134 : i32 to index
    %c0_141 = arith.constant 0 : index
    %c0_142 = arith.constant 0 : index
    %466 = vector.load %arg9[%465, %c0_141, %c0_142] : memref<8x8x128xbf16, #tpu.memory_space<vmem>>, vector<1x8x128xbf16>
    %467 = vector.shape_cast %466 : vector<1x8x128xbf16> to vector<8x128xbf16>
    %468 = vector.shape_cast %464 : vector<8x128xbf16> to vector<1x8x128xbf16>
    tpu.vector_store %arg9[%465, %c0_141, %c0_142], %468 {strides = array<i32>} : memref<8x8x128xbf16, #tpu.memory_space<vmem>>, vector<1x8x128xbf16>,
    %c4_i32_143 = arith.constant 4 : i32
    %469 = arith.index_cast %c4_i32_143 : i32 to index
    %c0_144 = arith.constant 0 : index
    %c0_145 = arith.constant 0 : index
    %470 = vector.load %arg12[%469, %c0_144, %c0_145] : memref<8x8x512xf32, #tpu.memory_space<vmem>>, vector<1x8x512xf32>
    %471 = vector.shape_cast %470 : vector<1x8x512xf32> to vector<8x512xf32>
    %472 = arith.truncf %463 : vector<8x128xf32> to vector<8x128xbf16>
    %cst_146 = arith.constant dense<0.000000e+00> : vector<8x512xf32>
    %473 = tpu.matmul %472, %320, %cst_146 {dimension_numbers = #tpu.dot_dimension_numbers<[1], [0], [0], [1], [0, 0, 1, 1], [], []>} : vector<8x128xbf16>, vector<128x512xbf16>, vector<8x512xf32> -> vector<8x512xf32>
    %474 = arith.addf %471, %473 : vector<8x512xf32>
    %475 = vector.extract_strided_slice %474 {offsets = [0, 0], sizes = [8, 128], strides = [1, 1]} : vector<8x512xf32> to vector<8x128xf32>
    %476 = arith.negf %475 : vector<8x128xf32>
    %477 = math.exp %476 : vector<8x128xf32>
    %cst_147 = arith.constant 1.000000e+00 : f32
    %478 = vector.broadcast %cst_147 : f32 to vector<8x128xf32>
    %479 = arith.addf %478, %477 : vector<8x128xf32>
    %480 = arith.divf %478, %479 : vector<8x128xf32>
    %481 = vector.extract_strided_slice %474 {offsets = [0, 128], sizes = [8, 128], strides = [1, 1]} : vector<8x512xf32> to vector<8x128xf32>
    %482 = arith.negf %481 : vector<8x128xf32>
    %483 = math.exp %482 : vector<8x128xf32>
    %cst_148 = arith.constant 1.000000e+00 : f32
    %484 = vector.broadcast %cst_148 : f32 to vector<8x128xf32>
    %485 = arith.addf %484, %483 : vector<8x128xf32>
    %486 = arith.divf %484, %485 : vector<8x128xf32>
    %487 = vector.extract_strided_slice %474 {offsets = [0, 256], sizes = [8, 128], strides = [1, 1]} : vector<8x512xf32> to vector<8x128xf32>
    %488 = math.tanh %487 : vector<8x128xf32>
    %489 = vector.extract_strided_slice %474 {offsets = [0, 384], sizes = [8, 128], strides = [1, 1]} : vector<8x512xf32> to vector<8x128xf32>
    %490 = arith.negf %489 : vector<8x128xf32>
    %491 = math.exp %490 : vector<8x128xf32>
    %cst_149 = arith.constant 1.000000e+00 : f32
    %492 = vector.broadcast %cst_149 : f32 to vector<8x128xf32>
    %493 = arith.addf %492, %491 : vector<8x128xf32>
    %494 = arith.divf %492, %493 : vector<8x128xf32>
    %495 = arith.mulf %486, %461 : vector<8x128xf32>
    %496 = arith.mulf %480, %488 : vector<8x128xf32>
    %497 = arith.addf %495, %496 : vector<8x128xf32>
    %498 = math.tanh %497 : vector<8x128xf32>
    %499 = arith.mulf %494, %498 : vector<8x128xf32>
    %500 = arith.truncf %499 : vector<8x128xf32> to vector<8x128xbf16>
    %501 = arith.index_cast %c4_i32_143 : i32 to index
    %c0_150 = arith.constant 0 : index
    %c0_151 = arith.constant 0 : index
    %502 = vector.load %arg9[%501, %c0_150, %c0_151] : memref<8x8x128xbf16, #tpu.memory_space<vmem>>, vector<1x8x128xbf16>
    %503 = vector.shape_cast %502 : vector<1x8x128xbf16> to vector<8x128xbf16>
    %504 = vector.shape_cast %500 : vector<8x128xbf16> to vector<1x8x128xbf16>
    tpu.vector_store %arg9[%501, %c0_150, %c0_151], %504 {strides = array<i32>} : memref<8x8x128xbf16, #tpu.memory_space<vmem>>, vector<1x8x128xbf16>,
    %c5_i32_152 = arith.constant 5 : i32
    %505 = arith.index_cast %c5_i32_152 : i32 to index
    %c0_153 = arith.constant 0 : index
    %c0_154 = arith.constant 0 : index
    %506 = vector.load %arg12[%505, %c0_153, %c0_154] : memref<8x8x512xf32, #tpu.memory_space<vmem>>, vector<1x8x512xf32>
    %507 = vector.shape_cast %506 : vector<1x8x512xf32> to vector<8x512xf32>
    %508 = arith.truncf %499 : vector<8x128xf32> to vector<8x128xbf16>
    %cst_155 = arith.constant dense<0.000000e+00> : vector<8x512xf32>
    %509 = tpu.matmul %508, %320, %cst_155 {dimension_numbers = #tpu.dot_dimension_numbers<[1], [0], [0], [1], [0, 0, 1, 1], [], []>} : vector<8x128xbf16>, vector<128x512xbf16>, vector<8x512xf32> -> vector<8x512xf32>
    %510 = arith.addf %507, %509 : vector<8x512xf32>
    %511 = vector.extract_strided_slice %510 {offsets = [0, 0], sizes = [8, 128], strides = [1, 1]} : vector<8x512xf32> to vector<8x128xf32>
    %512 = arith.negf %511 : vector<8x128xf32>
    %513 = math.exp %512 : vector<8x128xf32>
    %cst_156 = arith.constant 1.000000e+00 : f32
    %514 = vector.broadcast %cst_156 : f32 to vector<8x128xf32>
    %515 = arith.addf %514, %513 : vector<8x128xf32>
    %516 = arith.divf %514, %515 : vector<8x128xf32>
    %517 = vector.extract_strided_slice %510 {offsets = [0, 128], sizes = [8, 128], strides = [1, 1]} : vector<8x512xf32> to vector<8x128xf32>
    %518 = arith.negf %517 : vector<8x128xf32>
    %519 = math.exp %518 : vector<8x128xf32>
    %cst_157 = arith.constant 1.000000e+00 : f32
    %520 = vector.broadcast %cst_157 : f32 to vector<8x128xf32>
    %521 = arith.addf %520, %519 : vector<8x128xf32>
    %522 = arith.divf %520, %521 : vector<8x128xf32>
    %523 = vector.extract_strided_slice %510 {offsets = [0, 256], sizes = [8, 128], strides = [1, 1]} : vector<8x512xf32> to vector<8x128xf32>
    %524 = math.tanh %523 : vector<8x128xf32>
    %525 = vector.extract_strided_slice %510 {offsets = [0, 384], sizes = [8, 128], strides = [1, 1]} : vector<8x512xf32> to vector<8x128xf32>
    %526 = arith.negf %525 : vector<8x128xf32>
    %527 = math.exp %526 : vector<8x128xf32>
    %cst_158 = arith.constant 1.000000e+00 : f32
    %528 = vector.broadcast %cst_158 : f32 to vector<8x128xf32>
    %529 = arith.addf %528, %527 : vector<8x128xf32>
    %530 = arith.divf %528, %529 : vector<8x128xf32>
    %531 = arith.mulf %522, %497 : vector<8x128xf32>
    %532 = arith.mulf %516, %524 : vector<8x128xf32>
    %533 = arith.addf %531, %532 : vector<8x128xf32>
    %534 = math.tanh %533 : vector<8x128xf32>
    %535 = arith.mulf %530, %534 : vector<8x128xf32>
    %536 = arith.truncf %535 : vector<8x128xf32> to vector<8x128xbf16>
    %537 = arith.index_cast %c5_i32_152 : i32 to index
    %c0_159 = arith.constant 0 : index
    %c0_160 = arith.constant 0 : index
    %538 = vector.load %arg9[%537, %c0_159, %c0_160] : memref<8x8x128xbf16, #tpu.memory_space<vmem>>, vector<1x8x128xbf16>
    %539 = vector.shape_cast %538 : vector<1x8x128xbf16> to vector<8x128xbf16>
    %540 = vector.shape_cast %536 : vector<8x128xbf16> to vector<1x8x128xbf16>
    tpu.vector_store %arg9[%537, %c0_159, %c0_160], %540 {strides = array<i32>} : memref<8x8x128xbf16, #tpu.memory_space<vmem>>, vector<1x8x128xbf16>,
    %c6_i32_161 = arith.constant 6 : i32
    %541 = arith.index_cast %c6_i32_161 : i32 to index
    %c0_162 = arith.constant 0 : index
    %c0_163 = arith.constant 0 : index
    %542 = vector.load %arg12[%541, %c0_162, %c0_163] : memref<8x8x512xf32, #tpu.memory_space<vmem>>, vector<1x8x512xf32>
    %543 = vector.shape_cast %542 : vector<1x8x512xf32> to vector<8x512xf32>
    %544 = arith.truncf %535 : vector<8x128xf32> to vector<8x128xbf16>
    %cst_164 = arith.constant dense<0.000000e+00> : vector<8x512xf32>
    %545 = tpu.matmul %544, %320, %cst_164 {dimension_numbers = #tpu.dot_dimension_numbers<[1], [0], [0], [1], [0, 0, 1, 1], [], []>} : vector<8x128xbf16>, vector<128x512xbf16>, vector<8x512xf32> -> vector<8x512xf32>
    %546 = arith.addf %543, %545 : vector<8x512xf32>
    %547 = vector.extract_strided_slice %546 {offsets = [0, 0], sizes = [8, 128], strides = [1, 1]} : vector<8x512xf32> to vector<8x128xf32>
    %548 = arith.negf %547 : vector<8x128xf32>
    %549 = math.exp %548 : vector<8x128xf32>
    %cst_165 = arith.constant 1.000000e+00 : f32
    %550 = vector.broadcast %cst_165 : f32 to vector<8x128xf32>
    %551 = arith.addf %550, %549 : vector<8x128xf32>
    %552 = arith.divf %550, %551 : vector<8x128xf32>
    %553 = vector.extract_strided_slice %546 {offsets = [0, 128], sizes = [8, 128], strides = [1, 1]} : vector<8x512xf32> to vector<8x128xf32>
    %554 = arith.negf %553 : vector<8x128xf32>
    %555 = math.exp %554 : vector<8x128xf32>
    %cst_166 = arith.constant 1.000000e+00 : f32
    %556 = vector.broadcast %cst_166 : f32 to vector<8x128xf32>
    %557 = arith.addf %556, %555 : vector<8x128xf32>
    %558 = arith.divf %556, %557 : vector<8x128xf32>
    %559 = vector.extract_strided_slice %546 {offsets = [0, 256], sizes = [8, 128], strides = [1, 1]} : vector<8x512xf32> to vector<8x128xf32>
    %560 = math.tanh %559 : vector<8x128xf32>
    %561 = vector.extract_strided_slice %546 {offsets = [0, 384], sizes = [8, 128], strides = [1, 1]} : vector<8x512xf32> to vector<8x128xf32>
    %562 = arith.negf %561 : vector<8x128xf32>
    %563 = math.exp %562 : vector<8x128xf32>
    %cst_167 = arith.constant 1.000000e+00 : f32
    %564 = vector.broadcast %cst_167 : f32 to vector<8x128xf32>
    %565 = arith.addf %564, %563 : vector<8x128xf32>
    %566 = arith.divf %564, %565 : vector<8x128xf32>
    %567 = arith.mulf %558, %533 : vector<8x128xf32>
    %568 = arith.mulf %552, %560 : vector<8x128xf32>
    %569 = arith.addf %567, %568 : vector<8x128xf32>
    %570 = math.tanh %569 : vector<8x128xf32>
    %571 = arith.mulf %566, %570 : vector<8x128xf32>
    %572 = arith.truncf %571 : vector<8x128xf32> to vector<8x128xbf16>
    %573 = arith.index_cast %c6_i32_161 : i32 to index
    %c0_168 = arith.constant 0 : index
    %c0_169 = arith.constant 0 : index
    %574 = vector.load %arg9[%573, %c0_168, %c0_169] : memref<8x8x128xbf16, #tpu.memory_space<vmem>>, vector<1x8x128xbf16>
    %575 = vector.shape_cast %574 : vector<1x8x128xbf16> to vector<8x128xbf16>
    %576 = vector.shape_cast %572 : vector<8x128xbf16> to vector<1x8x128xbf16>
    tpu.vector_store %arg9[%573, %c0_168, %c0_169], %576 {strides = array<i32>} : memref<8x8x128xbf16, #tpu.memory_space<vmem>>, vector<1x8x128xbf16>,
    %c7_i32_170 = arith.constant 7 : i32
    %577 = arith.index_cast %c7_i32_170 : i32 to index
    %c0_171 = arith.constant 0 : index
    %c0_172 = arith.constant 0 : index
    %578 = vector.load %arg12[%577, %c0_171, %c0_172] : memref<8x8x512xf32, #tpu.memory_space<vmem>>, vector<1x8x512xf32>
    %579 = vector.shape_cast %578 : vector<1x8x512xf32> to vector<8x512xf32>
    %580 = arith.truncf %571 : vector<8x128xf32> to vector<8x128xbf16>
    %cst_173 = arith.constant dense<0.000000e+00> : vector<8x512xf32>
    %581 = tpu.matmul %580, %320, %cst_173 {dimension_numbers = #tpu.dot_dimension_numbers<[1], [0], [0], [1], [0, 0, 1, 1], [], []>} : vector<8x128xbf16>, vector<128x512xbf16>, vector<8x512xf32> -> vector<8x512xf32>
    %582 = arith.addf %579, %581 : vector<8x512xf32>
    %583 = vector.extract_strided_slice %582 {offsets = [0, 0], sizes = [8, 128], strides = [1, 1]} : vector<8x512xf32> to vector<8x128xf32>
    %584 = arith.negf %583 : vector<8x128xf32>
    %585 = math.exp %584 : vector<8x128xf32>
    %cst_174 = arith.constant 1.000000e+00 : f32
    %586 = vector.broadcast %cst_174 : f32 to vector<8x128xf32>
    %587 = arith.addf %586, %585 : vector<8x128xf32>
    %588 = arith.divf %586, %587 : vector<8x128xf32>
    %589 = vector.extract_strided_slice %582 {offsets = [0, 128], sizes = [8, 128], strides = [1, 1]} : vector<8x512xf32> to vector<8x128xf32>
    %590 = arith.negf %589 : vector<8x128xf32>
    %591 = math.exp %590 : vector<8x128xf32>
    %cst_175 = arith.constant 1.000000e+00 : f32
    %592 = vector.broadcast %cst_175 : f32 to vector<8x128xf32>
    %593 = arith.addf %592, %591 : vector<8x128xf32>
    %594 = arith.divf %592, %593 : vector<8x128xf32>
    %595 = vector.extract_strided_slice %582 {offsets = [0, 256], sizes = [8, 128], strides = [1, 1]} : vector<8x512xf32> to vector<8x128xf32>
    %596 = math.tanh %595 : vector<8x128xf32>
    %597 = vector.extract_strided_slice %582 {offsets = [0, 384], sizes = [8, 128], strides = [1, 1]} : vector<8x512xf32> to vector<8x128xf32>
    %598 = arith.negf %597 : vector<8x128xf32>
    %599 = math.exp %598 : vector<8x128xf32>
    %cst_176 = arith.constant 1.000000e+00 : f32
    %600 = vector.broadcast %cst_176 : f32 to vector<8x128xf32>
    %601 = arith.addf %600, %599 : vector<8x128xf32>
    %602 = arith.divf %600, %601 : vector<8x128xf32>
    %603 = arith.mulf %594, %569 : vector<8x128xf32>
    %604 = arith.mulf %588, %596 : vector<8x128xf32>
    %605 = arith.addf %603, %604 : vector<8x128xf32>
    %606 = math.tanh %605 : vector<8x128xf32>
    %607 = arith.mulf %602, %606 : vector<8x128xf32>
    %608 = arith.truncf %607 : vector<8x128xf32> to vector<8x128xbf16>
    %609 = arith.index_cast %c7_i32_170 : i32 to index
    %c0_177 = arith.constant 0 : index
    %c0_178 = arith.constant 0 : index
    %610 = vector.load %arg9[%609, %c0_177, %c0_178] : memref<8x8x128xbf16, #tpu.memory_space<vmem>>, vector<1x8x128xbf16>
    %611 = vector.shape_cast %610 : vector<1x8x128xbf16> to vector<8x128xbf16>
    %612 = vector.shape_cast %608 : vector<8x128xbf16> to vector<1x8x128xbf16>
    tpu.vector_store %arg9[%609, %c0_177, %c0_178], %612 {strides = array<i32>} : memref<8x8x128xbf16, #tpu.memory_space<vmem>>, vector<1x8x128xbf16>,
    %c8_i32_179 = arith.constant 8 : i32
    %c1_180 = arith.constant 1 : index
    %c0_181 = arith.constant 0 : index
    %c0_182 = arith.constant 0 : index
    %613 = vector.load %arg10[%c1_180, %c0_181, %c0_182] : memref<2x8x128xf32, #tpu.memory_space<vmem>>, vector<1x8x128xf32>
    %614 = vector.shape_cast %613 : vector<1x8x128xf32> to vector<8x128xf32>
    %615 = vector.shape_cast %607 : vector<8x128xf32> to vector<1x8x128xf32>
    tpu.vector_store %arg10[%c1_180, %c0_181, %c0_182], %615 {strides = array<i32>} : memref<2x8x128xf32, #tpu.memory_space<vmem>>, vector<1x8x128xf32>,
    %c1_183 = arith.constant 1 : index
    %c0_184 = arith.constant 0 : index
    %c0_185 = arith.constant 0 : index
    %616 = vector.load %arg11[%c1_183, %c0_184, %c0_185] : memref<2x8x128xf32, #tpu.memory_space<vmem>>, vector<1x8x128xf32>
    %617 = vector.shape_cast %616 : vector<1x8x128xf32> to vector<8x128xf32>
    %618 = vector.shape_cast %605 : vector<8x128xf32> to vector<1x8x128xf32>
    tpu.vector_store %arg11[%c1_183, %c0_184, %c0_185], %618 {strides = array<i32>} : memref<2x8x128xf32, #tpu.memory_space<vmem>>, vector<1x8x128xf32>,
    return
  }
  func.func @transform_0(%arg0: i32, %arg1: i32) -> (i32, i32, i32) {
    %c0_i32 = arith.constant 0 : i32
    %c0_i32_0 = arith.constant 0 : i32
    return %arg1, %arg0, %c0_i32 : i32, i32, i32
  }
  func.func @transform_1(%arg0: i32, %arg1: i32) -> (i32, i32) {
    %c0_i32 = arith.constant 0 : i32
    %c0_i32_0 = arith.constant 0 : i32
    %c0_i32_1 = arith.constant 0 : i32
    return %c0_i32, %c0_i32_0 : i32, i32
  }
  func.func @transform_2(%arg0: i32, %arg1: i32) -> (i32, i32) {
    %c0_i32 = arith.constant 0 : i32
    %c0_i32_0 = arith.constant 0 : i32
    %c0_i32_1 = arith.constant 0 : i32
    return %c0_i32, %c0_i32_0 : i32, i32
  }
  func.func @transform_3(%arg0: i32, %arg1: i32) -> (i32, i32) {
    %c0_i32 = arith.constant 0 : i32
    %c0_i32_0 = arith.constant 0 : i32
    %c0_i32_1 = arith.constant 0 : i32
    return %c0_i32, %c0_i32_0 : i32, i32
  }
  func.func @transform_4(%arg0: i32, %arg1: i32) -> (i32, i32) {
    %c0_i32 = arith.constant 0 : i32
    %c0_i32_0 = arith.constant 0 : i32
    %c0_i32_1 = arith.constant 0 : i32
    return %c0_i32, %c0_i32_0 : i32, i32
  }
  func.func @transform_5(%arg0: i32, %arg1: i32) -> (i32, i32) {
    %c0_i32 = arith.constant 0 : i32
    %c0_i32_0 = arith.constant 0 : i32
    %c0_i32_1 = arith.constant 0 : i32
    return %c0_i32, %c0_i32_0 : i32, i32
  }
  func.func @transform_6(%arg0: i32, %arg1: i32) -> (i32, i32) {
    %c0_i32 = arith.constant 0 : i32
    %c0_i32_0 = arith.constant 0 : i32
    %c0_i32_1 = arith.constant 0 : i32
    return %c0_i32, %c0_i32_0 : i32, i32
  }
  func.func @transform_7(%arg0: i32, %arg1: i32) -> (i32, i32, i32) {
    %c0_i32 = arith.constant 0 : i32
    %c0_i32_0 = arith.constant 0 : i32
    return %arg1, %arg0, %c0_i32 : i32, i32, i32
  }
  func.func @transform_8(%arg0: i32, %arg1: i32) -> (i32, i32, i32) {
    %c0_i32 = arith.constant 0 : i32
    %c0_i32_0 = arith.constant 0 : i32
    %c0_i32_1 = arith.constant 0 : i32
    return %c0_i32, %arg0, %c0_i32_0 : i32, i32, i32
  }
  func.func @transform_9(%arg0: i32, %arg1: i32) -> (i32, i32, i32) {
    %c0_i32 = arith.constant 0 : i32
    %c0_i32_0 = arith.constant 0 : i32
    %c0_i32_1 = arith.constant 0 : i32
    return %c0_i32, %arg0, %c0_i32_0 : i32, i32, i32
  }
}

</mosaic_0001>

<llo_original>
// kernel: tpu_custom_call.1
$region0: #{tpu_custom_call.1}
  #allocation0 [shape = 'u32[]', space=smem, size = 0x4, offset = 0x4, fixed_abs, tag = 'smem constant byte address 0x4 - core index']
  #allocation1 [shape = 'u32[144,128]{1,0:T(1,128)}', space=vmem, size = 0x12000, scoped, tag = 'internal scratch']
  #allocation2 [shape = 'f32[8,8,512]{2,1,0:T(8,128)}', space=vmem, size = 0x20000, scoped, tag = 'scratch operand']
  #allocation3 [shape = 'bf16[8,8,128]{2,1,0:T(8,128)(2,1)}', space=vmem, size = 0x4000, scoped, tag = 'scratch operand']
  %s0 = inlined_call_operand.hbm [shape: bf16[8,8,128], index: 0, kind: input, shape index: {}]
  %s1 = inlined_call_operand.hbm [shape: bf16[128,512], index: 1, kind: input, shape index: {}]
  %s2 = inlined_call_operand.hbm [shape: bf16[128,512], index: 2, kind: input, shape index: {}]
  %s3 = inlined_call_operand.vmem [shape: f32[1,512], index: 3, kind: input, shape index: {}]
  %s4 = inlined_call_operand.hbm [shape: bf16[128,512], index: 4, kind: input, shape index: {}]
  %s5 = inlined_call_operand.hbm [shape: bf16[128,512], index: 5, kind: input, shape index: {}]
  %s6 = inlined_call_operand.vmem [shape: f32[1,512], index: 6, kind: input, shape index: {}]
  %s7 = inlined_call_operand.hbm [shape: bf16[8,8,128], index: 7, kind: output, shape index: {0}]
  %s8 = inlined_call_operand.hbm [shape: f32[2,8,128], index: 8, kind: output, shape index: {1}]
  %s9 = inlined_call_operand.hbm [shape: f32[2,8,128], index: 9, kind: output, shape index: {2}]
  %10 = xla_tuple %s7, %s8, %s9
  %s11 = sld [smem:[#allocation0]]
  $region78: #{tpu_custom_call.1} parent=0
    _
  %s13 = ssub.s32 1, %s11
  %s14 = scalar_select 0, %s13, %s11
  $region1: #{tpu_custom_call.1} parent=0
    #allocation4 [shape = 'u8[16384]{0}', space=vmem, size = 0x4000, scoped, tag = 'input window, operand 0, single buffered']
    #allocation5 [shape = 's32[1]{0}', space=sflag, size = 0x4, scoped, tag = 'scoped memory for tpu_custom_call.1']
    #allocation6 [shape = 's32[1]{0}', space=sflag, size = 0x4, scoped, tag = 'scoped memory for tpu_custom_call.1']
    #allocation7 [shape = 'u8[131072]{0}', space=vmem, size = 0x20000, scoped, tag = 'input window, operand 1, single buffered']
    #allocation8 [shape = 's32[1]{0}', space=sflag, size = 0x4, scoped, tag = 'scoped memory for tpu_custom_call.1']
    #allocation9 [shape = 'u8[131072]{0}', space=vmem, size = 0x20000, scoped, tag = 'input window, operand 2, single buffered']
    #allocation10 [shape = 'u8[131072]{0}', space=vmem, size = 0x20000, scoped, tag = 'input window, operand 4, single buffered']
    #allocation11 [shape = 's32[1]{0}', space=sflag, size = 0x4, scoped, tag = 'scoped memory for tpu_custom_call.1']
    #allocation12 [shape = 'u8[131072]{0}', space=vmem, size = 0x20000, scoped, tag = 'input window, operand 5, single buffered']
    #allocation13 [shape = 'u8[16384]{0}', space=vmem, size = 0x4000, scoped, tag = 'output window, operand 0, single buffered']
    #allocation14 [shape = 'u8[8192]{0}', space=vmem, size = 0x2000, scoped, tag = 'output window, operand 1, single buffered']
    #allocation15 [shape = 's32[1]{0}', space=sflag, size = 0x4, scoped, tag = 'scoped memory for tpu_custom_call.1']
    #allocation16 [shape = 'u8[8192]{0}', space=vmem, size = 0x2000, scoped, tag = 'output window, operand 2, single buffered']
    %15 = vsyncpa [#allocation5], 0
    %16 = vsyncpa [#allocation8], 0
    %17 = vsyncpa [#allocation11], 0
    %18 = vsyncpa [#allocation6], 0
    %19 = vsyncpa [#allocation15], 0
    // Predicated region
    $region2: #{tpu_custom_call.1} parent=1 // pred_check
      _
    $region3: #{tpu_custom_call.1} parent=1 // pred_check_branch
      %21 = sbr.rel (0) target = $region5
    $region4: #{tpu_custom_call.1} parent=1 // pred_region
      %s23 = ssub.s32 512, 512
      %24 = vsyncadd [#allocation5], %s23
      %s25 = sshll.u32 [#allocation4], 4
      %s26 = int_to_ptr.vmem [resolvable:$true] %s25
      %31 = dma.hbm_to_vmem [thread:$0]  %s0, 512, %s26, [#allocation5], 64, 64, 4
    $region5: #{tpu_custom_call.1} parent=1 // pred_fallthru
      _
    // Predicated region
    $region6: #{tpu_custom_call.1} parent=1 // pred_check
      _
    $region7: #{tpu_custom_call.1} parent=1 // pred_check_branch
      %33 = sbr.rel (0) target = $region9
    $region8: #{tpu_custom_call.1} parent=1 // pred_region
      %s35 = ssub.s32 4096, 4096
      %36 = vsyncadd [#allocation8], %s35
      %s37 = sshll.u32 [#allocation7], 4
      %s38 = int_to_ptr.vmem [resolvable:$true] %s37
      %43 = dma.hbm_to_vmem [thread:$0]  %s1, 4096, %s38, [#allocation8], 256, 256, 16
    $region9: #{tpu_custom_call.1} parent=1 // pred_fallthru
      _
    // Predicated region
    $region10: #{tpu_custom_call.1} parent=1 // pred_check
      _
    $region11: #{tpu_custom_call.1} parent=1 // pred_check_branch
      %45 = sbr.rel (0) target = $region13
    $region12: #{tpu_custom_call.1} parent=1 // pred_region
      %s47 = ssub.s32 4096, 4096
      %48 = vsyncadd [#allocation8], %s47
      %s49 = sshll.u32 [#allocation9], 4
      %s50 = int_to_ptr.vmem [resolvable:$true] %s49
      %55 = dma.hbm_to_vmem [thread:$0]  %s2, 4096, %s50, [#allocation8], 256, 256, 16
    $region13: #{tpu_custom_call.1} parent=1 // pred_fallthru
      _
    // Predicated region
    $region14: #{tpu_custom_call.1} parent=1 // pred_check
      _
    $region15: #{tpu_custom_call.1} parent=1 // pred_check_branch
      %57 = sbr.rel (0) target = $region17
    $region16: #{tpu_custom_call.1} parent=1 // pred_region
      _
    $region17: #{tpu_custom_call.1} parent=1 // pred_fallthru
      _
    // Predicated region
    $region18: #{tpu_custom_call.1} parent=1 // pred_check
      _
    $region19: #{tpu_custom_call.1} parent=1 // pred_check_branch
      %59 = sbr.rel (0) target = $region21
    $region20: #{tpu_custom_call.1} parent=1 // pred_region
      %s61 = ssub.s32 4096, 4096
      %62 = vsyncadd [#allocation11], %s61
      %s63 = sshll.u32 [#allocation10], 4
      %s64 = int_to_ptr.vmem [resolvable:$true] %s63
      %69 = dma.hbm_to_vmem [thread:$0]  %s4, 4096, %s64, [#allocation11], 256, 256, 16
    $region21: #{tpu_custom_call.1} parent=1 // pred_fallthru
      _
    // Predicated region
    $region22: #{tpu_custom_call.1} parent=1 // pred_check
      _
    $region23: #{tpu_custom_call.1} parent=1 // pred_check_branch
      %71 = sbr.rel (0) target = $region25
    $region24: #{tpu_custom_call.1} parent=1 // pred_region
      %s73 = ssub.s32 4096, 4096
      %74 = vsyncadd [#allocation11], %s73
      %s75 = sshll.u32 [#allocation12], 4
      %s76 = int_to_ptr.vmem [resolvable:$true] %s75
      %81 = dma.hbm_to_vmem [thread:$0]  %s5, 4096, %s76, [#allocation11], 256, 256, 16
    $region25: #{tpu_custom_call.1} parent=1 // pred_fallthru
      _
    // Predicated region
    $region26: #{tpu_custom_call.1} parent=1 // pred_check
      _
    $region27: #{tpu_custom_call.1} parent=1 // pred_check_branch
      %83 = sbr.rel (0) target = $region29
    $region28: #{tpu_custom_call.1} parent=1 // pred_region
      _
    $region29: #{tpu_custom_call.1} parent=1 // pred_fallthru
      _
    // Predicated region
    $region30: #{tpu_custom_call.1} parent=1 // pred_check
      _
    $region31: #{tpu_custom_call.1} parent=1 // pred_check_branch
      %85 = sbr.rel (0) target = $region33
    $region32: #{tpu_custom_call.1} parent=1 // pred_region
      %86 = dma.done [#allocation5], 512
    $region33: #{tpu_custom_call.1} parent=1 // pred_fallthru
      _
    // Predicated region
    $region34: #{tpu_custom_call.1} parent=1 // pred_check
      _
    $region35: #{tpu_custom_call.1} parent=1 // pred_check_branch
      %88 = sbr.rel (0) target = $region37
    $region36: #{tpu_custom_call.1} parent=1 // pred_region
      %89 = dma.done [#allocation8], 4096
    $region37: #{tpu_custom_call.1} parent=1 // pred_fallthru
      _
    // Predicated region
    $region38: #{tpu_custom_call.1} parent=1 // pred_check
      _
    $region39: #{tpu_custom_call.1} parent=1 // pred_check_branch
      %91 = sbr.rel (0) target = $region41
    $region40: #{tpu_custom_call.1} parent=1 // pred_region
      %92 = dma.done [#allocation8], 4096
    $region41: #{tpu_custom_call.1} parent=1 // pred_fallthru
      _
    // Predicated region
    $region42: #{tpu_custom_call.1} parent=1 // pred_check
      _
    $region43: #{tpu_custom_call.1} parent=1 // pred_check_branch
      %94 = sbr.rel (0) target = $region45
    $region44: #{tpu_custom_call.1} parent=1 // pred_region
      %95 = dma.done [#allocation11], 4096
    $region45: #{tpu_custom_call.1} parent=1 // pred_fallthru
      _
    // Predicated region
    $region46: #{tpu_custom_call.1} parent=1 // pred_check
      _
    $region47: #{tpu_custom_call.1} parent=1 // pred_check_branch
      %97 = sbr.rel (0) target = $region49
    $region48: #{tpu_custom_call.1} parent=1 // pred_region
      %98 = dma.done [#allocation11], 4096
    $region49: #{tpu_custom_call.1} parent=1 // pred_fallthru
      _
    %p100 = scmp.eq.s32.totalorder 0, 0
    // Predicated region
    $region50: #{tpu_custom_call.1} parent=1 // pred_check
      %p101 = pneg %p100
    $region51: #{tpu_custom_call.1} parent=1 // pred_check_branch
      %103 = sbr.rel (%p101) target = $region53
    $region52: #{tpu_custom_call.1} parent=1 // pred_region
      %104 = vst [vmem:[#allocation14] sm:$0xff] 0.0
      %105 = vst [vmem:[#allocation14 + $0x8] sm:$0xff] 0.0
      %106 = vst [vmem:[#allocation16] sm:$0xff] 0.0
      %107 = vst [vmem:[#allocation16 + $0x8] sm:$0xff] 0.0
    $region53: #{tpu_custom_call.1} parent=1 // pred_fallthru
      _
    %v108 = vld [vmem:[#allocation4] sm:$0xf]
    %v109 = vld [vmem:[#allocation4 + $0x4] sm:$0xf]
    %v110 = vld [vmem:[#allocation4 + $0x8] sm:$0xf]
    %v111 = vld [vmem:[#allocation4 + $0xc] sm:$0xf]
    %v112 = vld [vmem:[#allocation4 + $0x10] sm:$0xf]
    %v113 = vld [vmem:[#allocation4 + $0x14] sm:$0xf]
    %v114 = vld [vmem:[#allocation4 + $0x18] sm:$0xf]
    %v115 = vld [vmem:[#allocation4 + $0x1c] sm:$0xf]
    %v116 = vld [vmem:[#allocation7] sm:$0xff]
    %v117 = vld [vmem:[#allocation7 + $0x8] sm:$0xff]
    %v118 = vld [vmem:[#allocation7 + $0x10] sm:$0xff]
    %v119 = vld [vmem:[#allocation7 + $0x18] sm:$0xff]
    %v120 = vld [vmem:[#allocation7 + $0x20] sm:$0xff]
    %v121 = vld [vmem:[#allocation7 + $0x28] sm:$0xff]
    %v122 = vld [vmem:[#allocation7 + $0x30] sm:$0xff]
    %v123 = vld [vmem:[#allocation7 + $0x38] sm:$0xff]
    %v124 = vld [vmem:[#allocation7 + $0x40] sm:$0xff]
    %v125 = vld [vmem:[#allocation7 + $0x48] sm:$0xff]
    %v126 = vld [vmem:[#allocation7 + $0x50] sm:$0xff]
    %v127 = vld [vmem:[#allocation7 + $0x58] sm:$0xff]
    %v128 = vld [vmem:[#allocation7 + $0x60] sm:$0xff]
    %v129 = vld [vmem:[#allocation7 + $0x68] sm:$0xff]
    %v130 = vld [vmem:[#allocation7 + $0x70] sm:$0xff]
    %v131 = vld [vmem:[#allocation7 + $0x78] sm:$0xff]
    %v132 = vld [vmem:[#allocation7 + $0x80] sm:$0xff]
    %v133 = vld [vmem:[#allocation7 + $0x88] sm:$0xff]
    %v134 = vld [vmem:[#allocation7 + $0x90] sm:$0xff]
    %v135 = vld [vmem:[#allocation7 + $0x98] sm:$0xff]
    %v136 = vld [vmem:[#allocation7 + $0xa0] sm:$0xff]
    %v137 = vld [vmem:[#allocation7 + $0xa8] sm:$0xff]
    %v138 = vld [vmem:[#allocation7 + $0xb0] sm:$0xff]
    %v139 = vld [vmem:[#allocation7 + $0xb8] sm:$0xff]
    %v140 = vld [vmem:[#allocation7 + $0xc0] sm:$0xff]
    %v141 = vld [vmem:[#allocation7 + $0xc8] sm:$0xff]
    %v142 = vld [vmem:[#allocation7 + $0xd0] sm:$0xff]
    %v143 = vld [vmem:[#allocation7 + $0xd8] sm:$0xff]
    %v144 = vld [vmem:[#allocation7 + $0xe0] sm:$0xff]
    %v145 = vld [vmem:[#allocation7 + $0xe8] sm:$0xff]
    %v146 = vld [vmem:[#allocation7 + $0xf0] sm:$0xff]
    %v147 = vld [vmem:[#allocation7 + $0xf8] sm:$0xff]
    %v148 = vld [vmem:[%s3] sm:$0xf]
    %v150 = vlaneseq
    %v151 = vshrl.u32 %v150, 7
    %v152 = vsub.s32 0, %v151
    %v153 = vrot.slane %v148, %v152
    %v154 = vlaneseq
    %v155 = vshrl.u32 %v154, 7
    %v156 = vsub.s32 1, %v155
    %v157 = vrot.slane %v148, %v156
    %v158 = vlaneseq
    %v159 = vshrl.u32 %v158, 7
    %v160 = vsub.s32 2, %v159
    %v161 = vrot.slane %v148, %v160
    %v162 = vlaneseq
    %v163 = vshrl.u32 %v162, 7
    %v164 = vsub.s32 3, %v163
    %v165 = vrot.slane %v148, %v164
    %v178 = vunpack.c.l.b16 %v108
    %v179 = vunpack.c.l.b16 %v109
    %v180 = vunpack.c.l.b16 %v110
    %v181 = vunpack.c.l.b16 %v111
    %v182 = vunpack.c.l.b16 %v112
    %v183 = vunpack.c.l.b16 %v113
    %v184 = vunpack.c.l.b16 %v114
    %v185 = vunpack.c.l.b16 %v115
    %v186 = vpack.c.b16 %v179, %v178
    %v187 = vpack.c.b16 %v181, %v180
    %v188 = vpack.c.b16 %v183, %v182
    %v189 = vpack.c.b16 %v185, %v184
    %v226 = vunpack.c.l.b16 %v116
    %v227 = vunpack.c.h.b16 %v116
    %v228 = vunpack.c.l.b16 %v117
    %v229 = vunpack.c.h.b16 %v117
    %v230 = vunpack.c.l.b16 %v118
    %v231 = vunpack.c.h.b16 %v118
    %v232 = vunpack.c.l.b16 %v119
    %v233 = vunpack.c.h.b16 %v119
    %v234 = vunpack.c.l.b16 %v120
    %v235 = vunpack.c.h.b16 %v120
    %v236 = vunpack.c.l.b16 %v121
    %v237 = vunpack.c.h.b16 %v121
    %v238 = vunpack.c.l.b16 %v122
    %v239 = vunpack.c.h.b16 %v122
    %v240 = vunpack.c.l.b16 %v123
    %v241 = vunpack.c.h.b16 %v123
    %v242 = vunpack.c.l.b16 %v124
    %v243 = vunpack.c.h.b16 %v124
    %v244 = vunpack.c.l.b16 %v125
    %v245 = vunpack.c.h.b16 %v125
    %v246 = vunpack.c.l.b16 %v126
    %v247 = vunpack.c.h.b16 %v126
    %v248 = vunpack.c.l.b16 %v127
    %v249 = vunpack.c.h.b16 %v127
    %v250 = vunpack.c.l.b16 %v128
    %v251 = vunpack.c.h.b16 %v128
    %v252 = vunpack.c.l.b16 %v129
    %v253 = vunpack.c.h.b16 %v129
    %v254 = vunpack.c.l.b16 %v130
    %v255 = vunpack.c.h.b16 %v130
    %v256 = vunpack.c.l.b16 %v131
    %v257 = vunpack.c.h.b16 %v131
    %v258 = vunpack.c.l.b16 %v132
    %v259 = vunpack.c.h.b16 %v132
    %v260 = vunpack.c.l.b16 %v133
    %v261 = vunpack.c.h.b16 %v133
    %v262 = vunpack.c.l.b16 %v134
    %v263 = vunpack.c.h.b16 %v134
    %v264 = vunpack.c.l.b16 %v135
    %v265 = vunpack.c.h.b16 %v135
    %v266 = vunpack.c.l.b16 %v136
    %v267 = vunpack.c.h.b16 %v136
    %v268 = vunpack.c.l.b16 %v137
    %v269 = vunpack.c.h.b16 %v137
    %v270 = vunpack.c.l.b16 %v138
    %v271 = vunpack.c.h.b16 %v138
    %v272 = vunpack.c.l.b16 %v139
    %v273 = vunpack.c.h.b16 %v139
    %v274 = vunpack.c.l.b16 %v140
    %v275 = vunpack.c.h.b16 %v140
    %v276 = vunpack.c.l.b16 %v141
    %v277 = vunpack.c.h.b16 %v141
    %v278 = vunpack.c.l.b16 %v142
    %v279 = vunpack.c.h.b16 %v142
    %v280 = vunpack.c.l.b16 %v143
    %v281 = vunpack.c.h.b16 %v143
    %v282 = vunpack.c.l.b16 %v144
    %v283 = vunpack.c.h.b16 %v144
    %v284 = vunpack.c.l.b16 %v145
    %v285 = vunpack.c.h.b16 %v145
    %v286 = vunpack.c.l.b16 %v146
    %v287 = vunpack.c.h.b16 %v146
    %v288 = vunpack.c.l.b16 %v147
    %v289 = vunpack.c.h.b16 %v147
    %v290 = vpack.c.b16 %v230, %v226
    %v291 = vpack.c.b16 %v231, %v227
    %v292 = vpack.c.b16 %v232, %v228
    %v293 = vpack.c.b16 %v233, %v229
    %v294 = vpack.c.b16 %v238, %v234
    %v295 = vpack.c.b16 %v239, %v235
    %v296 = vpack.c.b16 %v240, %v236
    %v297 = vpack.c.b16 %v241, %v237
    %v298 = vpack.c.b16 %v246, %v242
    %v299 = vpack.c.b16 %v247, %v243
    %v300 = vpack.c.b16 %v248, %v244
    %v301 = vpack.c.b16 %v249, %v245
    %v302 = vpack.c.b16 %v254, %v250
    %v303 = vpack.c.b16 %v255, %v251
    %v304 = vpack.c.b16 %v256, %v252
    %v305 = vpack.c.b16 %v257, %v253
    %v306 = vpack.c.b16 %v262, %v258
    %v307 = vpack.c.b16 %v263, %v259
    %v308 = vpack.c.b16 %v264, %v260
    %v309 = vpack.c.b16 %v265, %v261
    %v310 = vpack.c.b16 %v270, %v266
    %v311 = vpack.c.b16 %v271, %v267
    %v312 = vpack.c.b16 %v272, %v268
    %v313 = vpack.c.b16 %v273, %v269
    %v314 = vpack.c.b16 %v278, %v274
    %v315 = vpack.c.b16 %v279, %v275
    %v316 = vpack.c.b16 %v280, %v276
    %v317 = vpack.c.b16 %v281, %v277
    %v318 = vpack.c.b16 %v286, %v282
    %v319 = vpack.c.b16 %v287, %v283
    %v320 = vpack.c.b16 %v288, %v284
    %v321 = vpack.c.b16 %v289, %v285
    %354 = vmatprep.subr.bf16.mxu0 %v319
    %355 = vmatpush1.bf16.msra.mxu0 %v318
    %356 = vmatprep.subr.bf16.mxu0 %v315
    %357 = vmatpush1.bf16.msra.mxu0 %v314
    %358 = vmatprep.subr.bf16.mxu0 %v311
    %359 = vmatpush1.bf16.msra.mxu0 %v310
    %360 = vmatprep.subr.bf16.mxu0 %v307
    %361 = vmatpush1.bf16.msra.mxu0 %v306
    %362 = vmatprep.subr.bf16.mxu0 %v303
    %363 = vmatpush1.bf16.msra.mxu0 %v302
    %364 = vmatprep.subr.bf16.mxu0 %v299
    %365 = vmatpush1.bf16.msra.mxu0 %v298
    %366 = vmatprep.subr.bf16.mxu0 %v295
    %367 = vmatpush1.bf16.msra.mxu0 %v294
    %368 = vmatprep.subr.bf16.mxu0 %v291
    %369 = vmatpush1.bf16.msra.mxu0 %v290
    %370 = vmatprep.subr.bf16.mxu0 0
    %371 = vmatpush2.bf16.msra.mxu0 0
    %372 = vmatprep.subr.bf16.mxu0 0
    %373 = vmatpush2.bf16.msra.mxu0 0
    %374 = vmatprep.subr.bf16.mxu0 0
    %375 = vmatpush2.bf16.msra.mxu0 0
    %376 = vmatprep.subr.bf16.mxu0 0
    %377 = vmatpush2.bf16.msra.mxu0 0
    %378 = vmatprep.subr.bf16.mxu0 0
    %379 = vmatpush2.bf16.msra.mxu0 0
    %380 = vmatprep.subr.bf16.mxu0 0
    %381 = vmatpush2.bf16.msra.mxu0 0
    %382 = vmatprep.subr.bf16.mxu0 0
    %383 = vmatpush2.bf16.msra.mxu0 0
    %384 = vmatprep.subr.bf16.mxu0 0
    %385 = vmatpush2.bf16.msra.mxu0 0
    %386 = vmatprep.mubr.bf16.mxu0 0
    %387 = vmatmul.mubr.bf16.gmra.mxu0 %v186
    %v388 = vpop.f32.mrf.mxu0
    %v389 = vadd.f32 %v153, %v388
    %v390 = vpop.f32.mrf.mxu0
    %v391 = vadd.f32 %v157, %v390
    %v392 = vpop.f32.mrf.mxu0
    %v393 = vadd.f32 %v153, %v392
    %v394 = vpop.f32.mrf.mxu0
    %v395 = vadd.f32 %v157, %v394
    %396 = vmatprep.mubr.bf16.mxu0 0
    %397 = vmatmul.mubr.bf16.gmra.mxu0 %v187
    %v398 = vpop.f32.mrf.mxu0
    %v399 = vadd.f32 %v153, %v398
    %v400 = vpop.f32.mrf.mxu0
    %v401 = vadd.f32 %v157, %v400
    %v402 = vpop.f32.mrf.mxu0
    %v403 = vadd.f32 %v153, %v402
    %v404 = vpop.f32.mrf.mxu0
    %v405 = vadd.f32 %v157, %v404
    %406 = vmatprep.mubr.bf16.mxu0 0
    %407 = vmatmul.mubr.bf16.gmra.mxu0 %v188
    %v408 = vpop.f32.mrf.mxu0
    %v409 = vadd.f32 %v153, %v408
    %v410 = vpop.f32.mrf.mxu0
    %v411 = vadd.f32 %v157, %v410
    %v412 = vpop.f32.mrf.mxu0
    %v413 = vadd.f32 %v153, %v412
    %v414 = vpop.f32.mrf.mxu0
    %v415 = vadd.f32 %v157, %v414
    %416 = vmatprep.mubr.bf16.mxu0 0
    %417 = vmatmul.mubr.bf16.gmra.mxu0 %v189
    %v418 = vpop.f32.mrf.mxu0
    %v419 = vadd.f32 %v153, %v418
    %v420 = vpop.f32.mrf.mxu0
    %v421 = vadd.f32 %v157, %v420
    %v422 = vpop.f32.mrf.mxu0
    %v423 = vadd.f32 %v153, %v422
    %v424 = vpop.f32.mrf.mxu0
    %v425 = vadd.f32 %v157, %v424
    %426 = vdwg.mxu0
    %427 = vmatprep.subr.bf16.mxu0 %v321
    %428 = vmatpush1.bf16.msra.mxu0 %v320
    %429 = vmatprep.subr.bf16.mxu0 %v317
    %430 = vmatpush1.bf16.msra.mxu0 %v316
    %431 = vmatprep.subr.bf16.mxu0 %v313
    %432 = vmatpush1.bf16.msra.mxu0 %v312
    %433 = vmatprep.subr.bf16.mxu0 %v309
    %434 = vmatpush1.bf16.msra.mxu0 %v308
    %435 = vmatprep.subr.bf16.mxu0 %v305
    %436 = vmatpush1.bf16.msra.mxu0 %v304
    %437 = vmatprep.subr.bf16.mxu0 %v301
    %438 = vmatpush1.bf16.msra.mxu0 %v300
    %439 = vmatprep.subr.bf16.mxu0 %v297
    %440 = vmatpush1.bf16.msra.mxu0 %v296
    %441 = vmatprep.subr.bf16.mxu0 %v293
    %442 = vmatpush1.bf16.msra.mxu0 %v292
    %443 = vmatprep.subr.bf16.mxu0 0
    %444 = vmatpush2.bf16.msra.mxu0 0
    %445 = vmatprep.subr.bf16.mxu0 0
    %446 = vmatpush2.bf16.msra.mxu0 0
    %447 = vmatprep.subr.bf16.mxu0 0
    %448 = vmatpush2.bf16.msra.mxu0 0
    %449 = vmatprep.subr.bf16.mxu0 0
    %450 = vmatpush2.bf16.msra.mxu0 0
    %451 = vmatprep.subr.bf16.mxu0 0
    %452 = vmatpush2.bf16.msra.mxu0 0
    %453 = vmatprep.subr.bf16.mxu0 0
    %454 = vmatpush2.bf16.msra.mxu0 0
    %455 = vmatprep.subr.bf16.mxu0 0
    %456 = vmatpush2.bf16.msra.mxu0 0
    %457 = vmatprep.subr.bf16.mxu0 0
    %458 = vmatpush2.bf16.msra.mxu0 0
    %459 = vmatprep.mubr.bf16.mxu0 0
    %460 = vmatmul.mubr.bf16.gmra.mxu0 %v186
    %v461 = vpop.f32.mrf.mxu0
    %v462 = vadd.f32 %v161, %v461
    %v463 = vpop.f32.mrf.mxu0
    %v464 = vadd.f32 %v165, %v463
    %v465 = vpop.f32.mrf.mxu0
    %v466 = vadd.f32 %v161, %v465
    %v467 = vpop.f32.mrf.mxu0
    %v468 = vadd.f32 %v165, %v467
    %469 = vmatprep.mubr.bf16.mxu0 0
    %470 = vmatmul.mubr.bf16.gmra.mxu0 %v187
    %v471 = vpop.f32.mrf.mxu0
    %v472 = vadd.f32 %v161, %v471
    %v473 = vpop.f32.mrf.mxu0
    %v474 = vadd.f32 %v165, %v473
    %v475 = vpop.f32.mrf.mxu0
    %v476 = vadd.f32 %v161, %v475
    %v477 = vpop.f32.mrf.mxu0
    %v478 = vadd.f32 %v165, %v477
    %479 = vmatprep.mubr.bf16.mxu0 0
    %480 = vmatmul.mubr.bf16.gmra.mxu0 %v188
    %v481 = vpop.f32.mrf.mxu0
    %v482 = vadd.f32 %v161, %v481
    %v483 = vpop.f32.mrf.mxu0
    %v484 = vadd.f32 %v165, %v483
    %v485 = vpop.f32.mrf.mxu0
    %v486 = vadd.f32 %v161, %v485
    %v487 = vpop.f32.mrf.mxu0
    %v488 = vadd.f32 %v165, %v487
    %489 = vmatprep.mubr.bf16.mxu0 0
    %490 = vmatmul.mubr.bf16.gmra.mxu0 %v189
    %v491 = vpop.f32.mrf.mxu0
    %v492 = vadd.f32 %v161, %v491
    %v493 = vpop.f32.mrf.mxu0
    %v494 = vadd.f32 %v165, %v493
    %v495 = vpop.f32.mrf.mxu0
    %v496 = vadd.f32 %v161, %v495
    %v497 = vpop.f32.mrf.mxu0
    %v498 = vadd.f32 %v165, %v497
    %499 = vdwg.mxu0
    %500 = vst [vmem:[#allocation2] sm:$0xff] %v389
    %501 = vst [vmem:[#allocation2 + $0x8] sm:$0xff] %v391
    %502 = vst [vmem:[#allocation2 + $0x10] sm:$0xff] %v462
    %503 = vst [vmem:[#allocation2 + $0x18] sm:$0xff] %v464
    %504 = vst [vmem:[#allocation2 + $0x20] sm:$0xff] %v393
    %505 = vst [vmem:[#allocation2 + $0x28] sm:$0xff] %v395
    %506 = vst [vmem:[#allocation2 + $0x30] sm:$0xff] %v466
    %507 = vst [vmem:[#allocation2 + $0x38] sm:$0xff] %v468
    %508 = vst [vmem:[#allocation2 + $0x40] sm:$0xff] %v399
    %509 = vst [vmem:[#allocation2 + $0x48] sm:$0xff] %v401
    %510 = vst [vmem:[#allocation2 + $0x50] sm:$0xff] %v472
    %511 = vst [vmem:[#allocation2 + $0x58] sm:$0xff] %v474
    %512 = vst [vmem:[#allocation2 + $0x60] sm:$0xff] %v403
    %513 = vst [vmem:[#allocation2 + $0x68] sm:$0xff] %v405
    %514 = vst [vmem:[#allocation2 + $0x70] sm:$0xff] %v476
    %515 = vst [vmem:[#allocation2 + $0x78] sm:$0xff] %v478
    %516 = vst [vmem:[#allocation2 + $0x80] sm:$0xff] %v409
    %517 = vst [vmem:[#allocation2 + $0x88] sm:$0xff] %v411
    %518 = vst [vmem:[#allocation2 + $0x90] sm:$0xff] %v482
    %519 = vst [vmem:[#allocation2 + $0x98] sm:$0xff] %v484
    %520 = vst [vmem:[#allocation2 + $0xa0] sm:$0xff] %v413
    %521 = vst [vmem:[#allocation2 + $0xa8] sm:$0xff] %v415
    %522 = vst [vmem:[#allocation2 + $0xb0] sm:$0xff] %v486
    %523 = vst [vmem:[#allocation2 + $0xb8] sm:$0xff] %v488
    %524 = vst [vmem:[#allocation2 + $0xc0] sm:$0xff] %v419
    %525 = vst [vmem:[#allocation2 + $0xc8] sm:$0xff] %v421
    %526 = vst [vmem:[#allocation2 + $0xd0] sm:$0xff] %v492
    %527 = vst [vmem:[#allocation2 + $0xd8] sm:$0xff] %v494
    %528 = vst [vmem:[#allocation2 + $0xe0] sm:$0xff] %v423
    %529 = vst [vmem:[#allocation2 + $0xe8] sm:$0xff] %v425
    %530 = vst [vmem:[#allocation2 + $0xf0] sm:$0xff] %v496
    %531 = vst [vmem:[#allocation2 + $0xf8] sm:$0xff] %v498
    %v532 = vld [vmem:[#allocation9] sm:$0xff]
    %v533 = vld [vmem:[#allocation9 + $0x8] sm:$0xff]
    %v534 = vld [vmem:[#allocation9 + $0x10] sm:$0xff]
    %v535 = vld [vmem:[#allocation9 + $0x18] sm:$0xff]
    %v536 = vld [vmem:[#allocation9 + $0x20] sm:$0xff]
    %v537 = vld [vmem:[#allocation9 + $0x28] sm:$0xff]
    %v538 = vld [vmem:[#allocation9 + $0x30] sm:$0xff]
    %v539 = vld [vmem:[#allocation9 + $0x38] sm:$0xff]
    %v540 = vld [vmem:[#allocation9 + $0x40] sm:$0xff]
    %v541 = vld [vmem:[#allocation9 + $0x48] sm:$0xff]
    %v542 = vld [vmem:[#allocation9 + $0x50] sm:$0xff]
    %v543 = vld [vmem:[#allocation9 + $0x58] sm:$0xff]
    %v544 = vld [vmem:[#allocation9 + $0x60] sm:$0xff]
    %v545 = vld [vmem:[#allocation9 + $0x68] sm:$0xff]
    %v546 = vld [vmem:[#allocation9 + $0x70] sm:$0xff]
    %v547 = vld [vmem:[#allocation9 + $0x78] sm:$0xff]
    %v548 = vld [vmem:[#allocation9 + $0x80] sm:$0xff]
    %v549 = vld [vmem:[#allocation9 + $0x88] sm:$0xff]
    %v550 = vld [vmem:[#allocation9 + $0x90] sm:$0xff]
    %v551 = vld [vmem:[#allocation9 + $0x98] sm:$0xff]
    %v552 = vld [vmem:[#allocation9 + $0xa0] sm:$0xff]
    %v553 = vld [vmem:[#allocation9 + $0xa8] sm:$0xff]
    %v554 = vld [vmem:[#allocation9 + $0xb0] sm:$0xff]
    %v555 = vld [vmem:[#allocation9 + $0xb8] sm:$0xff]
    %v556 = vld [vmem:[#allocation9 + $0xc0] sm:$0xff]
    %v557 = vld [vmem:[#allocation9 + $0xc8] sm:$0xff]
    %v558 = vld [vmem:[#allocation9 + $0xd0] sm:$0xff]
    %v559 = vld [vmem:[#allocation9 + $0xd8] sm:$0xff]
    %v560 = vld [vmem:[#allocation9 + $0xe0] sm:$0xff]
    %v561 = vld [vmem:[#allocation9 + $0xe8] sm:$0xff]
    %v562 = vld [vmem:[#allocation9 + $0xf0] sm:$0xff]
    %v563 = vld [vmem:[#allocation9 + $0xf8] sm:$0xff]
    %v564 = vld [vmem:[#allocation14] sm:$0xff]
    %v565 = vld [vmem:[#allocation16] sm:$0xff]
    %v566 = vld [vmem:[#allocation2] sm:$0xff]
    %v567 = vld [vmem:[#allocation2 + $0x8] sm:$0xff]
    %v568 = vld [vmem:[#allocation2 + $0x10] sm:$0xff]
    %v569 = vld [vmem:[#allocation2 + $0x18] sm:$0xff]
    %v570 = vpack.c.bf16 %v564, %v564
    %v603 = vunpack.c.l.b16 %v532
    %v604 = vunpack.c.h.b16 %v532
    %v605 = vunpack.c.l.b16 %v533
    %v606 = vunpack.c.h.b16 %v533
    %v607 = vunpack.c.l.b16 %v534
    %v608 = vunpack.c.h.b16 %v534
    %v609 = vunpack.c.l.b16 %v535
    %v610 = vunpack.c.h.b16 %v535
    %v611 = vunpack.c.l.b16 %v536
    %v612 = vunpack.c.h.b16 %v536
    %v613 = vunpack.c.l.b16 %v537
    %v614 = vunpack.c.h.b16 %v537
    %v615 = vunpack.c.l.b16 %v538
    %v616 = vunpack.c.h.b16 %v538
    %v617 = vunpack.c.l.b16 %v539
    %v618 = vunpack.c.h.b16 %v539
    %v619 = vunpack.c.l.b16 %v540
    %v620 = vunpack.c.h.b16 %v540
    %v621 = vunpack.c.l.b16 %v541
    %v622 = vunpack.c.h.b16 %v541
    %v623 = vunpack.c.l.b16 %v542
    %v624 = vunpack.c.h.b16 %v542
    %v625 = vunpack.c.l.b16 %v543
    %v626 = vunpack.c.h.b16 %v543
    %v627 = vunpack.c.l.b16 %v544
    %v628 = vunpack.c.h.b16 %v544
    %v629 = vunpack.c.l.b16 %v545
    %v630 = vunpack.c.h.b16 %v545
    %v631 = vunpack.c.l.b16 %v546
    %v632 = vunpack.c.h.b16 %v546
    %v633 = vunpack.c.l.b16 %v547
    %v634 = vunpack.c.h.b16 %v547
    %v635 = vunpack.c.l.b16 %v548
    %v636 = vunpack.c.h.b16 %v548
    %v637 = vunpack.c.l.b16 %v549
    %v638 = vunpack.c.h.b16 %v549
    %v639 = vunpack.c.l.b16 %v550
    %v640 = vunpack.c.h.b16 %v550
    %v641 = vunpack.c.l.b16 %v551
    %v642 = vunpack.c.h.b16 %v551
    %v643 = vunpack.c.l.b16 %v552
    %v644 = vunpack.c.h.b16 %v552
    %v645 = vunpack.c.l.b16 %v553
    %v646 = vunpack.c.h.b16 %v553
    %v647 = vunpack.c.l.b16 %v554
    %v648 = vunpack.c.h.b16 %v554
    %v649 = vunpack.c.l.b16 %v555
    %v650 = vunpack.c.h.b16 %v555
    %v651 = vunpack.c.l.b16 %v556
    %v652 = vunpack.c.h.b16 %v556
    %v653 = vunpack.c.l.b16 %v557
    %v654 = vunpack.c.h.b16 %v557
    %v655 = vunpack.c.l.b16 %v558
    %v656 = vunpack.c.h.b16 %v558
    %v657 = vunpack.c.l.b16 %v559
    %v658 = vunpack.c.h.b16 %v559
    %v659 = vunpack.c.l.b16 %v560
    %v660 = vunpack.c.h.b16 %v560
    %v661 = vunpack.c.l.b16 %v561
    %v662 = vunpack.c.h.b16 %v561
    %v663 = vunpack.c.l.b16 %v562
    %v664 = vunpack.c.h.b16 %v562
    %v665 = vunpack.c.l.b16 %v563
    %v666 = vunpack.c.h.b16 %v563
    %v667 = vpack.c.b16 %v607, %v603
    %v668 = vpack.c.b16 %v608, %v604
    %v669 = vpack.c.b16 %v609, %v605
    %v670 = vpack.c.b16 %v610, %v606
    %v671 = vpack.c.b16 %v615, %v611
    %v672 = vpack.c.b16 %v616, %v612
    %v673 = vpack.c.b16 %v617, %v613
    %v674 = vpack.c.b16 %v618, %v614
    %v675 = vpack.c.b16 %v623, %v619
    %v676 = vpack.c.b16 %v624, %v620
    %v677 = vpack.c.b16 %v625, %v621
    %v678 = vpack.c.b16 %v626, %v622
    %v679 = vpack.c.b16 %v631, %v627
    %v680 = vpack.c.b16 %v632, %v628
    %v681 = vpack.c.b16 %v633, %v629
    %v682 = vpack.c.b16 %v634, %v630
    %v683 = vpack.c.b16 %v639, %v635
    %v684 = vpack.c.b16 %v640, %v636
    %v685 = vpack.c.b16 %v641, %v637
    %v686 = vpack.c.b16 %v642, %v638
    %v687 = vpack.c.b16 %v647, %v643
    %v688 = vpack.c.b16 %v648, %v644
    %v689 = vpack.c.b16 %v649, %v645
    %v690 = vpack.c.b16 %v650, %v646
    %v691 = vpack.c.b16 %v655, %v651
    %v692 = vpack.c.b16 %v656, %v652
    %v693 = vpack.c.b16 %v657, %v653
    %v694 = vpack.c.b16 %v658, %v654
    %v695 = vpack.c.b16 %v663, %v659
    %v696 = vpack.c.b16 %v664, %v660
    %v697 = vpack.c.b16 %v665, %v661
    %v698 = vpack.c.b16 %v666, %v662
    %731 = vmatprep.subr.bf16.mxu0 %v696
    %732 = vmatpush1.bf16.msra.mxu0 %v695
    %733 = vmatprep.subr.bf16.mxu0 %v692
    %734 = vmatpush1.bf16.msra.mxu0 %v691
    %735 = vmatprep.subr.bf16.mxu0 %v688
    %736 = vmatpush1.bf16.msra.mxu0 %v687
    %737 = vmatprep.subr.bf16.mxu0 %v684
    %738 = vmatpush1.bf16.msra.mxu0 %v683
    %739 = vmatprep.subr.bf16.mxu0 %v680
    %740 = vmatpush1.bf16.msra.mxu0 %v679
    %741 = vmatprep.subr.bf16.mxu0 %v676
    %742 = vmatpush1.bf16.msra.mxu0 %v675
    %743 = vmatprep.subr.bf16.mxu0 %v672
    %744 = vmatpush1.bf16.msra.mxu0 %v671
    %745 = vmatprep.subr.bf16.mxu0 %v668
    %746 = vmatpush1.bf16.msra.mxu0 %v667
    %747 = vmatprep.subr.bf16.mxu0 0
    %748 = vmatpush2.bf16.msra.mxu0 0
    %749 = vmatprep.subr.bf16.mxu0 0
    %750 = vmatpush2.bf16.msra.mxu0 0
    %751 = vmatprep.subr.bf16.mxu0 0
    %752 = vmatpush2.bf16.msra.mxu0 0
    %753 = vmatprep.subr.bf16.mxu0 0
    %754 = vmatpush2.bf16.msra.mxu0 0
    %755 = vmatprep.subr.bf16.mxu0 0
    %756 = vmatpush2.bf16.msra.mxu0 0
    %757 = vmatprep.subr.bf16.mxu0 0
    %758 = vmatpush2.bf16.msra.mxu0 0
    %759 = vmatprep.subr.bf16.mxu0 0
    %760 = vmatpush2.bf16.msra.mxu0 0
    %761 = vmatprep.subr.bf16.mxu0 0
    %762 = vmatpush2.bf16.msra.mxu0 0
    %763 = vmatprep.mubr.bf16.mxu0 0
    %764 = vmatmul.mubr.bf16.gmra.mxu0 %v570
    %v765 = vpop.f32.mrf.mxu0
    %v766 = vadd.f32 0.0, %v765
    %v767 = vpop.f32.mrf.mxu0
    %v768 = vadd.f32 0.0, %v767
    %v769 = vpop.f32.mrf.mxu0
    %v770 = vpop.f32.mrf.mxu0
    %771 = vdwg.mxu0
    %772 = vmatprep.subr.bf16.mxu0 %v698
    %773 = vmatpush1.bf16.msra.mxu0 %v697
    %774 = vmatprep.subr.bf16.mxu0 %v694
    %775 = vmatpush1.bf16.msra.mxu0 %v693
    %776 = vmatprep.subr.bf16.mxu0 %v690
    %777 = vmatpush1.bf16.msra.mxu0 %v689
    %778 = vmatprep.subr.bf16.mxu0 %v686
    %779 = vmatpush1.bf16.msra.mxu0 %v685
    %780 = vmatprep.subr.bf16.mxu0 %v682
    %781 = vmatpush1.bf16.msra.mxu0 %v681
    %782 = vmatprep.subr.bf16.mxu0 %v678
    %783 = vmatpush1.bf16.msra.mxu0 %v677
    %784 = vmatprep.subr.bf16.mxu0 %v674
    %785 = vmatpush1.bf16.msra.mxu0 %v673
    %786 = vmatprep.subr.bf16.mxu0 %v670
    %787 = vmatpush1.bf16.msra.mxu0 %v669
    %788 = vmatprep.subr.bf16.mxu0 0
    %789 = vmatpush2.bf16.msra.mxu0 0
    %790 = vmatprep.subr.bf16.mxu0 0
    %791 = vmatpush2.bf16.msra.mxu0 0
    %792 = vmatprep.subr.bf16.mxu0 0
    %793 = vmatpush2.bf16.msra.mxu0 0
    %794 = vmatprep.subr.bf16.mxu0 0
    %795 = vmatpush2.bf16.msra.mxu0 0
    %796 = vmatprep.subr.bf16.mxu0 0
    %797 = vmatpush2.bf16.msra.mxu0 0
    %798 = vmatprep.subr.bf16.mxu0 0
    %799 = vmatpush2.bf16.msra.mxu0 0
    %800 = vmatprep.subr.bf16.mxu0 0
    %801 = vmatpush2.bf16.msra.mxu0 0
    %802 = vmatprep.subr.bf16.mxu0 0
    %803 = vmatpush2.bf16.msra.mxu0 0
    %804 = vmatprep.mubr.bf16.mxu0 0
    %805 = vmatmul.mubr.bf16.gmra.mxu0 %v570
    %v806 = vpop.f32.mrf.mxu0
    %v807 = vadd.f32 0.0, %v806
    %v808 = vpop.f32.mrf.mxu0
    %v809 = vadd.f32 0.0, %v808
    %v810 = vpop.f32.mrf.mxu0
    %v811 = vpop.f32.mrf.mxu0
    %812 = vdwg.mxu0
    %v813 = vadd.f32 %v566, %v766
    %v814 = vadd.f32 %v567, %v768
    %v815 = vadd.f32 %v568, %v807
    %v816 = vadd.f32 %v569, %v809
    %v817 = vxor.u32 %v813, 2147483648
    %v818 = vmul.f32 %v817, 1.442695
    %v819 = vpow.pop %v818
    %v820 = vadd.f32 %v819, 1.0
    %v821 = vrcp.pop %v820
    %v822 = vmul.f32 1.0, %v821
    %v823 = vxor.u32 %v814, 2147483648
    %v824 = vmul.f32 %v823, 1.442695
    %v825 = vpow.pop %v824
    %v826 = vadd.f32 %v825, 1.0
    %v827 = vrcp.pop %v826
    %v828 = vmul.f32 1.0, %v827
    %v829 = vtanh.pop %v815
    %v830 = vxor.u32 %v816, 2147483648
    %v831 = vmul.f32 %v830, 1.442695
    %v832 = vpow.pop %v831
    %v833 = vadd.f32 %v832, 1.0
    %v834 = vrcp.pop %v833
    %v835 = vmul.f32 1.0, %v834
    %v836 = vmul.f32 %v828, %v565
    %v837 = vmul.f32 %v822, %v829
    %v838 = vadd.f32 %v836, %v837
    %v839 = vtanh.pop %v838
    %v840 = vmul.f32 %v835, %v839
    %v841 = vpack.c.bf16 %v840, %v840
    %842 = vst [vmem:[#allocation3] sm:$0xf] %v841
    %s843 = scalar_lea.vmem [#allocation2], 32
    %v844 = vld [vmem:[%s843] sm:$0xff]
    %v845 = vld [vmem:[%s843 + $0x8] sm:$0xff]
    %v846 = vld [vmem:[%s843 + $0x10] sm:$0xff]
    %v847 = vld [vmem:[%s843 + $0x18] sm:$0xff]
    %848 = vmatprep.subr.bf16.mxu0 %v696
    %849 = vmatpush1.bf16.msra.mxu0 %v695
    %850 = vmatprep.subr.bf16.mxu0 %v692
    %851 = vmatpush1.bf16.msra.mxu0 %v691
    %852 = vmatprep.subr.bf16.mxu0 %v688
    %853 = vmatpush1.bf16.msra.mxu0 %v687
    %854 = vmatprep.subr.bf16.mxu0 %v684
    %855 = vmatpush1.bf16.msra.mxu0 %v683
    %856 = vmatprep.subr.bf16.mxu0 %v680
    %857 = vmatpush1.bf16.msra.mxu0 %v679
    %858 = vmatprep.subr.bf16.mxu0 %v676
    %859 = vmatpush1.bf16.msra.mxu0 %v675
    %860 = vmatprep.subr.bf16.mxu0 %v672
    %861 = vmatpush1.bf16.msra.mxu0 %v671
    %862 = vmatprep.subr.bf16.mxu0 %v668
    %863 = vmatpush1.bf16.msra.mxu0 %v667
    %864 = vmatprep.subr.bf16.mxu0 0
    %865 = vmatpush2.bf16.msra.mxu0 0
    %866 = vmatprep.subr.bf16.mxu0 0
    %867 = vmatpush2.bf16.msra.mxu0 0
    %868 = vmatprep.subr.bf16.mxu0 0
    %869 = vmatpush2.bf16.msra.mxu0 0
    %870 = vmatprep.subr.bf16.mxu0 0
    %871 = vmatpush2.bf16.msra.mxu0 0
    %872 = vmatprep.subr.bf16.mxu0 0
    %873 = vmatpush2.bf16.msra.mxu0 0
    %874 = vmatprep.subr.bf16.mxu0 0
    %875 = vmatpush2.bf16.msra.mxu0 0
    %876 = vmatprep.subr.bf16.mxu0 0
    %877 = vmatpush2.bf16.msra.mxu0 0
    %878 = vmatprep.subr.bf16.mxu0 0
    %879 = vmatpush2.bf16.msra.mxu0 0
    %880 = vmatprep.mubr.bf16.mxu0 0
    %881 = vmatmul.mubr.bf16.gmra.mxu0 %v841
    %v882 = vpop.f32.mrf.mxu0
    %v883 = vadd.f32 0.0, %v882
    %v884 = vpop.f32.mrf.mxu0
    %v885 = vadd.f32 0.0, %v884
    %v886 = vpop.f32.mrf.mxu0
    %v887 = vpop.f32.mrf.mxu0
    %888 = vdwg.mxu0
    %889 = vmatprep.subr.bf16.mxu0 %v698
    %890 = vmatpush1.bf16.msra.mxu0 %v697
    %891 = vmatprep.subr.bf16.mxu0 %v694
    %892 = vmatpush1.bf16.msra.mxu0 %v693
    %893 = vmatprep.subr.bf16.mxu0 %v690
    %894 = vmatpush1.bf16.msra.mxu0 %v689
    %895 = vmatprep.subr.bf16.mxu0 %v686
    %896 = vmatpush1.bf16.msra.mxu0 %v685
    %897 = vmatprep.subr.bf16.mxu0 %v682
    %898 = vmatpush1.bf16.msra.mxu0 %v681
    %899 = vmatprep.subr.bf16.mxu0 %v678
    %900 = vmatpush1.bf16.msra.mxu0 %v677
    %901 = vmatprep.subr.bf16.mxu0 %v674
    %902 = vmatpush1.bf16.msra.mxu0 %v673
    %903 = vmatprep.subr.bf16.mxu0 %v670
    %904 = vmatpush1.bf16.msra.mxu0 %v669
    %905 = vmatprep.subr.bf16.mxu0 0
    %906 = vmatpush2.bf16.msra.mxu0 0
    %907 = vmatprep.subr.bf16.mxu0 0
    %908 = vmatpush2.bf16.msra.mxu0 0
    %909 = vmatprep.subr.bf16.mxu0 0
    %910 = vmatpush2.bf16.msra.mxu0 0
    %911 = vmatprep.subr.bf16.mxu0 0
    %912 = vmatpush2.bf16.msra.mxu0 0
    %913 = vmatprep.subr.bf16.mxu0 0
    %914 = vmatpush2.bf16.msra.mxu0 0
    %915 = vmatprep.subr.bf16.mxu0 0
    %916 = vmatpush2.bf16.msra.mxu0 0
    %917 = vmatprep.subr.bf16.mxu0 0
    %918 = vmatpush2.bf16.msra.mxu0 0
    %919 = vmatprep.subr.bf16.mxu0 0
    %920 = vmatpush2.bf16.msra.mxu0 0
    %921 = vmatprep.mubr.bf16.mxu0 0
    %922 = vmatmul.mubr.bf16.gmra.mxu0 %v841
    %v923 = vpop.f32.mrf.mxu0
    %v924 = vadd.f32 0.0, %v923
    %v925 = vpop.f32.mrf.mxu0
    %v926 = vadd.f32 0.0, %v925
    %v927 = vpop.f32.mrf.mxu0
    %v928 = vpop.f32.mrf.mxu0
    %929 = vdwg.mxu0
    %v930 = vadd.f32 %v844, %v883
    %v931 = vadd.f32 %v845, %v885
    %v932 = vadd.f32 %v846, %v924
    %v933 = vadd.f32 %v847, %v926
    %v934 = vxor.u32 %v930, 2147483648
    %v935 = vmul.f32 %v934, 1.442695
    %v936 = vpow.pop %v935
    %v937 = vadd.f32 %v936, 1.0
    %v938 = vrcp.pop %v937
    %v939 = vmul.f32 1.0, %v938
    %v940 = vxor.u32 %v931, 2147483648
    %v941 = vmul.f32 %v940, 1.442695
    %v942 = vpow.pop %v941
    %v943 = vadd.f32 %v942, 1.0
    %v944 = vrcp.pop %v943
    %v945 = vmul.f32 1.0, %v944
    %v946 = vtanh.pop %v932
    %v947 = vxor.u32 %v933, 2147483648
    %v948 = vmul.f32 %v947, 1.442695
    %v949 = vpow.pop %v948
    %v950 = vadd.f32 %v949, 1.0
    %v951 = vrcp.pop %v950
    %v952 = vmul.f32 1.0, %v951
    %v953 = vmul.f32 %v945, %v838
    %v954 = vmul.f32 %v939, %v946
    %v955 = vadd.f32 %v953, %v954
    %v956 = vtanh.pop %v955
    %v957 = vmul.f32 %v952, %v956
    %v958 = vpack.c.bf16 %v957, %v957
    %s959 = scalar_lea.vmem [#allocation3], 4
    %960 = vst [vmem:[%s959] sm:$0xf] %v958
    %s961 = scalar_lea.vmem [#allocation2], 64
    %v962 = vld [vmem:[%s961] sm:$0xff]
    %v963 = vld [vmem:[%s961 + $0x8] sm:$0xff]
    %v964 = vld [vmem:[%s961 + $0x10] sm:$0xff]
    %v965 = vld [vmem:[%s961 + $0x18] sm:$0xff]
    %966 = vmatprep.subr.bf16.mxu0 %v696
    %967 = vmatpush1.bf16.msra.mxu0 %v695
    %968 = vmatprep.subr.bf16.mxu0 %v692
    %969 = vmatpush1.bf16.msra.mxu0 %v691
    %970 = vmatprep.subr.bf16.mxu0 %v688
    %971 = vmatpush1.bf16.msra.mxu0 %v687
    %972 = vmatprep.subr.bf16.mxu0 %v684
    %973 = vmatpush1.bf16.msra.mxu0 %v683
    %974 = vmatprep.subr.bf16.mxu0 %v680
    %975 = vmatpush1.bf16.msra.mxu0 %v679
    %976 = vmatprep.subr.bf16.mxu0 %v676
    %977 = vmatpush1.bf16.msra.mxu0 %v675
    %978 = vmatprep.subr.bf16.mxu0 %v672
    %979 = vmatpush1.bf16.msra.mxu0 %v671
    %980 = vmatprep.subr.bf16.mxu0 %v668
    %981 = vmatpush1.bf16.msra.mxu0 %v667
    %982 = vmatprep.subr.bf16.mxu0 0
    %983 = vmatpush2.bf16.msra.mxu0 0
    %984 = vmatprep.subr.bf16.mxu0 0
    %985 = vmatpush2.bf16.msra.mxu0 0
    %986 = vmatprep.subr.bf16.mxu0 0
    %987 = vmatpush2.bf16.msra.mxu0 0
    %988 = vmatprep.subr.bf16.mxu0 0
    %989 = vmatpush2.bf16.msra.mxu0 0
    %990 = vmatprep.subr.bf16.mxu0 0
    %991 = vmatpush2.bf16.msra.mxu0 0
    %992 = vmatprep.subr.bf16.mxu0 0
    %993 = vmatpush2.bf16.msra.mxu0 0
    %994 = vmatprep.subr.bf16.mxu0 0
    %995 = vmatpush2.bf16.msra.mxu0 0
    %996 = vmatprep.subr.bf16.mxu0 0
    %997 = vmatpush2.bf16.msra.mxu0 0
    %998 = vmatprep.mubr.bf16.mxu0 0
    %999 = vmatmul.mubr.bf16.gmra.mxu0 %v958
    %v1000 = vpop.f32.mrf.mxu0
    %v1001 = vadd.f32 0.0, %v1000
    %v1002 = vpop.f32.mrf.mxu0
    %v1003 = vadd.f32 0.0, %v1002
    %v1004 = vpop.f32.mrf.mxu0
    %v1005 = vpop.f32.mrf.mxu0
    %1006 = vdwg.mxu0
    %1007 = vmatprep.subr.bf16.mxu0 %v698
    %1008 = vmatpush1.bf16.msra.mxu0 %v697
    %1009 = vmatprep.subr.bf16.mxu0 %v694
    %1010 = vmatpush1.bf16.msra.mxu0 %v693
    %1011 = vmatprep.subr.bf16.mxu0 %v690
    %1012 = vmatpush1.bf16.msra.mxu0 %v689
    %1013 = vmatprep.subr.bf16.mxu0 %v686
    %1014 = vmatpush1.bf16.msra.mxu0 %v685
    %1015 = vmatprep.subr.bf16.mxu0 %v682
    %1016 = vmatpush1.bf16.msra.mxu0 %v681
    %1017 = vmatprep.subr.bf16.mxu0 %v678
    %1018 = vmatpush1.bf16.msra.mxu0 %v677
    %1019 = vmatprep.subr.bf16.mxu0 %v674
    %1020 = vmatpush1.bf16.msra.mxu0 %v673
    %1021 = vmatprep.subr.bf16.mxu0 %v670
    %1022 = vmatpush1.bf16.msra.mxu0 %v669
    %1023 = vmatprep.subr.bf16.mxu0 0
    %1024 = vmatpush2.bf16.msra.mxu0 0
    %1025 = vmatprep.subr.bf16.mxu0 0
    %1026 = vmatpush2.bf16.msra.mxu0 0
    %1027 = vmatprep.subr.bf16.mxu0 0
    %1028 = vmatpush2.bf16.msra.mxu0 0
    %1029 = vmatprep.subr.bf16.mxu0 0
    %1030 = vmatpush2.bf16.msra.mxu0 0
    %1031 = vmatprep.subr.bf16.mxu0 0
    %1032 = vmatpush2.bf16.msra.mxu0 0
    %1033 = vmatprep.subr.bf16.mxu0 0
    %1034 = vmatpush2.bf16.msra.mxu0 0
    %1035 = vmatprep.subr.bf16.mxu0 0
    %1036 = vmatpush2.bf16.msra.mxu0 0
    %1037 = vmatprep.subr.bf16.mxu0 0
    %1038 = vmatpush2.bf16.msra.mxu0 0
    %1039 = vmatprep.mubr.bf16.mxu0 0
    %1040 = vmatmul.mubr.bf16.gmra.mxu0 %v958
    %v1041 = vpop.f32.mrf.mxu0
    %v1042 = vadd.f32 0.0, %v1041
    %v1043 = vpop.f32.mrf.mxu0
    %v1044 = vadd.f32 0.0, %v1043
    %v1045 = vpop.f32.mrf.mxu0
    %v1046 = vpop.f32.mrf.mxu0
    %1047 = vdwg.mxu0
    %v1048 = vadd.f32 %v962, %v1001
    %v1049 = vadd.f32 %v963, %v1003
    %v1050 = vadd.f32 %v964, %v1042
    %v1051 = vadd.f32 %v965, %v1044
    %v1052 = vxor.u32 %v1048, 2147483648
    %v1053 = vmul.f32 %v1052, 1.442695
    %v1054 = vpow.pop %v1053
    %v1055 = vadd.f32 %v1054, 1.0
    %v1056 = vrcp.pop %v1055
    %v1057 = vmul.f32 1.0, %v1056
    %v1058 = vxor.u32 %v1049, 2147483648
    %v1059 = vmul.f32 %v1058, 1.442695
    %v1060 = vpow.pop %v1059
    %v1061 = vadd.f32 %v1060, 1.0
    %v1062 = vrcp.pop %v1061
    %v1063 = vmul.f32 1.0, %v1062
    %v1064 = vtanh.pop %v1050
    %v1065 = vxor.u32 %v1051, 2147483648
    %v1066 = vmul.f32 %v1065, 1.442695
    %v1067 = vpow.pop %v1066
    %v1068 = vadd.f32 %v1067, 1.0
    %v1069 = vrcp.pop %v1068
    %v1070 = vmul.f32 1.0, %v1069
    %v1071 = vmul.f32 %v1063, %v955
    %v1072 = vmul.f32 %v1057, %v1064
    %v1073 = vadd.f32 %v1071, %v1072
    %v1074 = vtanh.pop %v1073
    %v1075 = vmul.f32 %v1070, %v1074
    %v1076 = vpack.c.bf16 %v1075, %v1075
    %s1077 = scalar_lea.vmem [#allocation3], 8
    %1078 = vst [vmem:[%s1077] sm:$0xf] %v1076
    %s1079 = scalar_lea.vmem [#allocation2], 96
    %v1080 = vld [vmem:[%s1079] sm:$0xff]
    %v1081 = vld [vmem:[%s1079 + $0x8] sm:$0xff]
    %v1082 = vld [vmem:[%s1079 + $0x10] sm:$0xff]
    %v1083 = vld [vmem:[%s1079 + $0x18] sm:$0xff]
    %1084 = vmatprep.subr.bf16.mxu0 %v696
    %1085 = vmatpush1.bf16.msra.mxu0 %v695
    %1086 = vmatprep.subr.bf16.mxu0 %v692
    %1087 = vmatpush1.bf16.msra.mxu0 %v691
    %1088 = vmatprep.subr.bf16.mxu0 %v688
    %1089 = vmatpush1.bf16.msra.mxu0 %v687
    %1090 = vmatprep.subr.bf16.mxu0 %v684
    %1091 = vmatpush1.bf16.msra.mxu0 %v683
    %1092 = vmatprep.subr.bf16.mxu0 %v680
    %1093 = vmatpush1.bf16.msra.mxu0 %v679
    %1094 = vmatprep.subr.bf16.mxu0 %v676
    %1095 = vmatpush1.bf16.msra.mxu0 %v675
    %1096 = vmatprep.subr.bf16.mxu0 %v672
    %1097 = vmatpush1.bf16.msra.mxu0 %v671
    %1098 = vmatprep.subr.bf16.mxu0 %v668
    %1099 = vmatpush1.bf16.msra.mxu0 %v667
    %1100 = vmatprep.subr.bf16.mxu0 0
    %1101 = vmatpush2.bf16.msra.mxu0 0
    %1102 = vmatprep.subr.bf16.mxu0 0
    %1103 = vmatpush2.bf16.msra.mxu0 0
    %1104 = vmatprep.subr.bf16.mxu0 0
    %1105 = vmatpush2.bf16.msra.mxu0 0
    %1106 = vmatprep.subr.bf16.mxu0 0
    %1107 = vmatpush2.bf16.msra.mxu0 0
    %1108 = vmatprep.subr.bf16.mxu0 0
    %1109 = vmatpush2.bf16.msra.mxu0 0
    %1110 = vmatprep.subr.bf16.mxu0 0
    %1111 = vmatpush2.bf16.msra.mxu0 0
    %1112 = vmatprep.subr.bf16.mxu0 0
    %1113 = vmatpush2.bf16.msra.mxu0 0
    %1114 = vmatprep.subr.bf16.mxu0 0
    %1115 = vmatpush2.bf16.msra.mxu0 0
    %1116 = vmatprep.mubr.bf16.mxu0 0
    %1117 = vmatmul.mubr.bf16.gmra.mxu0 %v1076
    %v1118 = vpop.f32.mrf.mxu0
    %v1119 = vadd.f32 0.0, %v1118
    %v1120 = vpop.f32.mrf.mxu0
    %v1121 = vadd.f32 0.0, %v1120
    %v1122 = vpop.f32.mrf.mxu0
    %v1123 = vpop.f32.mrf.mxu0
    %1124 = vdwg.mxu0
    %1125 = vmatprep.subr.bf16.mxu0 %v698
    %1126 = vmatpush1.bf16.msra.mxu0 %v697
    %1127 = vmatprep.subr.bf16.mxu0 %v694
    %1128 = vmatpush1.bf16.msra.mxu0 %v693
    %1129 = vmatprep.subr.bf16.mxu0 %v690
    %1130 = vmatpush1.bf16.msra.mxu0 %v689
    %1131 = vmatprep.subr.bf16.mxu0 %v686
    %1132 = vmatpush1.bf16.msra.mxu0 %v685
    %1133 = vmatprep.subr.bf16.mxu0 %v682
    %1134 = vmatpush1.bf16.msra.mxu0 %v681
    %1135 = vmatprep.subr.bf16.mxu0 %v678
    %1136 = vmatpush1.bf16.msra.mxu0 %v677
    %1137 = vmatprep.subr.bf16.mxu0 %v674
    %1138 = vmatpush1.bf16.msra.mxu0 %v673
    %1139 = vmatprep.subr.bf16.mxu0 %v670
    %1140 = vmatpush1.bf16.msra.mxu0 %v669
    %1141 = vmatprep.subr.bf16.mxu0 0
    %1142 = vmatpush2.bf16.msra.mxu0 0
    %1143 = vmatprep.subr.bf16.mxu0 0
    %1144 = vmatpush2.bf16.msra.mxu0 0
    %1145 = vmatprep.subr.bf16.mxu0 0
    %1146 = vmatpush2.bf16.msra.mxu0 0
    %1147 = vmatprep.subr.bf16.mxu0 0
    %1148 = vmatpush2.bf16.msra.mxu0 0
    %1149 = vmatprep.subr.bf16.mxu0 0
    %1150 = vmatpush2.bf16.msra.mxu0 0
    %1151 = vmatprep.subr.bf16.mxu0 0
    %1152 = vmatpush2.bf16.msra.mxu0 0
    %1153 = vmatprep.subr.bf16.mxu0 0
    %1154 = vmatpush2.bf16.msra.mxu0 0
    %1155 = vmatprep.subr.bf16.mxu0 0
    %1156 = vmatpush2.bf16.msra.mxu0 0
    %1157 = vmatprep.mubr.bf16.mxu0 0
    %1158 = vmatmul.mubr.bf16.gmra.mxu0 %v1076
    %v1159 = vpop.f32.mrf.mxu0
    %v1160 = vadd.f32 0.0, %v1159
    %v1161 = vpop.f32.mrf.mxu0
    %v1162 = vadd.f32 0.0, %v1161
    %v1163 = vpop.f32.mrf.mxu0
    %v1164 = vpop.f32.mrf.mxu0
    %1165 = vdwg.mxu0
    %v1166 = vadd.f32 %v1080, %v1119
    %v1167 = vadd.f32 %v1081, %v1121
    %v1168 = vadd.f32 %v1082, %v1160
    %v1169 = vadd.f32 %v1083, %v1162
    %v1170 = vxor.u32 %v1166, 2147483648
    %v1171 = vmul.f32 %v1170, 1.442695
    %v1172 = vpow.pop %v1171
    %v1173 = vadd.f32 %v1172, 1.0
    %v1174 = vrcp.pop %v1173
    %v1175 = vmul.f32 1.0, %v1174
    %v1176 = vxor.u32 %v1167, 2147483648
    %v1177 = vmul.f32 %v1176, 1.442695
    %v1178 = vpow.pop %v1177
    %v1179 = vadd.f32 %v1178, 1.0
    %v1180 = vrcp.pop %v1179
    %v1181 = vmul.f32 1.0, %v1180
    %v1182 = vtanh.pop %v1168
    %v1183 = vxor.u32 %v1169, 2147483648
    %v1184 = vmul.f32 %v1183, 1.442695
    %v1185 = vpow.pop %v1184
    %v1186 = vadd.f32 %v1185, 1.0
    %v1187 = vrcp.pop %v1186
    %v1188 = vmul.f32 1.0, %v1187
    %v1189 = vmul.f32 %v1181, %v1073
    %v1190 = vmul.f32 %v1175, %v1182
    %v1191 = vadd.f32 %v1189, %v1190
    %v1192 = vtanh.pop %v1191
    %v1193 = vmul.f32 %v1188, %v1192
    %v1194 = vpack.c.bf16 %v1193, %v1193
    %s1195 = scalar_lea.vmem [#allocation3], 12
    %1196 = vst [vmem:[%s1195] sm:$0xf] %v1194
    %s1197 = scalar_lea.vmem [#allocation2], 128
    %v1198 = vld [vmem:[%s1197] sm:$0xff]
    %v1199 = vld [vmem:[%s1197 + $0x8] sm:$0xff]
    %v1200 = vld [vmem:[%s1197 + $0x10] sm:$0xff]
    %v1201 = vld [vmem:[%s1197 + $0x18] sm:$0xff]
    %1202 = vmatprep.subr.bf16.mxu0 %v696
    %1203 = vmatpush1.bf16.msra.mxu0 %v695
    %1204 = vmatprep.subr.bf16.mxu0 %v692
    %1205 = vmatpush1.bf16.msra.mxu0 %v691
    %1206 = vmatprep.subr.bf16.mxu0 %v688
    %1207 = vmatpush1.bf16.msra.mxu0 %v687
    %1208 = vmatprep.subr.bf16.mxu0 %v684
    %1209 = vmatpush1.bf16.msra.mxu0 %v683
    %1210 = vmatprep.subr.bf16.mxu0 %v680
    %1211 = vmatpush1.bf16.msra.mxu0 %v679
    %1212 = vmatprep.subr.bf16.mxu0 %v676
    %1213 = vmatpush1.bf16.msra.mxu0 %v675
    %1214 = vmatprep.subr.bf16.mxu0 %v672
    %1215 = vmatpush1.bf16.msra.mxu0 %v671
    %1216 = vmatprep.subr.bf16.mxu0 %v668
    %1217 = vmatpush1.bf16.msra.mxu0 %v667
    %1218 = vmatprep.subr.bf16.mxu0 0
    %1219 = vmatpush2.bf16.msra.mxu0 0
    %1220 = vmatprep.subr.bf16.mxu0 0
    %1221 = vmatpush2.bf16.msra.mxu0 0
    %1222 = vmatprep.subr.bf16.mxu0 0
    %1223 = vmatpush2.bf16.msra.mxu0 0
    %1224 = vmatprep.subr.bf16.mxu0 0
    %1225 = vmatpush2.bf16.msra.mxu0 0
    %1226 = vmatprep.subr.bf16.mxu0 0
    %1227 = vmatpush2.bf16.msra.mxu0 0
    %1228 = vmatprep.subr.bf16.mxu0 0
    %1229 = vmatpush2.bf16.msra.mxu0 0
    %1230 = vmatprep.subr.bf16.mxu0 0
    %1231 = vmatpush2.bf16.msra.mxu0 0
    %1232 = vmatprep.subr.bf16.mxu0 0
    %1233 = vmatpush2.bf16.msra.mxu0 0
    %1234 = vmatprep.mubr.bf16.mxu0 0
    %1235 = vmatmul.mubr.bf16.gmra.mxu0 %v1194
    %v1236 = vpop.f32.mrf.mxu0
    %v1237 = vadd.f32 0.0, %v1236
    %v1238 = vpop.f32.mrf.mxu0
    %v1239 = vadd.f32 0.0, %v1238
    %v1240 = vpop.f32.mrf.mxu0
    %v1241 = vpop.f32.mrf.mxu0
    %1242 = vdwg.mxu0
    %1243 = vmatprep.subr.bf16.mxu0 %v698
    %1244 = vmatpush1.bf16.msra.mxu0 %v697
    %1245 = vmatprep.subr.bf16.mxu0 %v694
    %1246 = vmatpush1.bf16.msra.mxu0 %v693
    %1247 = vmatprep.subr.bf16.mxu0 %v690
    %1248 = vmatpush1.bf16.msra.mxu0 %v689
    %1249 = vmatprep.subr.bf16.mxu0 %v686
    %1250 = vmatpush1.bf16.msra.mxu0 %v685
    %1251 = vmatprep.subr.bf16.mxu0 %v682
    %1252 = vmatpush1.bf16.msra.mxu0 %v681
    %1253 = vmatprep.subr.bf16.mxu0 %v678
    %1254 = vmatpush1.bf16.msra.mxu0 %v677
    %1255 = vmatprep.subr.bf16.mxu0 %v674
    %1256 = vmatpush1.bf16.msra.mxu0 %v673
    %1257 = vmatprep.subr.bf16.mxu0 %v670
    %1258 = vmatpush1.bf16.msra.mxu0 %v669
    %1259 = vmatprep.subr.bf16.mxu0 0
    %1260 = vmatpush2.bf16.msra.mxu0 0
    %1261 = vmatprep.subr.bf16.mxu0 0
    %1262 = vmatpush2.bf16.msra.mxu0 0
    %1263 = vmatprep.subr.bf16.mxu0 0
    %1264 = vmatpush2.bf16.msra.mxu0 0
    %1265 = vmatprep.subr.bf16.mxu0 0
    %1266 = vmatpush2.bf16.msra.mxu0 0
    %1267 = vmatprep.subr.bf16.mxu0 0
    %1268 = vmatpush2.bf16.msra.mxu0 0
    %1269 = vmatprep.subr.bf16.mxu0 0
    %1270 = vmatpush2.bf16.msra.mxu0 0
    %1271 = vmatprep.subr.bf16.mxu0 0
    %1272 = vmatpush2.bf16.msra.mxu0 0
    %1273 = vmatprep.subr.bf16.mxu0 0
    %1274 = vmatpush2.bf16.msra.mxu0 0
    %1275 = vmatprep.mubr.bf16.mxu0 0
    %1276 = vmatmul.mubr.bf16.gmra.mxu0 %v1194
    %v1277 = vpop.f32.mrf.mxu0
    %v1278 = vadd.f32 0.0, %v1277
    %v1279 = vpop.f32.mrf.mxu0
    %v1280 = vadd.f32 0.0, %v1279
    %v1281 = vpop.f32.mrf.mxu0
    %v1282 = vpop.f32.mrf.mxu0
    %1283 = vdwg.mxu0
    %v1284 = vadd.f32 %v1198, %v1237
    %v1285 = vadd.f32 %v1199, %v1239
    %v1286 = vadd.f32 %v1200, %v1278
    %v1287 = vadd.f32 %v1201, %v1280
    %v1288 = vxor.u32 %v1284, 2147483648
    %v1289 = vmul.f32 %v1288, 1.442695
    %v1290 = vpow.pop %v1289
    %v1291 = vadd.f32 %v1290, 1.0
    %v1292 = vrcp.pop %v1291
    %v1293 = vmul.f32 1.0, %v1292
    %v1294 = vxor.u32 %v1285, 2147483648
    %v1295 = vmul.f32 %v1294, 1.442695
    %v1296 = vpow.pop %v1295
    %v1297 = vadd.f32 %v1296, 1.0
    %v1298 = vrcp.pop %v1297
    %v1299 = vmul.f32 1.0, %v1298
    %v1300 = vtanh.pop %v1286
    %v1301 = vxor.u32 %v1287, 2147483648
    %v1302 = vmul.f32 %v1301, 1.442695
    %v1303 = vpow.pop %v1302
    %v1304 = vadd.f32 %v1303, 1.0
    %v1305 = vrcp.pop %v1304
    %v1306 = vmul.f32 1.0, %v1305
    %v1307 = vmul.f32 %v1299, %v1191
    %v1308 = vmul.f32 %v1293, %v1300
    %v1309 = vadd.f32 %v1307, %v1308
    %v1310 = vtanh.pop %v1309
    %v1311 = vmul.f32 %v1306, %v1310
    %v1312 = vpack.c.bf16 %v1311, %v1311
    %s1313 = scalar_lea.vmem [#allocation3], 16
    %1314 = vst [vmem:[%s1313] sm:$0xf] %v1312
    %s1315 = scalar_lea.vmem [#allocation2], 160
    %v1316 = vld [vmem:[%s1315] sm:$0xff]
    %v1317 = vld [vmem:[%s1315 + $0x8] sm:$0xff]
    %v1318 = vld [vmem:[%s1315 + $0x10] sm:$0xff]
    %v1319 = vld [vmem:[%s1315 + $0x18] sm:$0xff]
    %1320 = vmatprep.subr.bf16.mxu0 %v696
    %1321 = vmatpush1.bf16.msra.mxu0 %v695
    %1322 = vmatprep.subr.bf16.mxu0 %v692
    %1323 = vmatpush1.bf16.msra.mxu0 %v691
    %1324 = vmatprep.subr.bf16.mxu0 %v688
    %1325 = vmatpush1.bf16.msra.mxu0 %v687
    %1326 = vmatprep.subr.bf16.mxu0 %v684
    %1327 = vmatpush1.bf16.msra.mxu0 %v683
    %1328 = vmatprep.subr.bf16.mxu0 %v680
    %1329 = vmatpush1.bf16.msra.mxu0 %v679
    %1330 = vmatprep.subr.bf16.mxu0 %v676
    %1331 = vmatpush1.bf16.msra.mxu0 %v675
    %1332 = vmatprep.subr.bf16.mxu0 %v672
    %1333 = vmatpush1.bf16.msra.mxu0 %v671
    %1334 = vmatprep.subr.bf16.mxu0 %v668
    %1335 = vmatpush1.bf16.msra.mxu0 %v667
    %1336 = vmatprep.subr.bf16.mxu0 0
    %1337 = vmatpush2.bf16.msra.mxu0 0
    %1338 = vmatprep.subr.bf16.mxu0 0
    %1339 = vmatpush2.bf16.msra.mxu0 0
    %1340 = vmatprep.subr.bf16.mxu0 0
    %1341 = vmatpush2.bf16.msra.mxu0 0
    %1342 = vmatprep.subr.bf16.mxu0 0
    %1343 = vmatpush2.bf16.msra.mxu0 0
    %1344 = vmatprep.subr.bf16.mxu0 0
    %1345 = vmatpush2.bf16.msra.mxu0 0
    %1346 = vmatprep.subr.bf16.mxu0 0
    %1347 = vmatpush2.bf16.msra.mxu0 0
    %1348 = vmatprep.subr.bf16.mxu0 0
    %1349 = vmatpush2.bf16.msra.mxu0 0
    %1350 = vmatprep.subr.bf16.mxu0 0
    %1351 = vmatpush2.bf16.msra.mxu0 0
    %1352 = vmatprep.mubr.bf16.mxu0 0
    %1353 = vmatmul.mubr.bf16.gmra.mxu0 %v1312
    %v1354 = vpop.f32.mrf.mxu0
    %v1355 = vadd.f32 0.0, %v1354
    %v1356 = vpop.f32.mrf.mxu0
    %v1357 = vadd.f32 0.0, %v1356
    %v1358 = vpop.f32.mrf.mxu0
    %v1359 = vpop.f32.mrf.mxu0
    %1360 = vdwg.mxu0
    %1361 = vmatprep.subr.bf16.mxu0 %v698
    %1362 = vmatpush1.bf16.msra.mxu0 %v697
    %1363 = vmatprep.subr.bf16.mxu0 %v694
    %1364 = vmatpush1.bf16.msra.mxu0 %v693
    %1365 = vmatprep.subr.bf16.mxu0 %v690
    %1366 = vmatpush1.bf16.msra.mxu0 %v689
    %1367 = vmatprep.subr.bf16.mxu0 %v686
    %1368 = vmatpush1.bf16.msra.mxu0 %v685
    %1369 = vmatprep.subr.bf16.mxu0 %v682
    %1370 = vmatpush1.bf16.msra.mxu0 %v681
    %1371 = vmatprep.subr.bf16.mxu0 %v678
    %1372 = vmatpush1.bf16.msra.mxu0 %v677
    %1373 = vmatprep.subr.bf16.mxu0 %v674
    %1374 = vmatpush1.bf16.msra.mxu0 %v673
    %1375 = vmatprep.subr.bf16.mxu0 %v670
    %1376 = vmatpush1.bf16.msra.mxu0 %v669
    %1377 = vmatprep.subr.bf16.mxu0 0
    %1378 = vmatpush2.bf16.msra.mxu0 0
    %1379 = vmatprep.subr.bf16.mxu0 0
    %1380 = vmatpush2.bf16.msra.mxu0 0
    %1381 = vmatprep.subr.bf16.mxu0 0
    %1382 = vmatpush2.bf16.msra.mxu0 0
    %1383 = vmatprep.subr.bf16.mxu0 0
    %1384 = vmatpush2.bf16.msra.mxu0 0
    %1385 = vmatprep.subr.bf16.mxu0 0
    %1386 = vmatpush2.bf16.msra.mxu0 0
    %1387 = vmatprep.subr.bf16.mxu0 0
    %1388 = vmatpush2.bf16.msra.mxu0 0
    %1389 = vmatprep.subr.bf16.mxu0 0
    %1390 = vmatpush2.bf16.msra.mxu0 0
    %1391 = vmatprep.subr.bf16.mxu0 0
    %1392 = vmatpush2.bf16.msra.mxu0 0
    %1393 = vmatprep.mubr.bf16.mxu0 0
    %1394 = vmatmul.mubr.bf16.gmra.mxu0 %v1312
    %v1395 = vpop.f32.mrf.mxu0
    %v1396 = vadd.f32 0.0, %v1395
    %v1397 = vpop.f32.mrf.mxu0
    %v1398 = vadd.f32 0.0, %v1397
    %v1399 = vpop.f32.mrf.mxu0
    %v1400 = vpop.f32.mrf.mxu0
    %1401 = vdwg.mxu0
    %v1402 = vadd.f32 %v1316, %v1355
    %v1403 = vadd.f32 %v1317, %v1357
    %v1404 = vadd.f32 %v1318, %v1396
    %v1405 = vadd.f32 %v1319, %v1398
    %v1406 = vxor.u32 %v1402, 2147483648
    %v1407 = vmul.f32 %v1406, 1.442695
    %v1408 = vpow.pop %v1407
    %v1409 = vadd.f32 %v1408, 1.0
    %v1410 = vrcp.pop %v1409
    %v1411 = vmul.f32 1.0, %v1410
    %v1412 = vxor.u32 %v1403, 2147483648
    %v1413 = vmul.f32 %v1412, 1.442695
    %v1414 = vpow.pop %v1413
    %v1415 = vadd.f32 %v1414, 1.0
    %v1416 = vrcp.pop %v1415
    %v1417 = vmul.f32 1.0, %v1416
    %v1418 = vtanh.pop %v1404
    %v1419 = vxor.u32 %v1405, 2147483648
    %v1420 = vmul.f32 %v1419, 1.442695
    %v1421 = vpow.pop %v1420
    %v1422 = vadd.f32 %v1421, 1.0
    %v1423 = vrcp.pop %v1422
    %v1424 = vmul.f32 1.0, %v1423
    %v1425 = vmul.f32 %v1417, %v1309
    %v1426 = vmul.f32 %v1411, %v1418
    %v1427 = vadd.f32 %v1425, %v1426
    %v1428 = vtanh.pop %v1427
    %v1429 = vmul.f32 %v1424, %v1428
    %v1430 = vpack.c.bf16 %v1429, %v1429
    %s1431 = scalar_lea.vmem [#allocation3], 20
    %1432 = vst [vmem:[%s1431] sm:$0xf] %v1430
    %s1433 = scalar_lea.vmem [#allocation2], 192
    %v1434 = vld [vmem:[%s1433] sm:$0xff]
    %v1435 = vld [vmem:[%s1433 + $0x8] sm:$0xff]
    %v1436 = vld [vmem:[%s1433 + $0x10] sm:$0xff]
    %v1437 = vld [vmem:[%s1433 + $0x18] sm:$0xff]
    %1438 = vmatprep.subr.bf16.mxu0 %v696
    %1439 = vmatpush1.bf16.msra.mxu0 %v695
    %1440 = vmatprep.subr.bf16.mxu0 %v692
    %1441 = vmatpush1.bf16.msra.mxu0 %v691
    %1442 = vmatprep.subr.bf16.mxu0 %v688
    %1443 = vmatpush1.bf16.msra.mxu0 %v687
    %1444 = vmatprep.subr.bf16.mxu0 %v684
    %1445 = vmatpush1.bf16.msra.mxu0 %v683
    %1446 = vmatprep.subr.bf16.mxu0 %v680
    %1447 = vmatpush1.bf16.msra.mxu0 %v679
    %1448 = vmatprep.subr.bf16.mxu0 %v676
    %1449 = vmatpush1.bf16.msra.mxu0 %v675
    %1450 = vmatprep.subr.bf16.mxu0 %v672
    %1451 = vmatpush1.bf16.msra.mxu0 %v671
    %1452 = vmatprep.subr.bf16.mxu0 %v668
    %1453 = vmatpush1.bf16.msra.mxu0 %v667
    %1454 = vmatprep.subr.bf16.mxu0 0
    %1455 = vmatpush2.bf16.msra.mxu0 0
    %1456 = vmatprep.subr.bf16.mxu0 0
    %1457 = vmatpush2.bf16.msra.mxu0 0
    %1458 = vmatprep.subr.bf16.mxu0 0
    %1459 = vmatpush2.bf16.msra.mxu0 0
    %1460 = vmatprep.subr.bf16.mxu0 0
    %1461 = vmatpush2.bf16.msra.mxu0 0
    %1462 = vmatprep.subr.bf16.mxu0 0
    %1463 = vmatpush2.bf16.msra.mxu0 0
    %1464 = vmatprep.subr.bf16.mxu0 0
    %1465 = vmatpush2.bf16.msra.mxu0 0
    %1466 = vmatprep.subr.bf16.mxu0 0
    %1467 = vmatpush2.bf16.msra.mxu0 0
    %1468 = vmatprep.subr.bf16.mxu0 0
    %1469 = vmatpush2.bf16.msra.mxu0 0
    %1470 = vmatprep.mubr.bf16.mxu0 0
    %1471 = vmatmul.mubr.bf16.gmra.mxu0 %v1430
    %v1472 = vpop.f32.mrf.mxu0
    %v1473 = vadd.f32 0.0, %v1472
    %v1474 = vpop.f32.mrf.mxu0
    %v1475 = vadd.f32 0.0, %v1474
    %v1476 = vpop.f32.mrf.mxu0
    %v1477 = vpop.f32.mrf.mxu0
    %1478 = vdwg.mxu0
    %1479 = vmatprep.subr.bf16.mxu0 %v698
    %1480 = vmatpush1.bf16.msra.mxu0 %v697
    %1481 = vmatprep.subr.bf16.mxu0 %v694
    %1482 = vmatpush1.bf16.msra.mxu0 %v693
    %1483 = vmatprep.subr.bf16.mxu0 %v690
    %1484 = vmatpush1.bf16.msra.mxu0 %v689
    %1485 = vmatprep.subr.bf16.mxu0 %v686
    %1486 = vmatpush1.bf16.msra.mxu0 %v685
    %1487 = vmatprep.subr.bf16.mxu0 %v682
    %1488 = vmatpush1.bf16.msra.mxu0 %v681
    %1489 = vmatprep.subr.bf16.mxu0 %v678
    %1490 = vmatpush1.bf16.msra.mxu0 %v677
    %1491 = vmatprep.subr.bf16.mxu0 %v674
    %1492 = vmatpush1.bf16.msra.mxu0 %v673
    %1493 = vmatprep.subr.bf16.mxu0 %v670
    %1494 = vmatpush1.bf16.msra.mxu0 %v669
    %1495 = vmatprep.subr.bf16.mxu0 0
    %1496 = vmatpush2.bf16.msra.mxu0 0
    %1497 = vmatprep.subr.bf16.mxu0 0
    %1498 = vmatpush2.bf16.msra.mxu0 0
    %1499 = vmatprep.subr.bf16.mxu0 0
    %1500 = vmatpush2.bf16.msra.mxu0 0
    %1501 = vmatprep.subr.bf16.mxu0 0
    %1502 = vmatpush2.bf16.msra.mxu0 0
    %1503 = vmatprep.subr.bf16.mxu0 0
    %1504 = vmatpush2.bf16.msra.mxu0 0
    %1505 = vmatprep.subr.bf16.mxu0 0
    %1506 = vmatpush2.bf16.msra.mxu0 0
    %1507 = vmatprep.subr.bf16.mxu0 0
    %1508 = vmatpush2.bf16.msra.mxu0 0
    %1509 = vmatprep.subr.bf16.mxu0 0
    %1510 = vmatpush2.bf16.msra.mxu0 0
    %1511 = vmatprep.mubr.bf16.mxu0 0
    %1512 = vmatmul.mubr.bf16.gmra.mxu0 %v1430
    %v1513 = vpop.f32.mrf.mxu0
    %v1514 = vadd.f32 0.0, %v1513
    %v1515 = vpop.f32.mrf.mxu0
    %v1516 = vadd.f32 0.0, %v1515
    %v1517 = vpop.f32.mrf.mxu0
    %v1518 = vpop.f32.mrf.mxu0
    %1519 = vdwg.mxu0
    %v1520 = vadd.f32 %v1434, %v1473
    %v1521 = vadd.f32 %v1435, %v1475
    %v1522 = vadd.f32 %v1436, %v1514
    %v1523 = vadd.f32 %v1437, %v1516
    %v1524 = vxor.u32 %v1520, 2147483648
    %v1525 = vmul.f32 %v1524, 1.442695
    %v1526 = vpow.pop %v1525
    %v1527 = vadd.f32 %v1526, 1.0
    %v1528 = vrcp.pop %v1527
    %v1529 = vmul.f32 1.0, %v1528
    %v1530 = vxor.u32 %v1521, 2147483648
    %v1531 = vmul.f32 %v1530, 1.442695
    %v1532 = vpow.pop %v1531
    %v1533 = vadd.f32 %v1532, 1.0
    %v1534 = vrcp.pop %v1533
    %v1535 = vmul.f32 1.0, %v1534
    %v1536 = vtanh.pop %v1522
    %v1537 = vxor.u32 %v1523, 2147483648
    %v1538 = vmul.f32 %v1537, 1.442695
    %v1539 = vpow.pop %v1538
    %v1540 = vadd.f32 %v1539, 1.0
    %v1541 = vrcp.pop %v1540
    %v1542 = vmul.f32 1.0, %v1541
    %v1543 = vmul.f32 %v1535, %v1427
    %v1544 = vmul.f32 %v1529, %v1536
    %v1545 = vadd.f32 %v1543, %v1544
    %v1546 = vtanh.pop %v1545
    %v1547 = vmul.f32 %v1542, %v1546
    %v1548 = vpack.c.bf16 %v1547, %v1547
    %s1549 = scalar_lea.vmem [#allocation3], 24
    %1550 = vst [vmem:[%s1549] sm:$0xf] %v1548
    %s1551 = scalar_lea.vmem [#allocation2], 224
    %v1552 = vld [vmem:[%s1551] sm:$0xff]
    %v1553 = vld [vmem:[%s1551 + $0x8] sm:$0xff]
    %v1554 = vld [vmem:[%s1551 + $0x10] sm:$0xff]
    %v1555 = vld [vmem:[%s1551 + $0x18] sm:$0xff]
    %1556 = vmatprep.subr.bf16.mxu0 %v696
    %1557 = vmatpush1.bf16.msra.mxu0 %v695
    %1558 = vmatprep.subr.bf16.mxu0 %v692
    %1559 = vmatpush1.bf16.msra.mxu0 %v691
    %1560 = vmatprep.subr.bf16.mxu0 %v688
    %1561 = vmatpush1.bf16.msra.mxu0 %v687
    %1562 = vmatprep.subr.bf16.mxu0 %v684
    %1563 = vmatpush1.bf16.msra.mxu0 %v683
    %1564 = vmatprep.subr.bf16.mxu0 %v680
    %1565 = vmatpush1.bf16.msra.mxu0 %v679
    %1566 = vmatprep.subr.bf16.mxu0 %v676
    %1567 = vmatpush1.bf16.msra.mxu0 %v675
    %1568 = vmatprep.subr.bf16.mxu0 %v672
    %1569 = vmatpush1.bf16.msra.mxu0 %v671
    %1570 = vmatprep.subr.bf16.mxu0 %v668
    %1571 = vmatpush1.bf16.msra.mxu0 %v667
    %1572 = vmatprep.subr.bf16.mxu0 0
    %1573 = vmatpush2.bf16.msra.mxu0 0
    %1574 = vmatprep.subr.bf16.mxu0 0
    %1575 = vmatpush2.bf16.msra.mxu0 0
    %1576 = vmatprep.subr.bf16.mxu0 0
    %1577 = vmatpush2.bf16.msra.mxu0 0
    %1578 = vmatprep.subr.bf16.mxu0 0
    %1579 = vmatpush2.bf16.msra.mxu0 0
    %1580 = vmatprep.subr.bf16.mxu0 0
    %1581 = vmatpush2.bf16.msra.mxu0 0
    %1582 = vmatprep.subr.bf16.mxu0 0
    %1583 = vmatpush2.bf16.msra.mxu0 0
    %1584 = vmatprep.subr.bf16.mxu0 0
    %1585 = vmatpush2.bf16.msra.mxu0 0
    %1586 = vmatprep.subr.bf16.mxu0 0
    %1587 = vmatpush2.bf16.msra.mxu0 0
    %1588 = vmatprep.mubr.bf16.mxu0 0
    %1589 = vmatmul.mubr.bf16.gmra.mxu0 %v1548
    %v1590 = vpop.f32.mrf.mxu0
    %v1591 = vadd.f32 0.0, %v1590
    %v1592 = vpop.f32.mrf.mxu0
    %v1593 = vadd.f32 0.0, %v1592
    %v1594 = vpop.f32.mrf.mxu0
    %v1595 = vpop.f32.mrf.mxu0
    %1596 = vdwg.mxu0
    %1597 = vmatprep.subr.bf16.mxu0 %v698
    %1598 = vmatpush1.bf16.msra.mxu0 %v697
    %1599 = vmatprep.subr.bf16.mxu0 %v694
    %1600 = vmatpush1.bf16.msra.mxu0 %v693
    %1601 = vmatprep.subr.bf16.mxu0 %v690
    %1602 = vmatpush1.bf16.msra.mxu0 %v689
    %1603 = vmatprep.subr.bf16.mxu0 %v686
    %1604 = vmatpush1.bf16.msra.mxu0 %v685
    %1605 = vmatprep.subr.bf16.mxu0 %v682
    %1606 = vmatpush1.bf16.msra.mxu0 %v681
    %1607 = vmatprep.subr.bf16.mxu0 %v678
    %1608 = vmatpush1.bf16.msra.mxu0 %v677
    %1609 = vmatprep.subr.bf16.mxu0 %v674
    %1610 = vmatpush1.bf16.msra.mxu0 %v673
    %1611 = vmatprep.subr.bf16.mxu0 %v670
    %1612 = vmatpush1.bf16.msra.mxu0 %v669
    %1613 = vmatprep.subr.bf16.mxu0 0
    %1614 = vmatpush2.bf16.msra.mxu0 0
    %1615 = vmatprep.subr.bf16.mxu0 0
    %1616 = vmatpush2.bf16.msra.mxu0 0
    %1617 = vmatprep.subr.bf16.mxu0 0
    %1618 = vmatpush2.bf16.msra.mxu0 0
    %1619 = vmatprep.subr.bf16.mxu0 0
    %1620 = vmatpush2.bf16.msra.mxu0 0
    %1621 = vmatprep.subr.bf16.mxu0 0
    %1622 = vmatpush2.bf16.msra.mxu0 0
    %1623 = vmatprep.subr.bf16.mxu0 0
    %1624 = vmatpush2.bf16.msra.mxu0 0
    %1625 = vmatprep.subr.bf16.mxu0 0
    %1626 = vmatpush2.bf16.msra.mxu0 0
    %1627 = vmatprep.subr.bf16.mxu0 0
    %1628 = vmatpush2.bf16.msra.mxu0 0
    %1629 = vmatprep.mubr.bf16.mxu0 0
    %1630 = vmatmul.mubr.bf16.gmra.mxu0 %v1548
    %v1631 = vpop.f32.mrf.mxu0
    %v1632 = vadd.f32 0.0, %v1631
    %v1633 = vpop.f32.mrf.mxu0
    %v1634 = vadd.f32 0.0, %v1633
    %v1635 = vpop.f32.mrf.mxu0
    %v1636 = vpop.f32.mrf.mxu0
    %1637 = vdwg.mxu0
    %v1638 = vadd.f32 %v1552, %v1591
    %v1639 = vadd.f32 %v1553, %v1593
    %v1640 = vadd.f32 %v1554, %v1632
    %v1641 = vadd.f32 %v1555, %v1634
    %v1642 = vxor.u32 %v1638, 2147483648
    %v1643 = vmul.f32 %v1642, 1.442695
    %v1644 = vpow.pop %v1643
    %v1645 = vadd.f32 %v1644, 1.0
    %v1646 = vrcp.pop %v1645
    %v1647 = vmul.f32 1.0, %v1646
    %v1648 = vxor.u32 %v1639, 2147483648
    %v1649 = vmul.f32 %v1648, 1.442695
    %v1650 = vpow.pop %v1649
    %v1651 = vadd.f32 %v1650, 1.0
    %v1652 = vrcp.pop %v1651
    %v1653 = vmul.f32 1.0, %v1652
    %v1654 = vtanh.pop %v1640
    %v1655 = vxor.u32 %v1641, 2147483648
    %v1656 = vmul.f32 %v1655, 1.442695
    %v1657 = vpow.pop %v1656
    %v1658 = vadd.f32 %v1657, 1.0
    %v1659 = vrcp.pop %v1658
    %v1660 = vmul.f32 1.0, %v1659
    %v1661 = vmul.f32 %v1653, %v1545
    %v1662 = vmul.f32 %v1647, %v1654
    %v1663 = vadd.f32 %v1661, %v1662
    %v1664 = vtanh.pop %v1663
    %v1665 = vmul.f32 %v1660, %v1664
    %v1666 = vpack.c.bf16 %v1665, %v1665
    %s1667 = scalar_lea.vmem [#allocation3], 28
    %1668 = vst [vmem:[%s1667] sm:$0xf] %v1666
    %1669 = vst [vmem:[#allocation14] sm:$0xff] %v1665
    %1670 = vst [vmem:[#allocation16] sm:$0xff] %v1663
    %v1671 = vld [vmem:[#allocation3] sm:$0xf]
    %v1672 = vld [vmem:[#allocation3 + $0x4] sm:$0xf]
    %v1673 = vld [vmem:[#allocation3 + $0x8] sm:$0xf]
    %v1674 = vld [vmem:[#allocation3 + $0xc] sm:$0xf]
    %v1675 = vld [vmem:[#allocation3 + $0x10] sm:$0xf]
    %v1676 = vld [vmem:[#allocation3 + $0x14] sm:$0xf]
    %v1677 = vld [vmem:[#allocation3 + $0x18] sm:$0xf]
    %v1678 = vld [vmem:[#allocation3 + $0x1c] sm:$0xf]
    %v1679 = vld [vmem:[#allocation10] sm:$0xff]
    %v1680 = vld [vmem:[#allocation10 + $0x8] sm:$0xff]
    %v1681 = vld [vmem:[#allocation10 + $0x10] sm:$0xff]
    %v1682 = vld [vmem:[#allocation10 + $0x18] sm:$0xff]
    %v1683 = vld [vmem:[#allocation10 + $0x20] sm:$0xff]
    %v1684 = vld [vmem:[#allocation10 + $0x28] sm:$0xff]
    %v1685 = vld [vmem:[#allocation10 + $0x30] sm:$0xff]
    %v1686 = vld [vmem:[#allocation10 + $0x38] sm:$0xff]
    %v1687 = vld [vmem:[#allocation10 + $0x40] sm:$0xff]
    %v1688 = vld [vmem:[#allocation10 + $0x48] sm:$0xff]
    %v1689 = vld [vmem:[#allocation10 + $0x50] sm:$0xff]
    %v1690 = vld [vmem:[#allocation10 + $0x58] sm:$0xff]
    %v1691 = vld [vmem:[#allocation10 + $0x60] sm:$0xff]
    %v1692 = vld [vmem:[#allocation10 + $0x68] sm:$0xff]
    %v1693 = vld [vmem:[#allocation10 + $0x70] sm:$0xff]
    %v1694 = vld [vmem:[#allocation10 + $0x78] sm:$0xff]
    %v1695 = vld [vmem:[#allocation10 + $0x80] sm:$0xff]
    %v1696 = vld [vmem:[#allocation10 + $0x88] sm:$0xff]
    %v1697 = vld [vmem:[#allocation10 + $0x90] sm:$0xff]
    %v1698 = vld [vmem:[#allocation10 + $0x98] sm:$0xff]
    %v1699 = vld [vmem:[#allocation10 + $0xa0] sm:$0xff]
    %v1700 = vld [vmem:[#allocation10 + $0xa8] sm:$0xff]
    %v1701 = vld [vmem:[#allocation10 + $0xb0] sm:$0xff]
    %v1702 = vld [vmem:[#allocation10 + $0xb8] sm:$0xff]
    %v1703 = vld [vmem:[#allocation10 + $0xc0] sm:$0xff]
    %v1704 = vld [vmem:[#allocation10 + $0xc8] sm:$0xff]
    %v1705 = vld [vmem:[#allocation10 + $0xd0] sm:$0xff]
    %v1706 = vld [vmem:[#allocation10 + $0xd8] sm:$0xff]
    %v1707 = vld [vmem:[#allocation10 + $0xe0] sm:$0xff]
    %v1708 = vld [vmem:[#allocation10 + $0xe8] sm:$0xff]
    %v1709 = vld [vmem:[#allocation10 + $0xf0] sm:$0xff]
    %v1710 = vld [vmem:[#allocation10 + $0xf8] sm:$0xff]
    %v1711 = vld [vmem:[%s6] sm:$0xf]
    %v1713 = vlaneseq
    %v1714 = vshrl.u32 %v1713, 7
    %v1715 = vsub.s32 0, %v1714
    %v1716 = vrot.slane %v1711, %v1715
    %v1717 = vlaneseq
    %v1718 = vshrl.u32 %v1717, 7
    %v1719 = vsub.s32 1, %v1718
    %v1720 = vrot.slane %v1711, %v1719
    %v1721 = vlaneseq
    %v1722 = vshrl.u32 %v1721, 7
    %v1723 = vsub.s32 2, %v1722
    %v1724 = vrot.slane %v1711, %v1723
    %v1725 = vlaneseq
    %v1726 = vshrl.u32 %v1725, 7
    %v1727 = vsub.s32 3, %v1726
    %v1728 = vrot.slane %v1711, %v1727
    %v1741 = vunpack.c.l.b16 %v1671
    %v1742 = vunpack.c.l.b16 %v1672
    %v1743 = vunpack.c.l.b16 %v1673
    %v1744 = vunpack.c.l.b16 %v1674
    %v1745 = vunpack.c.l.b16 %v1675
    %v1746 = vunpack.c.l.b16 %v1676
    %v1747 = vunpack.c.l.b16 %v1677
    %v1748 = vunpack.c.l.b16 %v1678
    %v1749 = vpack.c.b16 %v1742, %v1741
    %v1750 = vpack.c.b16 %v1744, %v1743
    %v1751 = vpack.c.b16 %v1746, %v1745
    %v1752 = vpack.c.b16 %v1748, %v1747
    %v1789 = vunpack.c.l.b16 %v1679
    %v1790 = vunpack.c.h.b16 %v1679
    %v1791 = vunpack.c.l.b16 %v1680
    %v1792 = vunpack.c.h.b16 %v1680
    %v1793 = vunpack.c.l.b16 %v1681
    %v1794 = vunpack.c.h.b16 %v1681
    %v1795 = vunpack.c.l.b16 %v1682
    %v1796 = vunpack.c.h.b16 %v1682
    %v1797 = vunpack.c.l.b16 %v1683
    %v1798 = vunpack.c.h.b16 %v1683
    %v1799 = vunpack.c.l.b16 %v1684
    %v1800 = vunpack.c.h.b16 %v1684
    %v1801 = vunpack.c.l.b16 %v1685
    %v1802 = vunpack.c.h.b16 %v1685
    %v1803 = vunpack.c.l.b16 %v1686
    %v1804 = vunpack.c.h.b16 %v1686
    %v1805 = vunpack.c.l.b16 %v1687
    %v1806 = vunpack.c.h.b16 %v1687
    %v1807 = vunpack.c.l.b16 %v1688
    %v1808 = vunpack.c.h.b16 %v1688
    %v1809 = vunpack.c.l.b16 %v1689
    %v1810 = vunpack.c.h.b16 %v1689
    %v1811 = vunpack.c.l.b16 %v1690
    %v1812 = vunpack.c.h.b16 %v1690
    %v1813 = vunpack.c.l.b16 %v1691
    %v1814 = vunpack.c.h.b16 %v1691
    %v1815 = vunpack.c.l.b16 %v1692
    %v1816 = vunpack.c.h.b16 %v1692
    %v1817 = vunpack.c.l.b16 %v1693
    %v1818 = vunpack.c.h.b16 %v1693
    %v1819 = vunpack.c.l.b16 %v1694
    %v1820 = vunpack.c.h.b16 %v1694
    %v1821 = vunpack.c.l.b16 %v1695
    %v1822 = vunpack.c.h.b16 %v1695
    %v1823 = vunpack.c.l.b16 %v1696
    %v1824 = vunpack.c.h.b16 %v1696
    %v1825 = vunpack.c.l.b16 %v1697
    %v1826 = vunpack.c.h.b16 %v1697
    %v1827 = vunpack.c.l.b16 %v1698
    %v1828 = vunpack.c.h.b16 %v1698
    %v1829 = vunpack.c.l.b16 %v1699
    %v1830 = vunpack.c.h.b16 %v1699
    %v1831 = vunpack.c.l.b16 %v1700
    %v1832 = vunpack.c.h.b16 %v1700
    %v1833 = vunpack.c.l.b16 %v1701
    %v1834 = vunpack.c.h.b16 %v1701
    %v1835 = vunpack.c.l.b16 %v1702
    %v1836 = vunpack.c.h.b16 %v1702
    %v1837 = vunpack.c.l.b16 %v1703
    %v1838 = vunpack.c.h.b16 %v1703
    %v1839 = vunpack.c.l.b16 %v1704
    %v1840 = vunpack.c.h.b16 %v1704
    %v1841 = vunpack.c.l.b16 %v1705
    %v1842 = vunpack.c.h.b16 %v1705
    %v1843 = vunpack.c.l.b16 %v1706
    %v1844 = vunpack.c.h.b16 %v1706
    %v1845 = vunpack.c.l.b16 %v1707
    %v1846 = vunpack.c.h.b16 %v1707
    %v1847 = vunpack.c.l.b16 %v1708
    %v1848 = vunpack.c.h.b16 %v1708
    %v1849 = vunpack.c.l.b16 %v1709
    %v1850 = vunpack.c.h.b16 %v1709
    %v1851 = vunpack.c.l.b16 %v1710
    %v1852 = vunpack.c.h.b16 %v1710
    %v1853 = vpack.c.b16 %v1793, %v1789
    %v1854 = vpack.c.b16 %v1794, %v1790
    %v1855 = vpack.c.b16 %v1795, %v1791
    %v1856 = vpack.c.b16 %v1796, %v1792
    %v1857 = vpack.c.b16 %v1801, %v1797
    %v1858 = vpack.c.b16 %v1802, %v1798
    %v1859 = vpack.c.b16 %v1803, %v1799
    %v1860 = vpack.c.b16 %v1804, %v1800
    %v1861 = vpack.c.b16 %v1809, %v1805
    %v1862 = vpack.c.b16 %v1810, %v1806
    %v1863 = vpack.c.b16 %v1811, %v1807
    %v1864 = vpack.c.b16 %v1812, %v1808
    %v1865 = vpack.c.b16 %v1817, %v1813
    %v1866 = vpack.c.b16 %v1818, %v1814
    %v1867 = vpack.c.b16 %v1819, %v1815
    %v1868 = vpack.c.b16 %v1820, %v1816
    %v1869 = vpack.c.b16 %v1825, %v1821
    %v1870 = vpack.c.b16 %v1826, %v1822
    %v1871 = vpack.c.b16 %v1827, %v1823
    %v1872 = vpack.c.b16 %v1828, %v1824
    %v1873 = vpack.c.b16 %v1833, %v1829
    %v1874 = vpack.c.b16 %v1834, %v1830
    %v1875 = vpack.c.b16 %v1835, %v1831
    %v1876 = vpack.c.b16 %v1836, %v1832
    %v1877 = vpack.c.b16 %v1841, %v1837
    %v1878 = vpack.c.b16 %v1842, %v1838
    %v1879 = vpack.c.b16 %v1843, %v1839
    %v1880 = vpack.c.b16 %v1844, %v1840
    %v1881 = vpack.c.b16 %v1849, %v1845
    %v1882 = vpack.c.b16 %v1850, %v1846
    %v1883 = vpack.c.b16 %v1851, %v1847
    %v1884 = vpack.c.b16 %v1852, %v1848
    %1917 = vmatprep.subr.bf16.mxu0 %v1882
    %1918 = vmatpush1.bf16.msra.mxu0 %v1881
    %1919 = vmatprep.subr.bf16.mxu0 %v1878
    %1920 = vmatpush1.bf16.msra.mxu0 %v1877
    %1921 = vmatprep.subr.bf16.mxu0 %v1874
    %1922 = vmatpush1.bf16.msra.mxu0 %v1873
    %1923 = vmatprep.subr.bf16.mxu0 %v1870
    %1924 = vmatpush1.bf16.msra.mxu0 %v1869
    %1925 = vmatprep.subr.bf16.mxu0 %v1866
    %1926 = vmatpush1.bf16.msra.mxu0 %v1865
    %1927 = vmatprep.subr.bf16.mxu0 %v1862
    %1928 = vmatpush1.bf16.msra.mxu0 %v1861
    %1929 = vmatprep.subr.bf16.mxu0 %v1858
    %1930 = vmatpush1.bf16.msra.mxu0 %v1857
    %1931 = vmatprep.subr.bf16.mxu0 %v1854
    %1932 = vmatpush1.bf16.msra.mxu0 %v1853
    %1933 = vmatprep.subr.bf16.mxu0 0
    %1934 = vmatpush2.bf16.msra.mxu0 0
    %1935 = vmatprep.subr.bf16.mxu0 0
    %1936 = vmatpush2.bf16.msra.mxu0 0
    %1937 = vmatprep.subr.bf16.mxu0 0
    %1938 = vmatpush2.bf16.msra.mxu0 0
    %1939 = vmatprep.subr.bf16.mxu0 0
    %1940 = vmatpush2.bf16.msra.mxu0 0
    %1941 = vmatprep.subr.bf16.mxu0 0
    %1942 = vmatpush2.bf16.msra.mxu0 0
    %1943 = vmatprep.subr.bf16.mxu0 0
    %1944 = vmatpush2.bf16.msra.mxu0 0
    %1945 = vmatprep.subr.bf16.mxu0 0
    %1946 = vmatpush2.bf16.msra.mxu0 0
    %1947 = vmatprep.subr.bf16.mxu0 0
    %1948 = vmatpush2.bf16.msra.mxu0 0
    %1949 = vmatprep.mubr.bf16.mxu0 0
    %1950 = vmatmul.mubr.bf16.gmra.mxu0 %v1749
    %v1951 = vpop.f32.mrf.mxu0
    %v1952 = vadd.f32 %v1716, %v1951
    %v1953 = vpop.f32.mrf.mxu0
    %v1954 = vadd.f32 %v1720, %v1953
    %v1955 = vpop.f32.mrf.mxu0
    %v1956 = vadd.f32 %v1716, %v1955
    %v1957 = vpop.f32.mrf.mxu0
    %v1958 = vadd.f32 %v1720, %v1957
    %1959 = vmatprep.mubr.bf16.mxu0 0
    %1960 = vmatmul.mubr.bf16.gmra.mxu0 %v1750
    %v1961 = vpop.f32.mrf.mxu0
    %v1962 = vadd.f32 %v1716, %v1961
    %v1963 = vpop.f32.mrf.mxu0
    %v1964 = vadd.f32 %v1720, %v1963
    %v1965 = vpop.f32.mrf.mxu0
    %v1966 = vadd.f32 %v1716, %v1965
    %v1967 = vpop.f32.mrf.mxu0
    %v1968 = vadd.f32 %v1720, %v1967
    %1969 = vmatprep.mubr.bf16.mxu0 0
    %1970 = vmatmul.mubr.bf16.gmra.mxu0 %v1751
    %v1971 = vpop.f32.mrf.mxu0
    %v1972 = vadd.f32 %v1716, %v1971
    %v1973 = vpop.f32.mrf.mxu0
    %v1974 = vadd.f32 %v1720, %v1973
    %v1975 = vpop.f32.mrf.mxu0
    %v1976 = vadd.f32 %v1716, %v1975
    %v1977 = vpop.f32.mrf.mxu0
    %v1978 = vadd.f32 %v1720, %v1977
    %1979 = vmatprep.mubr.bf16.mxu0 0
    %1980 = vmatmul.mubr.bf16.gmra.mxu0 %v1752
    %v1981 = vpop.f32.mrf.mxu0
    %v1982 = vadd.f32 %v1716, %v1981
    %v1983 = vpop.f32.mrf.mxu0
    %v1984 = vadd.f32 %v1720, %v1983
    %v1985 = vpop.f32.mrf.mxu0
    %v1986 = vadd.f32 %v1716, %v1985
    %v1987 = vpop.f32.mrf.mxu0
    %v1988 = vadd.f32 %v1720, %v1987
    %1989 = vdwg.mxu0
    %1990 = vmatprep.subr.bf16.mxu0 %v1884
    %1991 = vmatpush1.bf16.msra.mxu0 %v1883
    %1992 = vmatprep.subr.bf16.mxu0 %v1880
    %1993 = vmatpush1.bf16.msra.mxu0 %v1879
    %1994 = vmatprep.subr.bf16.mxu0 %v1876
    %1995 = vmatpush1.bf16.msra.mxu0 %v1875
    %1996 = vmatprep.subr.bf16.mxu0 %v1872
    %1997 = vmatpush1.bf16.msra.mxu0 %v1871
    %1998 = vmatprep.subr.bf16.mxu0 %v1868
    %1999 = vmatpush1.bf16.msra.mxu0 %v1867
    %2000 = vmatprep.subr.bf16.mxu0 %v1864
    %2001 = vmatpush1.bf16.msra.mxu0 %v1863
    %2002 = vmatprep.subr.bf16.mxu0 %v1860
    %2003 = vmatpush1.bf16.msra.mxu0 %v1859
    %2004 = vmatprep.subr.bf16.mxu0 %v1856
    %2005 = vmatpush1.bf16.msra.mxu0 %v1855
    %2006 = vmatprep.subr.bf16.mxu0 0
    %2007 = vmatpush2.bf16.msra.mxu0 0
    %2008 = vmatprep.subr.bf16.mxu0 0
    %2009 = vmatpush2.bf16.msra.mxu0 0
    %2010 = vmatprep.subr.bf16.mxu0 0
    %2011 = vmatpush2.bf16.msra.mxu0 0
    %2012 = vmatprep.subr.bf16.mxu0 0
    %2013 = vmatpush2.bf16.msra.mxu0 0
    %2014 = vmatprep.subr.bf16.mxu0 0
    %2015 = vmatpush2.bf16.msra.mxu0 0
    %2016 = vmatprep.subr.bf16.mxu0 0
    %2017 = vmatpush2.bf16.msra.mxu0 0
    %2018 = vmatprep.subr.bf16.mxu0 0
    %2019 = vmatpush2.bf16.msra.mxu0 0
    %2020 = vmatprep.subr.bf16.mxu0 0
    %2021 = vmatpush2.bf16.msra.mxu0 0
    %2022 = vmatprep.mubr.bf16.mxu0 0
    %2023 = vmatmul.mubr.bf16.gmra.mxu0 %v1749
    %v2024 = vpop.f32.mrf.mxu0
    %v2025 = vadd.f32 %v1724, %v2024
    %v2026 = vpop.f32.mrf.mxu0
    %v2027 = vadd.f32 %v1728, %v2026
    %v2028 = vpop.f32.mrf.mxu0
    %v2029 = vadd.f32 %v1724, %v2028
    %v2030 = vpop.f32.mrf.mxu0
    %v2031 = vadd.f32 %v1728, %v2030
    %2032 = vmatprep.mubr.bf16.mxu0 0
    %2033 = vmatmul.mubr.bf16.gmra.mxu0 %v1750
    %v2034 = vpop.f32.mrf.mxu0
    %v2035 = vadd.f32 %v1724, %v2034
    %v2036 = vpop.f32.mrf.mxu0
    %v2037 = vadd.f32 %v1728, %v2036
    %v2038 = vpop.f32.mrf.mxu0
    %v2039 = vadd.f32 %v1724, %v2038
    %v2040 = vpop.f32.mrf.mxu0
    %v2041 = vadd.f32 %v1728, %v2040
    %2042 = vmatprep.mubr.bf16.mxu0 0
    %2043 = vmatmul.mubr.bf16.gmra.mxu0 %v1751
    %v2044 = vpop.f32.mrf.mxu0
    %v2045 = vadd.f32 %v1724, %v2044
    %v2046 = vpop.f32.mrf.mxu0
    %v2047 = vadd.f32 %v1728, %v2046
    %v2048 = vpop.f32.mrf.mxu0
    %v2049 = vadd.f32 %v1724, %v2048
    %v2050 = vpop.f32.mrf.mxu0
    %v2051 = vadd.f32 %v1728, %v2050
    %2052 = vmatprep.mubr.bf16.mxu0 0
    %2053 = vmatmul.mubr.bf16.gmra.mxu0 %v1752
    %v2054 = vpop.f32.mrf.mxu0
    %v2055 = vadd.f32 %v1724, %v2054
    %v2056 = vpop.f32.mrf.mxu0
    %v2057 = vadd.f32 %v1728, %v2056
    %v2058 = vpop.f32.mrf.mxu0
    %v2059 = vadd.f32 %v1724, %v2058
    %v2060 = vpop.f32.mrf.mxu0
    %v2061 = vadd.f32 %v1728, %v2060
    %2062 = vdwg.mxu0
    %2063 = vst [vmem:[#allocation2] sm:$0xff] %v1952
    %2064 = vst [vmem:[#allocation2 + $0x8] sm:$0xff] %v1954
    %2065 = vst [vmem:[#allocation2 + $0x10] sm:$0xff] %v2025
    %2066 = vst [vmem:[#allocation2 + $0x18] sm:$0xff] %v2027
    %2067 = vst [vmem:[#allocation2 + $0x20] sm:$0xff] %v1956
    %2068 = vst [vmem:[#allocation2 + $0x28] sm:$0xff] %v1958
    %2069 = vst [vmem:[#allocation2 + $0x30] sm:$0xff] %v2029
    %2070 = vst [vmem:[#allocation2 + $0x38] sm:$0xff] %v2031
    %2071 = vst [vmem:[#allocation2 + $0x40] sm:$0xff] %v1962
    %2072 = vst [vmem:[#allocation2 + $0x48] sm:$0xff] %v1964
    %2073 = vst [vmem:[#allocation2 + $0x50] sm:$0xff] %v2035
    %2074 = vst [vmem:[#allocation2 + $0x58] sm:$0xff] %v2037
    %2075 = vst [vmem:[#allocation2 + $0x60] sm:$0xff] %v1966
    %2076 = vst [vmem:[#allocation2 + $0x68] sm:$0xff] %v1968
    %2077 = vst [vmem:[#allocation2 + $0x70] sm:$0xff] %v2039
    %2078 = vst [vmem:[#allocation2 + $0x78] sm:$0xff] %v2041
    %2079 = vst [vmem:[#allocation2 + $0x80] sm:$0xff] %v1972
    %2080 = vst [vmem:[#allocation2 + $0x88] sm:$0xff] %v1974
    %2081 = vst [vmem:[#allocation2 + $0x90] sm:$0xff] %v2045
    %2082 = vst [vmem:[#allocation2 + $0x98] sm:$0xff] %v2047
    %2083 = vst [vmem:[#allocation2 + $0xa0] sm:$0xff] %v1976
    %2084 = vst [vmem:[#allocation2 + $0xa8] sm:$0xff] %v1978
    %2085 = vst [vmem:[#allocation2 + $0xb0] sm:$0xff] %v2049
    %2086 = vst [vmem:[#allocation2 + $0xb8] sm:$0xff] %v2051
    %2087 = vst [vmem:[#allocation2 + $0xc0] sm:$0xff] %v1982
    %2088 = vst [vmem:[#allocation2 + $0xc8] sm:$0xff] %v1984
    %2089 = vst [vmem:[#allocation2 + $0xd0] sm:$0xff] %v2055
    %2090 = vst [vmem:[#allocation2 + $0xd8] sm:$0xff] %v2057
    %2091 = vst [vmem:[#allocation2 + $0xe0] sm:$0xff] %v1986
    %2092 = vst [vmem:[#allocation2 + $0xe8] sm:$0xff] %v1988
    %2093 = vst [vmem:[#allocation2 + $0xf0] sm:$0xff] %v2059
    %2094 = vst [vmem:[#allocation2 + $0xf8] sm:$0xff] %v2061
    %v2095 = vld [vmem:[#allocation12] sm:$0xff]
    %v2096 = vld [vmem:[#allocation12 + $0x8] sm:$0xff]
    %v2097 = vld [vmem:[#allocation12 + $0x10] sm:$0xff]
    %v2098 = vld [vmem:[#allocation12 + $0x18] sm:$0xff]
    %v2099 = vld [vmem:[#allocation12 + $0x20] sm:$0xff]
    %v2100 = vld [vmem:[#allocation12 + $0x28] sm:$0xff]
    %v2101 = vld [vmem:[#allocation12 + $0x30] sm:$0xff]
    %v2102 = vld [vmem:[#allocation12 + $0x38] sm:$0xff]
    %v2103 = vld [vmem:[#allocation12 + $0x40] sm:$0xff]
    %v2104 = vld [vmem:[#allocation12 + $0x48] sm:$0xff]
    %v2105 = vld [vmem:[#allocation12 + $0x50] sm:$0xff]
    %v2106 = vld [vmem:[#allocation12 + $0x58] sm:$0xff]
    %v2107 = vld [vmem:[#allocation12 + $0x60] sm:$0xff]
    %v2108 = vld [vmem:[#allocation12 + $0x68] sm:$0xff]
    %v2109 = vld [vmem:[#allocation12 + $0x70] sm:$0xff]
    %v2110 = vld [vmem:[#allocation12 + $0x78] sm:$0xff]
    %v2111 = vld [vmem:[#allocation12 + $0x80] sm:$0xff]
    %v2112 = vld [vmem:[#allocation12 + $0x88] sm:$0xff]
    %v2113 = vld [vmem:[#allocation12 + $0x90] sm:$0xff]
    %v2114 = vld [vmem:[#allocation12 + $0x98] sm:$0xff]
    %v2115 = vld [vmem:[#allocation12 + $0xa0] sm:$0xff]
    %v2116 = vld [vmem:[#allocation12 + $0xa8] sm:$0xff]
    %v2117 = vld [vmem:[#allocation12 + $0xb0] sm:$0xff]
    %v2118 = vld [vmem:[#allocation12 + $0xb8] sm:$0xff]
    %v2119 = vld [vmem:[#allocation12 + $0xc0] sm:$0xff]
    %v2120 = vld [vmem:[#allocation12 + $0xc8] sm:$0xff]
    %v2121 = vld [vmem:[#allocation12 + $0xd0] sm:$0xff]
    %v2122 = vld [vmem:[#allocation12 + $0xd8] sm:$0xff]
    %v2123 = vld [vmem:[#allocation12 + $0xe0] sm:$0xff]
    %v2124 = vld [vmem:[#allocation12 + $0xe8] sm:$0xff]
    %v2125 = vld [vmem:[#allocation12 + $0xf0] sm:$0xff]
    %v2126 = vld [vmem:[#allocation12 + $0xf8] sm:$0xff]
    %s2127 = scalar_lea.vmem [#allocation14], 8
    %v2128 = vld [vmem:[%s2127] sm:$0xff]
    %s2129 = scalar_lea.vmem [#allocation16], 8
    %v2130 = vld [vmem:[%s2129] sm:$0xff]
    %v2131 = vld [vmem:[#allocation2] sm:$0xff]
    %v2132 = vld [vmem:[#allocation2 + $0x8] sm:$0xff]
    %v2133 = vld [vmem:[#allocation2 + $0x10] sm:$0xff]
    %v2134 = vld [vmem:[#allocation2 + $0x18] sm:$0xff]
    %v2135 = vpack.c.bf16 %v2128, %v2128
    %v2168 = vunpack.c.l.b16 %v2095
    %v2169 = vunpack.c.h.b16 %v2095
    %v2170 = vunpack.c.l.b16 %v2096
    %v2171 = vunpack.c.h.b16 %v2096
    %v2172 = vunpack.c.l.b16 %v2097
    %v2173 = vunpack.c.h.b16 %v2097
    %v2174 = vunpack.c.l.b16 %v2098
    %v2175 = vunpack.c.h.b16 %v2098
    %v2176 = vunpack.c.l.b16 %v2099
    %v2177 = vunpack.c.h.b16 %v2099
    %v2178 = vunpack.c.l.b16 %v2100
    %v2179 = vunpack.c.h.b16 %v2100
    %v2180 = vunpack.c.l.b16 %v2101
    %v2181 = vunpack.c.h.b16 %v2101
    %v2182 = vunpack.c.l.b16 %v2102
    %v2183 = vunpack.c.h.b16 %v2102
    %v2184 = vunpack.c.l.b16 %v2103
    %v2185 = vunpack.c.h.b16 %v2103
    %v2186 = vunpack.c.l.b16 %v2104
    %v2187 = vunpack.c.h.b16 %v2104
    %v2188 = vunpack.c.l.b16 %v2105
    %v2189 = vunpack.c.h.b16 %v2105
    %v2190 = vunpack.c.l.b16 %v2106
    %v2191 = vunpack.c.h.b16 %v2106
    %v2192 = vunpack.c.l.b16 %v2107
    %v2193 = vunpack.c.h.b16 %v2107
    %v2194 = vunpack.c.l.b16 %v2108
    %v2195 = vunpack.c.h.b16 %v2108
    %v2196 = vunpack.c.l.b16 %v2109
    %v2197 = vunpack.c.h.b16 %v2109
    %v2198 = vunpack.c.l.b16 %v2110
    %v2199 = vunpack.c.h.b16 %v2110
    %v2200 = vunpack.c.l.b16 %v2111
    %v2201 = vunpack.c.h.b16 %v2111
    %v2202 = vunpack.c.l.b16 %v2112
    %v2203 = vunpack.c.h.b16 %v2112
    %v2204 = vunpack.c.l.b16 %v2113
    %v2205 = vunpack.c.h.b16 %v2113
    %v2206 = vunpack.c.l.b16 %v2114
    %v2207 = vunpack.c.h.b16 %v2114
    %v2208 = vunpack.c.l.b16 %v2115
    %v2209 = vunpack.c.h.b16 %v2115
    %v2210 = vunpack.c.l.b16 %v2116
    %v2211 = vunpack.c.h.b16 %v2116
    %v2212 = vunpack.c.l.b16 %v2117
    %v2213 = vunpack.c.h.b16 %v2117
    %v2214 = vunpack.c.l.b16 %v2118
    %v2215 = vunpack.c.h.b16 %v2118
    %v2216 = vunpack.c.l.b16 %v2119
    %v2217 = vunpack.c.h.b16 %v2119
    %v2218 = vunpack.c.l.b16 %v2120
    %v2219 = vunpack.c.h.b16 %v2120
    %v2220 = vunpack.c.l.b16 %v2121
    %v2221 = vunpack.c.h.b16 %v2121
    %v2222 = vunpack.c.l.b16 %v2122
    %v2223 = vunpack.c.h.b16 %v2122
    %v2224 = vunpack.c.l.b16 %v2123
    %v2225 = vunpack.c.h.b16 %v2123
    %v2226 = vunpack.c.l.b16 %v2124
    %v2227 = vunpack.c.h.b16 %v2124
    %v2228 = vunpack.c.l.b16 %v2125
    %v2229 = vunpack.c.h.b16 %v2125
    %v2230 = vunpack.c.l.b16 %v2126
    %v2231 = vunpack.c.h.b16 %v2126
    %v2232 = vpack.c.b16 %v2172, %v2168
    %v2233 = vpack.c.b16 %v2173, %v2169
    %v2234 = vpack.c.b16 %v2174, %v2170
    %v2235 = vpack.c.b16 %v2175, %v2171
    %v2236 = vpack.c.b16 %v2180, %v2176
    %v2237 = vpack.c.b16 %v2181, %v2177
    %v2238 = vpack.c.b16 %v2182, %v2178
    %v2239 = vpack.c.b16 %v2183, %v2179
    %v2240 = vpack.c.b16 %v2188, %v2184
    %v2241 = vpack.c.b16 %v2189, %v2185
    %v2242 = vpack.c.b16 %v2190, %v2186
    %v2243 = vpack.c.b16 %v2191, %v2187
    %v2244 = vpack.c.b16 %v2196, %v2192
    %v2245 = vpack.c.b16 %v2197, %v2193
    %v2246 = vpack.c.b16 %v2198, %v2194
    %v2247 = vpack.c.b16 %v2199, %v2195
    %v2248 = vpack.c.b16 %v2204, %v2200
    %v2249 = vpack.c.b16 %v2205, %v2201
    %v2250 = vpack.c.b16 %v2206, %v2202
    %v2251 = vpack.c.b16 %v2207, %v2203
    %v2252 = vpack.c.b16 %v2212, %v2208
    %v2253 = vpack.c.b16 %v2213, %v2209
    %v2254 = vpack.c.b16 %v2214, %v2210
    %v2255 = vpack.c.b16 %v2215, %v2211
    %v2256 = vpack.c.b16 %v2220, %v2216
    %v2257 = vpack.c.b16 %v2221, %v2217
    %v2258 = vpack.c.b16 %v2222, %v2218
    %v2259 = vpack.c.b16 %v2223, %v2219
    %v2260 = vpack.c.b16 %v2228, %v2224
    %v2261 = vpack.c.b16 %v2229, %v2225
    %v2262 = vpack.c.b16 %v2230, %v2226
    %v2263 = vpack.c.b16 %v2231, %v2227
    %2296 = vmatprep.subr.bf16.mxu0 %v2261
    %2297 = vmatpush1.bf16.msra.mxu0 %v2260
    %2298 = vmatprep.subr.bf16.mxu0 %v2257
    %2299 = vmatpush1.bf16.msra.mxu0 %v2256
    %2300 = vmatprep.subr.bf16.mxu0 %v2253
    %2301 = vmatpush1.bf16.msra.mxu0 %v2252
    %2302 = vmatprep.subr.bf16.mxu0 %v2249
    %2303 = vmatpush1.bf16.msra.mxu0 %v2248
    %2304 = vmatprep.subr.bf16.mxu0 %v2245
    %2305 = vmatpush1.bf16.msra.mxu0 %v2244
    %2306 = vmatprep.subr.bf16.mxu0 %v2241
    %2307 = vmatpush1.bf16.msra.mxu0 %v2240
    %2308 = vmatprep.subr.bf16.mxu0 %v2237
    %2309 = vmatpush1.bf16.msra.mxu0 %v2236
    %2310 = vmatprep.subr.bf16.mxu0 %v2233
    %2311 = vmatpush1.bf16.msra.mxu0 %v2232
    %2312 = vmatprep.subr.bf16.mxu0 0
    %2313 = vmatpush2.bf16.msra.mxu0 0
    %2314 = vmatprep.subr.bf16.mxu0 0
    %2315 = vmatpush2.bf16.msra.mxu0 0
    %2316 = vmatprep.subr.bf16.mxu0 0
    %2317 = vmatpush2.bf16.msra.mxu0 0
    %2318 = vmatprep.subr.bf16.mxu0 0
    %2319 = vmatpush2.bf16.msra.mxu0 0
    %2320 = vmatprep.subr.bf16.mxu0 0
    %2321 = vmatpush2.bf16.msra.mxu0 0
    %2322 = vmatprep.subr.bf16.mxu0 0
    %2323 = vmatpush2.bf16.msra.mxu0 0
    %2324 = vmatprep.subr.bf16.mxu0 0
    %2325 = vmatpush2.bf16.msra.mxu0 0
    %2326 = vmatprep.subr.bf16.mxu0 0
    %2327 = vmatpush2.bf16.msra.mxu0 0
    %2328 = vmatprep.mubr.bf16.mxu0 0
    %2329 = vmatmul.mubr.bf16.gmra.mxu0 %v2135
    %v2330 = vpop.f32.mrf.mxu0
    %v2331 = vadd.f32 0.0, %v2330
    %v2332 = vpop.f32.mrf.mxu0
    %v2333 = vadd.f32 0.0, %v2332
    %v2334 = vpop.f32.mrf.mxu0
    %v2335 = vpop.f32.mrf.mxu0
    %2336 = vdwg.mxu0
    %2337 = vmatprep.subr.bf16.mxu0 %v2263
    %2338 = vmatpush1.bf16.msra.mxu0 %v2262
    %2339 = vmatprep.subr.bf16.mxu0 %v2259
    %2340 = vmatpush1.bf16.msra.mxu0 %v2258
    %2341 = vmatprep.subr.bf16.mxu0 %v2255
    %2342 = vmatpush1.bf16.msra.mxu0 %v2254
    %2343 = vmatprep.subr.bf16.mxu0 %v2251
    %2344 = vmatpush1.bf16.msra.mxu0 %v2250
    %2345 = vmatprep.subr.bf16.mxu0 %v2247
    %2346 = vmatpush1.bf16.msra.mxu0 %v2246
    %2347 = vmatprep.subr.bf16.mxu0 %v2243
    %2348 = vmatpush1.bf16.msra.mxu0 %v2242
    %2349 = vmatprep.subr.bf16.mxu0 %v2239
    %2350 = vmatpush1.bf16.msra.mxu0 %v2238
    %2351 = vmatprep.subr.bf16.mxu0 %v2235
    %2352 = vmatpush1.bf16.msra.mxu0 %v2234
    %2353 = vmatprep.subr.bf16.mxu0 0
    %2354 = vmatpush2.bf16.msra.mxu0 0
    %2355 = vmatprep.subr.bf16.mxu0 0
    %2356 = vmatpush2.bf16.msra.mxu0 0
    %2357 = vmatprep.subr.bf16.mxu0 0
    %2358 = vmatpush2.bf16.msra.mxu0 0
    %2359 = vmatprep.subr.bf16.mxu0 0
    %2360 = vmatpush2.bf16.msra.mxu0 0
    %2361 = vmatprep.subr.bf16.mxu0 0
    %2362 = vmatpush2.bf16.msra.mxu0 0
    %2363 = vmatprep.subr.bf16.mxu0 0
    %2364 = vmatpush2.bf16.msra.mxu0 0
    %2365 = vmatprep.subr.bf16.mxu0 0
    %2366 = vmatpush2.bf16.msra.mxu0 0
    %2367 = vmatprep.subr.bf16.mxu0 0
    %2368 = vmatpush2.bf16.msra.mxu0 0
    %2369 = vmatprep.mubr.bf16.mxu0 0
    %2370 = vmatmul.mubr.bf16.gmra.mxu0 %v2135
    %v2371 = vpop.f32.mrf.mxu0
    %v2372 = vadd.f32 0.0, %v2371
    %v2373 = vpop.f32.mrf.mxu0
    %v2374 = vadd.f32 0.0, %v2373
    %v2375 = vpop.f32.mrf.mxu0
    %v2376 = vpop.f32.mrf.mxu0
    %2377 = vdwg.mxu0
    %v2378 = vadd.f32 %v2131, %v2331
    %v2379 = vadd.f32 %v2132, %v2333
    %v2380 = vadd.f32 %v2133, %v2372
    %v2381 = vadd.f32 %v2134, %v2374
    %v2382 = vxor.u32 %v2378, 2147483648
    %v2383 = vmul.f32 %v2382, 1.442695
    %v2384 = vpow.pop %v2383
    %v2385 = vadd.f32 %v2384, 1.0
    %v2386 = vrcp.pop %v2385
    %v2387 = vmul.f32 1.0, %v2386
    %v2388 = vxor.u32 %v2379, 2147483648
    %v2389 = vmul.f32 %v2388, 1.442695
    %v2390 = vpow.pop %v2389
    %v2391 = vadd.f32 %v2390, 1.0
    %v2392 = vrcp.pop %v2391
    %v2393 = vmul.f32 1.0, %v2392
    %v2394 = vtanh.pop %v2380
    %v2395 = vxor.u32 %v2381, 2147483648
    %v2396 = vmul.f32 %v2395, 1.442695
    %v2397 = vpow.pop %v2396
    %v2398 = vadd.f32 %v2397, 1.0
    %v2399 = vrcp.pop %v2398
    %v2400 = vmul.f32 1.0, %v2399
    %v2401 = vmul.f32 %v2393, %v2130
    %v2402 = vmul.f32 %v2387, %v2394
    %v2403 = vadd.f32 %v2401, %v2402
    %v2404 = vtanh.pop %v2403
    %v2405 = vmul.f32 %v2400, %v2404
    %v2406 = vpack.c.bf16 %v2405, %v2405
    %2407 = vst [vmem:[#allocation13] sm:$0xf] %v2406
    %v2408 = vld [vmem:[%s843] sm:$0xff]
    %v2409 = vld [vmem:[%s843 + $0x8] sm:$0xff]
    %v2410 = vld [vmem:[%s843 + $0x10] sm:$0xff]
    %v2411 = vld [vmem:[%s843 + $0x18] sm:$0xff]
    %2412 = vmatprep.subr.bf16.mxu0 %v2261
    %2413 = vmatpush1.bf16.msra.mxu0 %v2260
    %2414 = vmatprep.subr.bf16.mxu0 %v2257
    %2415 = vmatpush1.bf16.msra.mxu0 %v2256
    %2416 = vmatprep.subr.bf16.mxu0 %v2253
    %2417 = vmatpush1.bf16.msra.mxu0 %v2252
    %2418 = vmatprep.subr.bf16.mxu0 %v2249
    %2419 = vmatpush1.bf16.msra.mxu0 %v2248
    %2420 = vmatprep.subr.bf16.mxu0 %v2245
    %2421 = vmatpush1.bf16.msra.mxu0 %v2244
    %2422 = vmatprep.subr.bf16.mxu0 %v2241
    %2423 = vmatpush1.bf16.msra.mxu0 %v2240
    %2424 = vmatprep.subr.bf16.mxu0 %v2237
    %2425 = vmatpush1.bf16.msra.mxu0 %v2236
    %2426 = vmatprep.subr.bf16.mxu0 %v2233
    %2427 = vmatpush1.bf16.msra.mxu0 %v2232
    %2428 = vmatprep.subr.bf16.mxu0 0
    %2429 = vmatpush2.bf16.msra.mxu0 0
    %2430 = vmatprep.subr.bf16.mxu0 0
    %2431 = vmatpush2.bf16.msra.mxu0 0
    %2432 = vmatprep.subr.bf16.mxu0 0
    %2433 = vmatpush2.bf16.msra.mxu0 0
    %2434 = vmatprep.subr.bf16.mxu0 0
    %2435 = vmatpush2.bf16.msra.mxu0 0
    %2436 = vmatprep.subr.bf16.mxu0 0
    %2437 = vmatpush2.bf16.msra.mxu0 0
    %2438 = vmatprep.subr.bf16.mxu0 0
    %2439 = vmatpush2.bf16.msra.mxu0 0
    %2440 = vmatprep.subr.bf16.mxu0 0
    %2441 = vmatpush2.bf16.msra.mxu0 0
    %2442 = vmatprep.subr.bf16.mxu0 0
    %2443 = vmatpush2.bf16.msra.mxu0 0
    %2444 = vmatprep.mubr.bf16.mxu0 0
    %2445 = vmatmul.mubr.bf16.gmra.mxu0 %v2406
    %v2446 = vpop.f32.mrf.mxu0
    %v2447 = vadd.f32 0.0, %v2446
    %v2448 = vpop.f32.mrf.mxu0
    %v2449 = vadd.f32 0.0, %v2448
    %v2450 = vpop.f32.mrf.mxu0
    %v2451 = vpop.f32.mrf.mxu0
    %2452 = vdwg.mxu0
    %2453 = vmatprep.subr.bf16.mxu0 %v2263
    %2454 = vmatpush1.bf16.msra.mxu0 %v2262
    %2455 = vmatprep.subr.bf16.mxu0 %v2259
    %2456 = vmatpush1.bf16.msra.mxu0 %v2258
    %2457 = vmatprep.subr.bf16.mxu0 %v2255
    %2458 = vmatpush1.bf16.msra.mxu0 %v2254
    %2459 = vmatprep.subr.bf16.mxu0 %v2251
    %2460 = vmatpush1.bf16.msra.mxu0 %v2250
    %2461 = vmatprep.subr.bf16.mxu0 %v2247
    %2462 = vmatpush1.bf16.msra.mxu0 %v2246
    %2463 = vmatprep.subr.bf16.mxu0 %v2243
    %2464 = vmatpush1.bf16.msra.mxu0 %v2242
    %2465 = vmatprep.subr.bf16.mxu0 %v2239
    %2466 = vmatpush1.bf16.msra.mxu0 %v2238
    %2467 = vmatprep.subr.bf16.mxu0 %v2235
    %2468 = vmatpush1.bf16.msra.mxu0 %v2234
    %2469 = vmatprep.subr.bf16.mxu0 0
    %2470 = vmatpush2.bf16.msra.mxu0 0
    %2471 = vmatprep.subr.bf16.mxu0 0
    %2472 = vmatpush2.bf16.msra.mxu0 0
    %2473 = vmatprep.subr.bf16.mxu0 0
    %2474 = vmatpush2.bf16.msra.mxu0 0
    %2475 = vmatprep.subr.bf16.mxu0 0
    %2476 = vmatpush2.bf16.msra.mxu0 0
    %2477 = vmatprep.subr.bf16.mxu0 0
    %2478 = vmatpush2.bf16.msra.mxu0 0
    %2479 = vmatprep.subr.bf16.mxu0 0
    %2480 = vmatpush2.bf16.msra.mxu0 0
    %2481 = vmatprep.subr.bf16.mxu0 0
    %2482 = vmatpush2.bf16.msra.mxu0 0
    %2483 = vmatprep.subr.bf16.mxu0 0
    %2484 = vmatpush2.bf16.msra.mxu0 0
    %2485 = vmatprep.mubr.bf16.mxu0 0
    %2486 = vmatmul.mubr.bf16.gmra.mxu0 %v2406
    %v2487 = vpop.f32.mrf.mxu0
    %v2488 = vadd.f32 0.0, %v2487
    %v2489 = vpop.f32.mrf.mxu0
    %v2490 = vadd.f32 0.0, %v2489
    %v2491 = vpop.f32.mrf.mxu0
    %v2492 = vpop.f32.mrf.mxu0
    %2493 = vdwg.mxu0
    %v2494 = vadd.f32 %v2408, %v2447
    %v2495 = vadd.f32 %v2409, %v2449
    %v2496 = vadd.f32 %v2410, %v2488
    %v2497 = vadd.f32 %v2411, %v2490
    %v2498 = vxor.u32 %v2494, 2147483648
    %v2499 = vmul.f32 %v2498, 1.442695
    %v2500 = vpow.pop %v2499
    %v2501 = vadd.f32 %v2500, 1.0
    %v2502 = vrcp.pop %v2501
    %v2503 = vmul.f32 1.0, %v2502
    %v2504 = vxor.u32 %v2495, 2147483648
    %v2505 = vmul.f32 %v2504, 1.442695
    %v2506 = vpow.pop %v2505
    %v2507 = vadd.f32 %v2506, 1.0
    %v2508 = vrcp.pop %v2507
    %v2509 = vmul.f32 1.0, %v2508
    %v2510 = vtanh.pop %v2496
    %v2511 = vxor.u32 %v2497, 2147483648
    %v2512 = vmul.f32 %v2511, 1.442695
    %v2513 = vpow.pop %v2512
    %v2514 = vadd.f32 %v2513, 1.0
    %v2515 = vrcp.pop %v2514
    %v2516 = vmul.f32 1.0, %v2515
    %v2517 = vmul.f32 %v2509, %v2403
    %v2518 = vmul.f32 %v2503, %v2510
    %v2519 = vadd.f32 %v2517, %v2518
    %v2520 = vtanh.pop %v2519
    %v2521 = vmul.f32 %v2516, %v2520
    %v2522 = vpack.c.bf16 %v2521, %v2521
    %s2523 = scalar_lea.vmem [#allocation13], 4
    %2524 = vst [vmem:[%s2523] sm:$0xf] %v2522
    %v2525 = vld [vmem:[%s961] sm:$0xff]
    %v2526 = vld [vmem:[%s961 + $0x8] sm:$0xff]
    %v2527 = vld [vmem:[%s961 + $0x10] sm:$0xff]
    %v2528 = vld [vmem:[%s961 + $0x18] sm:$0xff]
    %2529 = vmatprep.subr.bf16.mxu0 %v2261
    %2530 = vmatpush1.bf16.msra.mxu0 %v2260
    %2531 = vmatprep.subr.bf16.mxu0 %v2257
    %2532 = vmatpush1.bf16.msra.mxu0 %v2256
    %2533 = vmatprep.subr.bf16.mxu0 %v2253
    %2534 = vmatpush1.bf16.msra.mxu0 %v2252
    %2535 = vmatprep.subr.bf16.mxu0 %v2249
    %2536 = vmatpush1.bf16.msra.mxu0 %v2248
    %2537 = vmatprep.subr.bf16.mxu0 %v2245
    %2538 = vmatpush1.bf16.msra.mxu0 %v2244
    %2539 = vmatprep.subr.bf16.mxu0 %v2241
    %2540 = vmatpush1.bf16.msra.mxu0 %v2240
    %2541 = vmatprep.subr.bf16.mxu0 %v2237
    %2542 = vmatpush1.bf16.msra.mxu0 %v2236
    %2543 = vmatprep.subr.bf16.mxu0 %v2233
    %2544 = vmatpush1.bf16.msra.mxu0 %v2232
    %2545 = vmatprep.subr.bf16.mxu0 0
    %2546 = vmatpush2.bf16.msra.mxu0 0
    %2547 = vmatprep.subr.bf16.mxu0 0
    %2548 = vmatpush2.bf16.msra.mxu0 0
    %2549 = vmatprep.subr.bf16.mxu0 0
    %2550 = vmatpush2.bf16.msra.mxu0 0
    %2551 = vmatprep.subr.bf16.mxu0 0
    %2552 = vmatpush2.bf16.msra.mxu0 0
    %2553 = vmatprep.subr.bf16.mxu0 0
    %2554 = vmatpush2.bf16.msra.mxu0 0
    %2555 = vmatprep.subr.bf16.mxu0 0
    %2556 = vmatpush2.bf16.msra.mxu0 0
    %2557 = vmatprep.subr.bf16.mxu0 0
    %2558 = vmatpush2.bf16.msra.mxu0 0
    %2559 = vmatprep.subr.bf16.mxu0 0
    %2560 = vmatpush2.bf16.msra.mxu0 0
    %2561 = vmatprep.mubr.bf16.mxu0 0
    %2562 = vmatmul.mubr.bf16.gmra.mxu0 %v2522
    %v2563 = vpop.f32.mrf.mxu0
    %v2564 = vadd.f32 0.0, %v2563
    %v2565 = vpop.f32.mrf.mxu0
    %v2566 = vadd.f32 0.0, %v2565
    %v2567 = vpop.f32.mrf.mxu0
    %v2568 = vpop.f32.mrf.mxu0
    %2569 = vdwg.mxu0
    %2570 = vmatprep.subr.bf16.mxu0 %v2263
    %2571 = vmatpush1.bf16.msra.mxu0 %v2262
    %2572 = vmatprep.subr.bf16.mxu0 %v2259
    %2573 = vmatpush1.bf16.msra.mxu0 %v2258
    %2574 = vmatprep.subr.bf16.mxu0 %v2255
    %2575 = vmatpush1.bf16.msra.mxu0 %v2254
    %2576 = vmatprep.subr.bf16.mxu0 %v2251
    %2577 = vmatpush1.bf16.msra.mxu0 %v2250
    %2578 = vmatprep.subr.bf16.mxu0 %v2247
    %2579 = vmatpush1.bf16.msra.mxu0 %v2246
    %2580 = vmatprep.subr.bf16.mxu0 %v2243
    %2581 = vmatpush1.bf16.msra.mxu0 %v2242
    %2582 = vmatprep.subr.bf16.mxu0 %v2239
    %2583 = vmatpush1.bf16.msra.mxu0 %v2238
    %2584 = vmatprep.subr.bf16.mxu0 %v2235
    %2585 = vmatpush1.bf16.msra.mxu0 %v2234
    %2586 = vmatprep.subr.bf16.mxu0 0
    %2587 = vmatpush2.bf16.msra.mxu0 0
    %2588 = vmatprep.subr.bf16.mxu0 0
    %2589 = vmatpush2.bf16.msra.mxu0 0
    %2590 = vmatprep.subr.bf16.mxu0 0
    %2591 = vmatpush2.bf16.msra.mxu0 0
    %2592 = vmatprep.subr.bf16.mxu0 0
    %2593 = vmatpush2.bf16.msra.mxu0 0
    %2594 = vmatprep.subr.bf16.mxu0 0
    %2595 = vmatpush2.bf16.msra.mxu0 0
    %2596 = vmatprep.subr.bf16.mxu0 0
    %2597 = vmatpush2.bf16.msra.mxu0 0
    %2598 = vmatprep.subr.bf16.mxu0 0
    %2599 = vmatpush2.bf16.msra.mxu0 0
    %2600 = vmatprep.subr.bf16.mxu0 0
    %2601 = vmatpush2.bf16.msra.mxu0 0
    %2602 = vmatprep.mubr.bf16.mxu0 0
    %2603 = vmatmul.mubr.bf16.gmra.mxu0 %v2522
    %v2604 = vpop.f32.mrf.mxu0
    %v2605 = vadd.f32 0.0, %v2604
    %v2606 = vpop.f32.mrf.mxu0
    %v2607 = vadd.f32 0.0, %v2606
    %v2608 = vpop.f32.mrf.mxu0
    %v2609 = vpop.f32.mrf.mxu0
    %2610 = vdwg.mxu0
    %v2611 = vadd.f32 %v2525, %v2564
    %v2612 = vadd.f32 %v2526, %v2566
    %v2613 = vadd.f32 %v2527, %v2605
    %v2614 = vadd.f32 %v2528, %v2607
    %v2615 = vxor.u32 %v2611, 2147483648
    %v2616 = vmul.f32 %v2615, 1.442695
    %v2617 = vpow.pop %v2616
    %v2618 = vadd.f32 %v2617, 1.0
    %v2619 = vrcp.pop %v2618
    %v2620 = vmul.f32 1.0, %v2619
    %v2621 = vxor.u32 %v2612, 2147483648
    %v2622 = vmul.f32 %v2621, 1.442695
    %v2623 = vpow.pop %v2622
    %v2624 = vadd.f32 %v2623, 1.0
    %v2625 = vrcp.pop %v2624
    %v2626 = vmul.f32 1.0, %v2625
    %v2627 = vtanh.pop %v2613
    %v2628 = vxor.u32 %v2614, 2147483648
    %v2629 = vmul.f32 %v2628, 1.442695
    %v2630 = vpow.pop %v2629
    %v2631 = vadd.f32 %v2630, 1.0
    %v2632 = vrcp.pop %v2631
    %v2633 = vmul.f32 1.0, %v2632
    %v2634 = vmul.f32 %v2626, %v2519
    %v2635 = vmul.f32 %v2620, %v2627
    %v2636 = vadd.f32 %v2634, %v2635
    %v2637 = vtanh.pop %v2636
    %v2638 = vmul.f32 %v2633, %v2637
    %v2639 = vpack.c.bf16 %v2638, %v2638
    %s2640 = scalar_lea.vmem [#allocation13], 8
    %2641 = vst [vmem:[%s2640] sm:$0xf] %v2639
    %v2642 = vld [vmem:[%s1079] sm:$0xff]
    %v2643 = vld [vmem:[%s1079 + $0x8] sm:$0xff]
    %v2644 = vld [vmem:[%s1079 + $0x10] sm:$0xff]
    %v2645 = vld [vmem:[%s1079 + $0x18] sm:$0xff]
    %2646 = vmatprep.subr.bf16.mxu0 %v2261
    %2647 = vmatpush1.bf16.msra.mxu0 %v2260
    %2648 = vmatprep.subr.bf16.mxu0 %v2257
    %2649 = vmatpush1.bf16.msra.mxu0 %v2256
    %2650 = vmatprep.subr.bf16.mxu0 %v2253
    %2651 = vmatpush1.bf16.msra.mxu0 %v2252
    %2652 = vmatprep.subr.bf16.mxu0 %v2249
    %2653 = vmatpush1.bf16.msra.mxu0 %v2248
    %2654 = vmatprep.subr.bf16.mxu0 %v2245
    %2655 = vmatpush1.bf16.msra.mxu0 %v2244
    %2656 = vmatprep.subr.bf16.mxu0 %v2241
    %2657 = vmatpush1.bf16.msra.mxu0 %v2240
    %2658 = vmatprep.subr.bf16.mxu0 %v2237
    %2659 = vmatpush1.bf16.msra.mxu0 %v2236
    %2660 = vmatprep.subr.bf16.mxu0 %v2233
    %2661 = vmatpush1.bf16.msra.mxu0 %v2232
    %2662 = vmatprep.subr.bf16.mxu0 0
    %2663 = vmatpush2.bf16.msra.mxu0 0
    %2664 = vmatprep.subr.bf16.mxu0 0
    %2665 = vmatpush2.bf16.msra.mxu0 0
    %2666 = vmatprep.subr.bf16.mxu0 0
    %2667 = vmatpush2.bf16.msra.mxu0 0
    %2668 = vmatprep.subr.bf16.mxu0 0
    %2669 = vmatpush2.bf16.msra.mxu0 0
    %2670 = vmatprep.subr.bf16.mxu0 0
    %2671 = vmatpush2.bf16.msra.mxu0 0
    %2672 = vmatprep.subr.bf16.mxu0 0
    %2673 = vmatpush2.bf16.msra.mxu0 0
    %2674 = vmatprep.subr.bf16.mxu0 0
    %2675 = vmatpush2.bf16.msra.mxu0 0
    %2676 = vmatprep.subr.bf16.mxu0 0
    %2677 = vmatpush2.bf16.msra.mxu0 0
    %2678 = vmatprep.mubr.bf16.mxu0 0
    %2679 = vmatmul.mubr.bf16.gmra.mxu0 %v2639
    %v2680 = vpop.f32.mrf.mxu0
    %v2681 = vadd.f32 0.0, %v2680
    %v2682 = vpop.f32.mrf.mxu0
    %v2683 = vadd.f32 0.0, %v2682
    %v2684 = vpop.f32.mrf.mxu0
    %v2685 = vpop.f32.mrf.mxu0
    %2686 = vdwg.mxu0
    %2687 = vmatprep.subr.bf16.mxu0 %v2263
    %2688 = vmatpush1.bf16.msra.mxu0 %v2262
    %2689 = vmatprep.subr.bf16.mxu0 %v2259
    %2690 = vmatpush1.bf16.msra.mxu0 %v2258
    %2691 = vmatprep.subr.bf16.mxu0 %v2255
    %2692 = vmatpush1.bf16.msra.mxu0 %v2254
    %2693 = vmatprep.subr.bf16.mxu0 %v2251
    %2694 = vmatpush1.bf16.msra.mxu0 %v2250
    %2695 = vmatprep.subr.bf16.mxu0 %v2247
    %2696 = vmatpush1.bf16.msra.mxu0 %v2246
    %2697 = vmatprep.subr.bf16.mxu0 %v2243
    %2698 = vmatpush1.bf16.msra.mxu0 %v2242
    %2699 = vmatprep.subr.bf16.mxu0 %v2239
    %2700 = vmatpush1.bf16.msra.mxu0 %v2238
    %2701 = vmatprep.subr.bf16.mxu0 %v2235
    %2702 = vmatpush1.bf16.msra.mxu0 %v2234
    %2703 = vmatprep.subr.bf16.mxu0 0
    %2704 = vmatpush2.bf16.msra.mxu0 0
    %2705 = vmatprep.subr.bf16.mxu0 0
    %2706 = vmatpush2.bf16.msra.mxu0 0
    %2707 = vmatprep.subr.bf16.mxu0 0
    %2708 = vmatpush2.bf16.msra.mxu0 0
    %2709 = vmatprep.subr.bf16.mxu0 0
    %2710 = vmatpush2.bf16.msra.mxu0 0
    %2711 = vmatprep.subr.bf16.mxu0 0
    %2712 = vmatpush2.bf16.msra.mxu0 0
    %2713 = vmatprep.subr.bf16.mxu0 0
    %2714 = vmatpush2.bf16.msra.mxu0 0
    %2715 = vmatprep.subr.bf16.mxu0 0
    %2716 = vmatpush2.bf16.msra.mxu0 0
    %2717 = vmatprep.subr.bf16.mxu0 0
    %2718 = vmatpush2.bf16.msra.mxu0 0
    %2719 = vmatprep.mubr.bf16.mxu0 0
    %2720 = vmatmul.mubr.bf16.gmra.mxu0 %v2639
    %v2721 = vpop.f32.mrf.mxu0
    %v2722 = vadd.f32 0.0, %v2721
    %v2723 = vpop.f32.mrf.mxu0
    %v2724 = vadd.f32 0.0, %v2723
    %v2725 = vpop.f32.mrf.mxu0
    %v2726 = vpop.f32.mrf.mxu0
    %2727 = vdwg.mxu0
    %v2728 = vadd.f32 %v2642, %v2681
    %v2729 = vadd.f32 %v2643, %v2683
    %v2730 = vadd.f32 %v2644, %v2722
    %v2731 = vadd.f32 %v2645, %v2724
    %v2732 = vxor.u32 %v2728, 2147483648
    %v2733 = vmul.f32 %v2732, 1.442695
    %v2734 = vpow.pop %v2733
    %v2735 = vadd.f32 %v2734, 1.0
    %v2736 = vrcp.pop %v2735
    %v2737 = vmul.f32 1.0, %v2736
    %v2738 = vxor.u32 %v2729, 2147483648
    %v2739 = vmul.f32 %v2738, 1.442695
    %v2740 = vpow.pop %v2739
    %v2741 = vadd.f32 %v2740, 1.0
    %v2742 = vrcp.pop %v2741
    %v2743 = vmul.f32 1.0, %v2742
    %v2744 = vtanh.pop %v2730
    %v2745 = vxor.u32 %v2731, 2147483648
    %v2746 = vmul.f32 %v2745, 1.442695
    %v2747 = vpow.pop %v2746
    %v2748 = vadd.f32 %v2747, 1.0
    %v2749 = vrcp.pop %v2748
    %v2750 = vmul.f32 1.0, %v2749
    %v2751 = vmul.f32 %v2743, %v2636
    %v2752 = vmul.f32 %v2737, %v2744
    %v2753 = vadd.f32 %v2751, %v2752
    %v2754 = vtanh.pop %v2753
    %v2755 = vmul.f32 %v2750, %v2754
    %v2756 = vpack.c.bf16 %v2755, %v2755
    %s2757 = scalar_lea.vmem [#allocation13], 12
    %2758 = vst [vmem:[%s2757] sm:$0xf] %v2756
    %v2759 = vld [vmem:[%s1197] sm:$0xff]
    %v2760 = vld [vmem:[%s1197 + $0x8] sm:$0xff]
    %v2761 = vld [vmem:[%s1197 + $0x10] sm:$0xff]
    %v2762 = vld [vmem:[%s1197 + $0x18] sm:$0xff]
    %2763 = vmatprep.subr.bf16.mxu0 %v2261
    %2764 = vmatpush1.bf16.msra.mxu0 %v2260
    %2765 = vmatprep.subr.bf16.mxu0 %v2257
    %2766 = vmatpush1.bf16.msra.mxu0 %v2256
    %2767 = vmatprep.subr.bf16.mxu0 %v2253
    %2768 = vmatpush1.bf16.msra.mxu0 %v2252
    %2769 = vmatprep.subr.bf16.mxu0 %v2249
    %2770 = vmatpush1.bf16.msra.mxu0 %v2248
    %2771 = vmatprep.subr.bf16.mxu0 %v2245
    %2772 = vmatpush1.bf16.msra.mxu0 %v2244
    %2773 = vmatprep.subr.bf16.mxu0 %v2241
    %2774 = vmatpush1.bf16.msra.mxu0 %v2240
    %2775 = vmatprep.subr.bf16.mxu0 %v2237
    %2776 = vmatpush1.bf16.msra.mxu0 %v2236
    %2777 = vmatprep.subr.bf16.mxu0 %v2233
    %2778 = vmatpush1.bf16.msra.mxu0 %v2232
    %2779 = vmatprep.subr.bf16.mxu0 0
    %2780 = vmatpush2.bf16.msra.mxu0 0
    %2781 = vmatprep.subr.bf16.mxu0 0
    %2782 = vmatpush2.bf16.msra.mxu0 0
    %2783 = vmatprep.subr.bf16.mxu0 0
    %2784 = vmatpush2.bf16.msra.mxu0 0
    %2785 = vmatprep.subr.bf16.mxu0 0
    %2786 = vmatpush2.bf16.msra.mxu0 0
    %2787 = vmatprep.subr.bf16.mxu0 0
    %2788 = vmatpush2.bf16.msra.mxu0 0
    %2789 = vmatprep.subr.bf16.mxu0 0
    %2790 = vmatpush2.bf16.msra.mxu0 0
    %2791 = vmatprep.subr.bf16.mxu0 0
    %2792 = vmatpush2.bf16.msra.mxu0 0
    %2793 = vmatprep.subr.bf16.mxu0 0
    %2794 = vmatpush2.bf16.msra.mxu0 0
    %2795 = vmatprep.mubr.bf16.mxu0 0
    %2796 = vmatmul.mubr.bf16.gmra.mxu0 %v2756
    %v2797 = vpop.f32.mrf.mxu0
    %v2798 = vadd.f32 0.0, %v2797
    %v2799 = vpop.f32.mrf.mxu0
    %v2800 = vadd.f32 0.0, %v2799
    %v2801 = vpop.f32.mrf.mxu0
    %v2802 = vpop.f32.mrf.mxu0
    %2803 = vdwg.mxu0
    %2804 = vmatprep.subr.bf16.mxu0 %v2263
    %2805 = vmatpush1.bf16.msra.mxu0 %v2262
    %2806 = vmatprep.subr.bf16.mxu0 %v2259
    %2807 = vmatpush1.bf16.msra.mxu0 %v2258
    %2808 = vmatprep.subr.bf16.mxu0 %v2255
    %2809 = vmatpush1.bf16.msra.mxu0 %v2254
    %2810 = vmatprep.subr.bf16.mxu0 %v2251
    %2811 = vmatpush1.bf16.msra.mxu0 %v2250
    %2812 = vmatprep.subr.bf16.mxu0 %v2247
    %2813 = vmatpush1.bf16.msra.mxu0 %v2246
    %2814 = vmatprep.subr.bf16.mxu0 %v2243
    %2815 = vmatpush1.bf16.msra.mxu0 %v2242
    %2816 = vmatprep.subr.bf16.mxu0 %v2239
    %2817 = vmatpush1.bf16.msra.mxu0 %v2238
    %2818 = vmatprep.subr.bf16.mxu0 %v2235
    %2819 = vmatpush1.bf16.msra.mxu0 %v2234
    %2820 = vmatprep.subr.bf16.mxu0 0
    %2821 = vmatpush2.bf16.msra.mxu0 0
    %2822 = vmatprep.subr.bf16.mxu0 0
    %2823 = vmatpush2.bf16.msra.mxu0 0
    %2824 = vmatprep.subr.bf16.mxu0 0
    %2825 = vmatpush2.bf16.msra.mxu0 0
    %2826 = vmatprep.subr.bf16.mxu0 0
    %2827 = vmatpush2.bf16.msra.mxu0 0
    %2828 = vmatprep.subr.bf16.mxu0 0
    %2829 = vmatpush2.bf16.msra.mxu0 0
    %2830 = vmatprep.subr.bf16.mxu0 0
    %2831 = vmatpush2.bf16.msra.mxu0 0
    %2832 = vmatprep.subr.bf16.mxu0 0
    %2833 = vmatpush2.bf16.msra.mxu0 0
    %2834 = vmatprep.subr.bf16.mxu0 0
    %2835 = vmatpush2.bf16.msra.mxu0 0
    %2836 = vmatprep.mubr.bf16.mxu0 0
    %2837 = vmatmul.mubr.bf16.gmra.mxu0 %v2756
    %v2838 = vpop.f32.mrf.mxu0
    %v2839 = vadd.f32 0.0, %v2838
    %v2840 = vpop.f32.mrf.mxu0
    %v2841 = vadd.f32 0.0, %v2840
    %v2842 = vpop.f32.mrf.mxu0
    %v2843 = vpop.f32.mrf.mxu0
    %2844 = vdwg.mxu0
    %v2845 = vadd.f32 %v2759, %v2798
    %v2846 = vadd.f32 %v2760, %v2800
    %v2847 = vadd.f32 %v2761, %v2839
    %v2848 = vadd.f32 %v2762, %v2841
    %v2849 = vxor.u32 %v2845, 2147483648
    %v2850 = vmul.f32 %v2849, 1.442695
    %v2851 = vpow.pop %v2850
    %v2852 = vadd.f32 %v2851, 1.0
    %v2853 = vrcp.pop %v2852
    %v2854 = vmul.f32 1.0, %v2853
    %v2855 = vxor.u32 %v2846, 2147483648
    %v2856 = vmul.f32 %v2855, 1.442695
    %v2857 = vpow.pop %v2856
    %v2858 = vadd.f32 %v2857, 1.0
    %v2859 = vrcp.pop %v2858
    %v2860 = vmul.f32 1.0, %v2859
    %v2861 = vtanh.pop %v2847
    %v2862 = vxor.u32 %v2848, 2147483648
    %v2863 = vmul.f32 %v2862, 1.442695
    %v2864 = vpow.pop %v2863
    %v2865 = vadd.f32 %v2864, 1.0
    %v2866 = vrcp.pop %v2865
    %v2867 = vmul.f32 1.0, %v2866
    %v2868 = vmul.f32 %v2860, %v2753
    %v2869 = vmul.f32 %v2854, %v2861
    %v2870 = vadd.f32 %v2868, %v2869
    %v2871 = vtanh.pop %v2870
    %v2872 = vmul.f32 %v2867, %v2871
    %v2873 = vpack.c.bf16 %v2872, %v2872
    %s2874 = scalar_lea.vmem [#allocation13], 16
    %2875 = vst [vmem:[%s2874] sm:$0xf] %v2873
    %v2876 = vld [vmem:[%s1315] sm:$0xff]
    %v2877 = vld [vmem:[%s1315 + $0x8] sm:$0xff]
    %v2878 = vld [vmem:[%s1315 + $0x10] sm:$0xff]
    %v2879 = vld [vmem:[%s1315 + $0x18] sm:$0xff]
    %2880 = vmatprep.subr.bf16.mxu0 %v2261
    %2881 = vmatpush1.bf16.msra.mxu0 %v2260
    %2882 = vmatprep.subr.bf16.mxu0 %v2257
    %2883 = vmatpush1.bf16.msra.mxu0 %v2256
    %2884 = vmatprep.subr.bf16.mxu0 %v2253
    %2885 = vmatpush1.bf16.msra.mxu0 %v2252
    %2886 = vmatprep.subr.bf16.mxu0 %v2249
    %2887 = vmatpush1.bf16.msra.mxu0 %v2248
    %2888 = vmatprep.subr.bf16.mxu0 %v2245
    %2889 = vmatpush1.bf16.msra.mxu0 %v2244
    %2890 = vmatprep.subr.bf16.mxu0 %v2241
    %2891 = vmatpush1.bf16.msra.mxu0 %v2240
    %2892 = vmatprep.subr.bf16.mxu0 %v2237
    %2893 = vmatpush1.bf16.msra.mxu0 %v2236
    %2894 = vmatprep.subr.bf16.mxu0 %v2233
    %2895 = vmatpush1.bf16.msra.mxu0 %v2232
    %2896 = vmatprep.subr.bf16.mxu0 0
    %2897 = vmatpush2.bf16.msra.mxu0 0
    %2898 = vmatprep.subr.bf16.mxu0 0
    %2899 = vmatpush2.bf16.msra.mxu0 0
    %2900 = vmatprep.subr.bf16.mxu0 0
    %2901 = vmatpush2.bf16.msra.mxu0 0
    %2902 = vmatprep.subr.bf16.mxu0 0
    %2903 = vmatpush2.bf16.msra.mxu0 0
    %2904 = vmatprep.subr.bf16.mxu0 0
    %2905 = vmatpush2.bf16.msra.mxu0 0
    %2906 = vmatprep.subr.bf16.mxu0 0
    %2907 = vmatpush2.bf16.msra.mxu0 0
    %2908 = vmatprep.subr.bf16.mxu0 0
    %2909 = vmatpush2.bf16.msra.mxu0 0
    %2910 = vmatprep.subr.bf16.mxu0 0
    %2911 = vmatpush2.bf16.msra.mxu0 0
    %2912 = vmatprep.mubr.bf16.mxu0 0
    %2913 = vmatmul.mubr.bf16.gmra.mxu0 %v2873
    %v2914 = vpop.f32.mrf.mxu0
    %v2915 = vadd.f32 0.0, %v2914
    %v2916 = vpop.f32.mrf.mxu0
    %v2917 = vadd.f32 0.0, %v2916
    %v2918 = vpop.f32.mrf.mxu0
    %v2919 = vpop.f32.mrf.mxu0
    %2920 = vdwg.mxu0
    %2921 = vmatprep.subr.bf16.mxu0 %v2263
    %2922 = vmatpush1.bf16.msra.mxu0 %v2262
    %2923 = vmatprep.subr.bf16.mxu0 %v2259
    %2924 = vmatpush1.bf16.msra.mxu0 %v2258
    %2925 = vmatprep.subr.bf16.mxu0 %v2255
    %2926 = vmatpush1.bf16.msra.mxu0 %v2254
    %2927 = vmatprep.subr.bf16.mxu0 %v2251
    %2928 = vmatpush1.bf16.msra.mxu0 %v2250
    %2929 = vmatprep.subr.bf16.mxu0 %v2247
    %2930 = vmatpush1.bf16.msra.mxu0 %v2246
    %2931 = vmatprep.subr.bf16.mxu0 %v2243
    %2932 = vmatpush1.bf16.msra.mxu0 %v2242
    %2933 = vmatprep.subr.bf16.mxu0 %v2239
    %2934 = vmatpush1.bf16.msra.mxu0 %v2238
    %2935 = vmatprep.subr.bf16.mxu0 %v2235
    %2936 = vmatpush1.bf16.msra.mxu0 %v2234
    %2937 = vmatprep.subr.bf16.mxu0 0
    %2938 = vmatpush2.bf16.msra.mxu0 0
    %2939 = vmatprep.subr.bf16.mxu0 0
    %2940 = vmatpush2.bf16.msra.mxu0 0
    %2941 = vmatprep.subr.bf16.mxu0 0
    %2942 = vmatpush2.bf16.msra.mxu0 0
    %2943 = vmatprep.subr.bf16.mxu0 0
    %2944 = vmatpush2.bf16.msra.mxu0 0
    %2945 = vmatprep.subr.bf16.mxu0 0
    %2946 = vmatpush2.bf16.msra.mxu0 0
    %2947 = vmatprep.subr.bf16.mxu0 0
    %2948 = vmatpush2.bf16.msra.mxu0 0
    %2949 = vmatprep.subr.bf16.mxu0 0
    %2950 = vmatpush2.bf16.msra.mxu0 0
    %2951 = vmatprep.subr.bf16.mxu0 0
    %2952 = vmatpush2.bf16.msra.mxu0 0
    %2953 = vmatprep.mubr.bf16.mxu0 0
    %2954 = vmatmul.mubr.bf16.gmra.mxu0 %v2873
    %v2955 = vpop.f32.mrf.mxu0
    %v2956 = vadd.f32 0.0, %v2955
    %v2957 = vpop.f32.mrf.mxu0
    %v2958 = vadd.f32 0.0, %v2957
    %v2959 = vpop.f32.mrf.mxu0
    %v2960 = vpop.f32.mrf.mxu0
    %2961 = vdwg.mxu0
    %v2962 = vadd.f32 %v2876, %v2915
    %v2963 = vadd.f32 %v2877, %v2917
    %v2964 = vadd.f32 %v2878, %v2956
    %v2965 = vadd.f32 %v2879, %v2958
    %v2966 = vxor.u32 %v2962, 2147483648
    %v2967 = vmul.f32 %v2966, 1.442695
    %v2968 = vpow.pop %v2967
    %v2969 = vadd.f32 %v2968, 1.0
    %v2970 = vrcp.pop %v2969
    %v2971 = vmul.f32 1.0, %v2970
    %v2972 = vxor.u32 %v2963, 2147483648
    %v2973 = vmul.f32 %v2972, 1.442695
    %v2974 = vpow.pop %v2973
    %v2975 = vadd.f32 %v2974, 1.0
    %v2976 = vrcp.pop %v2975
    %v2977 = vmul.f32 1.0, %v2976
    %v2978 = vtanh.pop %v2964
    %v2979 = vxor.u32 %v2965, 2147483648
    %v2980 = vmul.f32 %v2979, 1.442695
    %v2981 = vpow.pop %v2980
    %v2982 = vadd.f32 %v2981, 1.0
    %v2983 = vrcp.pop %v2982
    %v2984 = vmul.f32 1.0, %v2983
    %v2985 = vmul.f32 %v2977, %v2870
    %v2986 = vmul.f32 %v2971, %v2978
    %v2987 = vadd.f32 %v2985, %v2986
    %v2988 = vtanh.pop %v2987
    %v2989 = vmul.f32 %v2984, %v2988
    %v2990 = vpack.c.bf16 %v2989, %v2989
    %s2991 = scalar_lea.vmem [#allocation13], 20
    %2992 = vst [vmem:[%s2991] sm:$0xf] %v2990
    %v2993 = vld [vmem:[%s1433] sm:$0xff]
    %v2994 = vld [vmem:[%s1433 + $0x8] sm:$0xff]
    %v2995 = vld [vmem:[%s1433 + $0x10] sm:$0xff]
    %v2996 = vld [vmem:[%s1433 + $0x18] sm:$0xff]
    %2997 = vmatprep.subr.bf16.mxu0 %v2261
    %2998 = vmatpush1.bf16.msra.mxu0 %v2260
    %2999 = vmatprep.subr.bf16.mxu0 %v2257
    %3000 = vmatpush1.bf16.msra.mxu0 %v2256
    %3001 = vmatprep.subr.bf16.mxu0 %v2253
    %3002 = vmatpush1.bf16.msra.mxu0 %v2252
    %3003 = vmatprep.subr.bf16.mxu0 %v2249
    %3004 = vmatpush1.bf16.msra.mxu0 %v2248
    %3005 = vmatprep.subr.bf16.mxu0 %v2245
    %3006 = vmatpush1.bf16.msra.mxu0 %v2244
    %3007 = vmatprep.subr.bf16.mxu0 %v2241
    %3008 = vmatpush1.bf16.msra.mxu0 %v2240
    %3009 = vmatprep.subr.bf16.mxu0 %v2237
    %3010 = vmatpush1.bf16.msra.mxu0 %v2236
    %3011 = vmatprep.subr.bf16.mxu0 %v2233
    %3012 = vmatpush1.bf16.msra.mxu0 %v2232
    %3013 = vmatprep.subr.bf16.mxu0 0
    %3014 = vmatpush2.bf16.msra.mxu0 0
    %3015 = vmatprep.subr.bf16.mxu0 0
    %3016 = vmatpush2.bf16.msra.mxu0 0
    %3017 = vmatprep.subr.bf16.mxu0 0
    %3018 = vmatpush2.bf16.msra.mxu0 0
    %3019 = vmatprep.subr.bf16.mxu0 0
    %3020 = vmatpush2.bf16.msra.mxu0 0
    %3021 = vmatprep.subr.bf16.mxu0 0
    %3022 = vmatpush2.bf16.msra.mxu0 0
    %3023 = vmatprep.subr.bf16.mxu0 0
    %3024 = vmatpush2.bf16.msra.mxu0 0
    %3025 = vmatprep.subr.bf16.mxu0 0
    %3026 = vmatpush2.bf16.msra.mxu0 0
    %3027 = vmatprep.subr.bf16.mxu0 0
    %3028 = vmatpush2.bf16.msra.mxu0 0
    %3029 = vmatprep.mubr.bf16.mxu0 0
    %3030 = vmatmul.mubr.bf16.gmra.mxu0 %v2990
    %v3031 = vpop.f32.mrf.mxu0
    %v3032 = vadd.f32 0.0, %v3031
    %v3033 = vpop.f32.mrf.mxu0
    %v3034 = vadd.f32 0.0, %v3033
    %v3035 = vpop.f32.mrf.mxu0
    %v3036 = vpop.f32.mrf.mxu0
    %3037 = vdwg.mxu0
    %3038 = vmatprep.subr.bf16.mxu0 %v2263
    %3039 = vmatpush1.bf16.msra.mxu0 %v2262
    %3040 = vmatprep.subr.bf16.mxu0 %v2259
    %3041 = vmatpush1.bf16.msra.mxu0 %v2258
    %3042 = vmatprep.subr.bf16.mxu0 %v2255
    %3043 = vmatpush1.bf16.msra.mxu0 %v2254
    %3044 = vmatprep.subr.bf16.mxu0 %v2251
    %3045 = vmatpush1.bf16.msra.mxu0 %v2250
    %3046 = vmatprep.subr.bf16.mxu0 %v2247
    %3047 = vmatpush1.bf16.msra.mxu0 %v2246
    %3048 = vmatprep.subr.bf16.mxu0 %v2243
    %3049 = vmatpush1.bf16.msra.mxu0 %v2242
    %3050 = vmatprep.subr.bf16.mxu0 %v2239
    %3051 = vmatpush1.bf16.msra.mxu0 %v2238
    %3052 = vmatprep.subr.bf16.mxu0 %v2235
    %3053 = vmatpush1.bf16.msra.mxu0 %v2234
    %3054 = vmatprep.subr.bf16.mxu0 0
    %3055 = vmatpush2.bf16.msra.mxu0 0
    %3056 = vmatprep.subr.bf16.mxu0 0
    %3057 = vmatpush2.bf16.msra.mxu0 0
    %3058 = vmatprep.subr.bf16.mxu0 0
    %3059 = vmatpush2.bf16.msra.mxu0 0
    %3060 = vmatprep.subr.bf16.mxu0 0
    %3061 = vmatpush2.bf16.msra.mxu0 0
    %3062 = vmatprep.subr.bf16.mxu0 0
    %3063 = vmatpush2.bf16.msra.mxu0 0
    %3064 = vmatprep.subr.bf16.mxu0 0
    %3065 = vmatpush2.bf16.msra.mxu0 0
    %3066 = vmatprep.subr.bf16.mxu0 0
    %3067 = vmatpush2.bf16.msra.mxu0 0
    %3068 = vmatprep.subr.bf16.mxu0 0
    %3069 = vmatpush2.bf16.msra.mxu0 0
    %3070 = vmatprep.mubr.bf16.mxu0 0
    %3071 = vmatmul.mubr.bf16.gmra.mxu0 %v2990
    %v3072 = vpop.f32.mrf.mxu0
    %v3073 = vadd.f32 0.0, %v3072
    %v3074 = vpop.f32.mrf.mxu0
    %v3075 = vadd.f32 0.0, %v3074
    %v3076 = vpop.f32.mrf.mxu0
    %v3077 = vpop.f32.mrf.mxu0
    %3078 = vdwg.mxu0
    %v3079 = vadd.f32 %v2993, %v3032
    %v3080 = vadd.f32 %v2994, %v3034
    %v3081 = vadd.f32 %v2995, %v3073
    %v3082 = vadd.f32 %v2996, %v3075
    %v3083 = vxor.u32 %v3079, 2147483648
    %v3084 = vmul.f32 %v3083, 1.442695
    %v3085 = vpow.pop %v3084
    %v3086 = vadd.f32 %v3085, 1.0
    %v3087 = vrcp.pop %v3086
    %v3088 = vmul.f32 1.0, %v3087
    %v3089 = vxor.u32 %v3080, 2147483648
    %v3090 = vmul.f32 %v3089, 1.442695
    %v3091 = vpow.pop %v3090
    %v3092 = vadd.f32 %v3091, 1.0
    %v3093 = vrcp.pop %v3092
    %v3094 = vmul.f32 1.0, %v3093
    %v3095 = vtanh.pop %v3081
    %v3096 = vxor.u32 %v3082, 2147483648
    %v3097 = vmul.f32 %v3096, 1.442695
    %v3098 = vpow.pop %v3097
    %v3099 = vadd.f32 %v3098, 1.0
    %v3100 = vrcp.pop %v3099
    %v3101 = vmul.f32 1.0, %v3100
    %v3102 = vmul.f32 %v3094, %v2987
    %v3103 = vmul.f32 %v3088, %v3095
    %v3104 = vadd.f32 %v3102, %v3103
    %v3105 = vtanh.pop %v3104
    %v3106 = vmul.f32 %v3101, %v3105
    %v3107 = vpack.c.bf16 %v3106, %v3106
    %s3108 = scalar_lea.vmem [#allocation13], 24
    %3109 = vst [vmem:[%s3108] sm:$0xf] %v3107
    %v3110 = vld [vmem:[%s1551] sm:$0xff]
    %v3111 = vld [vmem:[%s1551 + $0x8] sm:$0xff]
    %v3112 = vld [vmem:[%s1551 + $0x10] sm:$0xff]
    %v3113 = vld [vmem:[%s1551 + $0x18] sm:$0xff]
    %3114 = vmatprep.subr.bf16.mxu0 %v2261
    %3115 = vmatpush1.bf16.msra.mxu0 %v2260
    %3116 = vmatprep.subr.bf16.mxu0 %v2257
    %3117 = vmatpush1.bf16.msra.mxu0 %v2256
    %3118 = vmatprep.subr.bf16.mxu0 %v2253
    %3119 = vmatpush1.bf16.msra.mxu0 %v2252
    %3120 = vmatprep.subr.bf16.mxu0 %v2249
    %3121 = vmatpush1.bf16.msra.mxu0 %v2248
    %3122 = vmatprep.subr.bf16.mxu0 %v2245
    %3123 = vmatpush1.bf16.msra.mxu0 %v2244
    %3124 = vmatprep.subr.bf16.mxu0 %v2241
    %3125 = vmatpush1.bf16.msra.mxu0 %v2240
    %3126 = vmatprep.subr.bf16.mxu0 %v2237
    %3127 = vmatpush1.bf16.msra.mxu0 %v2236
    %3128 = vmatprep.subr.bf16.mxu0 %v2233
    %3129 = vmatpush1.bf16.msra.mxu0 %v2232
    %3130 = vmatprep.subr.bf16.mxu0 0
    %3131 = vmatpush2.bf16.msra.mxu0 0
    %3132 = vmatprep.subr.bf16.mxu0 0
    %3133 = vmatpush2.bf16.msra.mxu0 0
    %3134 = vmatprep.subr.bf16.mxu0 0
    %3135 = vmatpush2.bf16.msra.mxu0 0
    %3136 = vmatprep.subr.bf16.mxu0 0
    %3137 = vmatpush2.bf16.msra.mxu0 0
    %3138 = vmatprep.subr.bf16.mxu0 0
    %3139 = vmatpush2.bf16.msra.mxu0 0
    %3140 = vmatprep.subr.bf16.mxu0 0
    %3141 = vmatpush2.bf16.msra.mxu0 0
    %3142 = vmatprep.subr.bf16.mxu0 0
    %3143 = vmatpush2.bf16.msra.mxu0 0
    %3144 = vmatprep.subr.bf16.mxu0 0
    %3145 = vmatpush2.bf16.msra.mxu0 0
    %3146 = vmatprep.mubr.bf16.mxu0 0
    %3147 = vmatmul.mubr.bf16.gmra.mxu0 %v3107
    %v3148 = vpop.f32.mrf.mxu0
    %v3149 = vadd.f32 0.0, %v3148
    %v3150 = vpop.f32.mrf.mxu0
    %v3151 = vadd.f32 0.0, %v3150
    %v3152 = vpop.f32.mrf.mxu0
    %v3153 = vpop.f32.mrf.mxu0
    %3154 = vdwg.mxu0
    %3155 = vmatprep.subr.bf16.mxu0 %v2263
    %3156 = vmatpush1.bf16.msra.mxu0 %v2262
    %3157 = vmatprep.subr.bf16.mxu0 %v2259
    %3158 = vmatpush1.bf16.msra.mxu0 %v2258
    %3159 = vmatprep.subr.bf16.mxu0 %v2255
    %3160 = vmatpush1.bf16.msra.mxu0 %v2254
    %3161 = vmatprep.subr.bf16.mxu0 %v2251
    %3162 = vmatpush1.bf16.msra.mxu0 %v2250
    %3163 = vmatprep.subr.bf16.mxu0 %v2247
    %3164 = vmatpush1.bf16.msra.mxu0 %v2246
    %3165 = vmatprep.subr.bf16.mxu0 %v2243
    %3166 = vmatpush1.bf16.msra.mxu0 %v2242
    %3167 = vmatprep.subr.bf16.mxu0 %v2239
    %3168 = vmatpush1.bf16.msra.mxu0 %v2238
    %3169 = vmatprep.subr.bf16.mxu0 %v2235
    %3170 = vmatpush1.bf16.msra.mxu0 %v2234
    %3171 = vmatprep.subr.bf16.mxu0 0
    %3172 = vmatpush2.bf16.msra.mxu0 0
    %3173 = vmatprep.subr.bf16.mxu0 0
    %3174 = vmatpush2.bf16.msra.mxu0 0
    %3175 = vmatprep.subr.bf16.mxu0 0
    %3176 = vmatpush2.bf16.msra.mxu0 0
    %3177 = vmatprep.subr.bf16.mxu0 0
    %3178 = vmatpush2.bf16.msra.mxu0 0
    %3179 = vmatprep.subr.bf16.mxu0 0
    %3180 = vmatpush2.bf16.msra.mxu0 0
    %3181 = vmatprep.subr.bf16.mxu0 0
    %3182 = vmatpush2.bf16.msra.mxu0 0
    %3183 = vmatprep.subr.bf16.mxu0 0
    %3184 = vmatpush2.bf16.msra.mxu0 0
    %3185 = vmatprep.subr.bf16.mxu0 0
    %3186 = vmatpush2.bf16.msra.mxu0 0
    %3187 = vmatprep.mubr.bf16.mxu0 0
    %3188 = vmatmul.mubr.bf16.gmra.mxu0 %v3107
    %v3189 = vpop.f32.mrf.mxu0
    %v3190 = vadd.f32 0.0, %v3189
    %v3191 = vpop.f32.mrf.mxu0
    %v3192 = vadd.f32 0.0, %v3191
    %v3193 = vpop.f32.mrf.mxu0
    %v3194 = vpop.f32.mrf.mxu0
    %3195 = vdwg.mxu0
    %v3196 = vadd.f32 %v3110, %v3149
    %v3197 = vadd.f32 %v3111, %v3151
    %v3198 = vadd.f32 %v3112, %v3190
    %v3199 = vadd.f32 %v3113, %v3192
    %v3200 = vxor.u32 %v3196, 2147483648
    %v3201 = vmul.f32 %v3200, 1.442695
    %v3202 = vpow.pop %v3201
    %v3203 = vadd.f32 %v3202, 1.0
    %v3204 = vrcp.pop %v3203
    %v3205 = vmul.f32 1.0, %v3204
    %v3206 = vxor.u32 %v3197, 2147483648
    %v3207 = vmul.f32 %v3206, 1.442695
    %v3208 = vpow.pop %v3207
    %v3209 = vadd.f32 %v3208, 1.0
    %v3210 = vrcp.pop %v3209
    %v3211 = vmul.f32 1.0, %v3210
    %v3212 = vtanh.pop %v3198
    %v3213 = vxor.u32 %v3199, 2147483648
    %v3214 = vmul.f32 %v3213, 1.442695
    %v3215 = vpow.pop %v3214
    %v3216 = vadd.f32 %v3215, 1.0
    %v3217 = vrcp.pop %v3216
    %v3218 = vmul.f32 1.0, %v3217
    %v3219 = vmul.f32 %v3211, %v3104
    %v3220 = vmul.f32 %v3205, %v3212
    %v3221 = vadd.f32 %v3219, %v3220
    %v3222 = vtanh.pop %v3221
    %v3223 = vmul.f32 %v3218, %v3222
    %v3224 = vpack.c.bf16 %v3223, %v3223
    %s3225 = scalar_lea.vmem [#allocation13], 28
    %3226 = vst [vmem:[%s3225] sm:$0xf] %v3224
    %3227 = vst [vmem:[%s2127] sm:$0xff] %v3223
    %3228 = vst [vmem:[%s2129] sm:$0xff] %v3221
    // Predicated region
    $region54: #{tpu_custom_call.1} parent=1 // pred_check
      _
    $region55: #{tpu_custom_call.1} parent=1 // pred_check_branch
      %3230 = sbr.rel (0) target = $region57
    $region56: #{tpu_custom_call.1} parent=1 // pred_region
      %s3232 = ssub.s32 512, 512
      %3233 = vsyncadd [#allocation6], %s3232
      %s3234 = sshll.u32 [#allocation13], 4
      %s3235 = int_to_ptr.vmem [resolvable:$true] %s3234
      %3240 = dma.vmem_to_hbm [thread:$0]  %s3235, 512, %s7, [#allocation6], 64, 64, 4
    $region57: #{tpu_custom_call.1} parent=1 // pred_fallthru
      _
    // Predicated region
    $region58: #{tpu_custom_call.1} parent=1 // pred_check
      _
    $region59: #{tpu_custom_call.1} parent=1 // pred_check_branch
      %3242 = sbr.rel (0) target = $region61
    $region60: #{tpu_custom_call.1} parent=1 // pred_region
      %s3244 = ssub.s32 256, 256
      %3245 = vsyncadd [#allocation15], %s3244
      %s3246 = sshll.u32 [#allocation14], 4
      %s3247 = int_to_ptr.vmem [resolvable:$true] %s3246
      %3252 = dma.vmem_to_hbm [thread:$0]  %s3247, 256, %s8, [#allocation15], 128, 128, 8
    $region61: #{tpu_custom_call.1} parent=1 // pred_fallthru
      _
    // Predicated region
    $region62: #{tpu_custom_call.1} parent=1 // pred_check
      _
    $region63: #{tpu_custom_call.1} parent=1 // pred_check_branch
      %3254 = sbr.rel (0) target = $region65
    $region64: #{tpu_custom_call.1} parent=1 // pred_region
      %s3256 = ssub.s32 256, 256
      %3257 = vsyncadd [#allocation15], %s3256
      %s3258 = sshll.u32 [#allocation16], 4
      %s3259 = int_to_ptr.vmem [resolvable:$true] %s3258
      %3264 = dma.vmem_to_hbm [thread:$0]  %s3259, 256, %s9, [#allocation15], 128, 128, 8
    $region65: #{tpu_custom_call.1} parent=1 // pred_fallthru
      _
    // Predicated region
    $region66: #{tpu_custom_call.1} parent=1 // pred_check
      _
    $region67: #{tpu_custom_call.1} parent=1 // pred_check_branch
      %3266 = sbr.rel (0) target = $region69
    $region68: #{tpu_custom_call.1} parent=1 // pred_region
      %3267 = dma.done [#allocation6], 512
    $region69: #{tpu_custom_call.1} parent=1 // pred_fallthru
      _
    // Predicated region
    $region70: #{tpu_custom_call.1} parent=1 // pred_check
      _
    $region71: #{tpu_custom_call.1} parent=1 // pred_check_branch
      %3269 = sbr.rel (0) target = $region73
    $region72: #{tpu_custom_call.1} parent=1 // pred_region
      %3270 = dma.done [#allocation15], 256
    $region73: #{tpu_custom_call.1} parent=1 // pred_fallthru
      _
    // Predicated region
    $region74: #{tpu_custom_call.1} parent=1 // pred_check
      _
    $region75: #{tpu_custom_call.1} parent=1 // pred_check_branch
      %3272 = sbr.rel (0) target = $region77
    $region76: #{tpu_custom_call.1} parent=1 // pred_region
      %3273 = dma.done [#allocation15], 256
    $region77: #{tpu_custom_call.1} parent=1 // pred_fallthru
      _
    %3274 = vsyncpa [#allocation5], 1
    %3275 = vsyncpa [#allocation8], 1
    %3276 = vsyncpa [#allocation11], 1
    %3277 = vsyncpa [#allocation6], 1
    %3278 = vsyncpa [#allocation15], 1

</llo_original>
